<compile_context>
chip_gen: v5e
topology: v5e:2x2
jax: 0.10.0
libtpu: 0.0.40
codegen_flags: <defaults>
</compile_context>

<pallas_src>
import functools
import math

import jax
import jax.numpy as jnp
from jax.experimental import pallas as pl
from jax.experimental.pallas import tpu as pltpu

EPS = 1e-6
_MXU_DTYPE = jnp.bfloat16  # MXU operands bf16, accumulation f32


def _compute_vmem_limit():
    """Generation-aware scoped-VMEM budget (half of physical, capped at 64 MiB)."""
    try:
        phys = pltpu.get_tpu_info().vmem_capacity_bytes
    except Exception:
        phys = 128 * 1024 * 1024
    return int(min(phys // 2, 64 * 1024 * 1024))


_VMEM_LIMIT = _compute_vmem_limit()
_FFN_ROW_CAP = 1024 if _VMEM_LIMIT >= 48 * 1024 * 1024 else 512
_LN_ROW_CAP = 1024
_Q_TILE_CAP = 256 if _VMEM_LIMIT >= 48 * 1024 * 1024 else 128


# ----------------------------------------------------------------------------- helpers

def _layernorm_f32(x, a, b):
    """torch-style LayerNorm: unbiased (n-1) variance, (std + eps) denominator."""
    n = x.shape[-1]
    mean = jnp.mean(x, axis=-1, keepdims=True)
    d = x - mean
    var = jnp.sum(d * d, axis=-1, keepdims=True) * jnp.float32(1.0 / (n - 1))
    return a * d / (jnp.sqrt(var) + EPS) + b


def _row_tile(m, cap):
    """Row tile: full M if it fits, else the largest multiple-of-8 divisor <= cap,
    else cap itself (cdiv grid with a masked tail block)."""
    if m <= cap:
        return m
    start = (cap // 8) * 8
    for t in range(start, 7, -8):
        if m % t == 0:
            return t
    return start


def _q_tile(t, cap=_Q_TILE_CAP):
    """Query-row tile for MHA: full T if small, else a multiple-of-8 divisor of T."""
    if t <= cap:
        return t
    start = (cap // 8) * 8
    for cand in range(start, 7, -8):
        if t % cand == 0:
            return cand
    return t


# ----------------------------------------------------------------------------- kernels

def _fused_mha_kernel(*refs, n_heads, cross, causal, tq):
    """LayerNorm + QKV projection + multi-head attention + out-proj + residual
    for one (batch, query-tile) grid step."""
    refs = list(refs)
    x_ref = refs.pop(0)
    kv_ref = refs.pop(0) if cross else None
    mask_ref = None if causal else refs.pop(0)
    (ln_a_ref, ln_b_ref, wq_ref, bq_ref, wk_ref, bk_ref,
     wv_ref, bv_ref, wo_ref, bo_ref, o_ref, ctx_sc) = refs

    qt = pl.program_id(1)
    D = x_ref.shape[2]
    dh = D // n_heads
    scale = jnp.float32(1.0 / math.sqrt(dh))

    if cross:
        x_tile = x_ref[0].astype(jnp.float32)                       # (tq, D)
        nx_tile = _layernorm_f32(x_tile, ln_a_ref[...], ln_b_ref[...])
        kv = kv_ref[0].astype(jnp.float32)                          # (S, D), no LN
    else:
        x_full = x_ref[0].astype(jnp.float32)                       # (T, D)
        nx_full = _layernorm_f32(x_full, ln_a_ref[...], ln_b_ref[...])
        T = x_full.shape[0]
        if T == tq:
            x_tile, nx_tile = x_full, nx_full
        else:
            row0 = pl.multiple_of(qt * tq, 8)
            x_tile = x_full[pl.ds(row0, tq), :]
            nx_tile = nx_full[pl.ds(row0, tq), :]
        kv = nx_full                                                 # keys/values from LN(x)

    S = kv.shape[0]
    nx_bf = nx_tile.astype(_MXU_DTYPE)                               # (tq, D)
    kv_bf = kv.astype(_MXU_DTYPE)                                    # (S, D)

    # K for all heads in one big matmul; one transpose; per-head slices are
    # cheap sublane slices and the per-head score matmul is NN.
    k_all = jnp.dot(kv_bf, wk_ref[...], preferred_element_type=jnp.float32) + bk_ref[...]
    kT_all = jnp.transpose(k_all).astype(_MXU_DTYPE)                 # (D, S)

    # Mask compare/broadcast hoisted out of the head loop.
    if causal:
        rows = jax.lax.broadcasted_iota(jnp.int32, (tq, S), 0) + qt * tq
        cols = jax.lax.broadcasted_iota(jnp.int32, (tq, S), 1)
        keep = cols <= rows
    else:
        keep = jnp.broadcast_to(mask_ref[0] != 0, (tq, S))
    neg = jnp.float32(-1e9)

    for hd in range(n_heads):                                        # static unroll
        q = (jnp.dot(nx_bf, wq_ref[hd], preferred_element_type=jnp.float32)
             + bq_ref[hd]) * scale                                   # (tq, dh)
        v = (jnp.dot(kv_bf, wv_ref[hd], preferred_element_type=jnp.float32)
             + bv_ref[hd])                                           # (S, dh)
        s = jnp.dot(q.astype(_MXU_DTYPE), kT_all[hd * dh:(hd + 1) * dh, :],
                    preferred_element_type=jnp.float32)              # (tq, S), NN matmul
        s = jnp.where(keep, s, neg)                                  # masked_fill(-1e9)
        m = jnp.max(s, axis=-1, keepdims=True)                       # f32 softmax stats
        p = jnp.exp(s - m)
        p = p * pl.reciprocal(jnp.sum(p, axis=-1, keepdims=True), approx=True)
        ch = jnp.dot(p.astype(_MXU_DTYPE), v.astype(_MXU_DTYPE),
                     preferred_element_type=jnp.float32)             # (tq, dh)
        ctx_sc[:, hd * dh:(hd + 1) * dh] = ch.astype(ctx_sc.dtype)   # assemble heads

    # Single big out-projection (contraction over full D) + fused residual.
    y = jnp.dot(ctx_sc[...], wo_ref[...], preferred_element_type=jnp.float32) + bo_ref[...]
    o_ref[0] = (x_tile + y).astype(o_ref.dtype)


def _fused_ffn_kernel(x_ref, a_ref, b_ref, w1_ref, b1_ref, w2_ref, b2_ref, o_ref):
    """LayerNorm + position-wise FFN (ReLU) + residual on a row tile."""
    x = x_ref[...].astype(jnp.float32)                               # (tm, D)
    nx = _layernorm_f32(x, a_ref[...], b_ref[...])
    h = jnp.dot(nx.astype(_MXU_DTYPE), w1_ref[...],
                preferred_element_type=jnp.float32) + b1_ref[...]
    h = jnp.maximum(h, 0.0)                                          # ReLU (dropout = id)
    y = jnp.dot(h.astype(_MXU_DTYPE), w2_ref[...],
                preferred_element_type=jnp.float32) + b2_ref[...]
    o_ref[...] = (x + y).astype(o_ref.dtype)                         # residual fused


def _layernorm_kernel(x_ref, a_ref, b_ref, o_ref):
    x = x_ref[...].astype(jnp.float32)
    o_ref[...] = _layernorm_f32(x, a_ref[...], b_ref[...]).astype(o_ref.dtype)


# ----------------------------------------------------------------------------- wrappers

def fused_mha(x, kv, mask, p, ln_a, ln_b, n_heads, *, cross, causal):
    B, T, D = x.shape
    assert D % n_heads == 0, "d_model must be divisible by n_heads"
    S = kv.shape[1] if cross else T
    tq = _q_tile(T)
    nq = T // tq

    def cst(w):
        shp = w.shape
        return pl.BlockSpec(shp, lambda b, i: (0,) * len(shp))

    in_specs, operands = [], []

    if cross:
        in_specs.append(pl.BlockSpec((1, tq, D), lambda b, i: (b, i, 0)))
        operands.append(x)
        in_specs.append(pl.BlockSpec((1, S, D), lambda b, i: (b, 0, 0)))
        operands.append(kv)
    else:
        # Full sequence needed for self-attention K/V; query tile sliced in-kernel.
        in_specs.append(pl.BlockSpec((1, T, D), lambda b, i: (b, 0, 0)))
        operands.append(x)

    if not causal:
        m = mask.astype(jnp.int32)
        if m.shape[1] == 1:
            in_specs.append(pl.BlockSpec((1, 1, S), lambda b, i: (b, 0, 0)))
        else:
            in_specs.append(pl.BlockSpec((1, tq, S), lambda b, i: (b, i, 0)))
        operands.append(m)

    for w in (ln_a, ln_b, p["wq"], p["bq"], p["wk"], p["bk"],
              p["wv"], p["bv"], p["wo"], p["bo"]):
        in_specs.append(cst(w))
        operands.append(w)

    return pl.pallas_call(
        functools.partial(_fused_mha_kernel, n_heads=n_heads, cross=cross,
                          causal=causal, tq=tq),
        out_shape=jax.ShapeDtypeStruct((B, T, D), x.dtype),
        grid=(B, nq),
        in_specs=in_specs,
        out_specs=pl.BlockSpec((1, tq, D), lambda b, i: (b, i, 0)),
        scratch_shapes=[pltpu.VMEM((tq, D), _MXU_DTYPE)],
        compiler_params=pltpu.CompilerParams(
            dimension_semantics=("parallel", "parallel"),
            vmem_limit_bytes=_VMEM_LIMIT),
    )(*operands)


def fused_ffn(x, ln_a, ln_b, w1, b1, w2, b2):
    B, T, D = x.shape
    F = w1.shape[1]
    M = B * T
    tm = _row_tile(M, _FFN_ROW_CAP)
    out = pl.pallas_call(
        _fused_ffn_kernel,
        out_shape=jax.ShapeDtypeStruct((M, D), x.dtype),
        grid=(pl.cdiv(M, tm),),
        in_specs=[
            pl.BlockSpec((tm, D), lambda i: (i, 0)),
            pl.BlockSpec((1, D), lambda i: (0, 0)),
            pl.BlockSpec((1, D), lambda i: (0, 0)),
            pl.BlockSpec((D, F), lambda i: (0, 0)),
            pl.BlockSpec((1, F), lambda i: (0, 0)),
            pl.BlockSpec((F, D), lambda i: (0, 0)),
            pl.BlockSpec((1, D), lambda i: (0, 0)),
        ],
        out_specs=pl.BlockSpec((tm, D), lambda i: (i, 0)),
        compiler_params=pltpu.CompilerParams(
            dimension_semantics=("parallel",),
            vmem_limit_bytes=_VMEM_LIMIT),
    )(x.reshape(M, D), ln_a, ln_b, w1, b1, w2, b2)
    return out.reshape(B, T, D)


def layernorm(x, a, b):
    B, T, D = x.shape
    M = B * T
    tm = _row_tile(M, _LN_ROW_CAP)
    out = pl.pallas_call(
        _layernorm_kernel,
        out_shape=jax.ShapeDtypeStruct((M, D), x.dtype),
        grid=(pl.cdiv(M, tm),),
        in_specs=[
            pl.BlockSpec((tm, D), lambda i: (i, 0)),
            pl.BlockSpec((1, D), lambda i: (0, 0)),
            pl.BlockSpec((1, D), lambda i: (0, 0)),
        ],
        out_specs=pl.BlockSpec((tm, D), lambda i: (i, 0)),
        compiler_params=pltpu.CompilerParams(
            dimension_semantics=("parallel",),
            vmem_limit_bytes=_VMEM_LIMIT),
    )(x.reshape(M, D), a, b)
    return out.reshape(B, T, D)


# ----------------------------------------------------------------------------- model glue

def decoder_layer(p, x, memory, src_mask, tgt_mask, h):
    # sublayer 0: masked self-attention (causal mask generated in-kernel if tgt_mask is None)
    x = fused_mha(x, None, tgt_mask, p["self_attn"], p["ln0_a"], p["ln0_b"], h,
                  cross=False, causal=(tgt_mask is None))
    # sublayer 1: source attention over encoder memory
    x = fused_mha(x, memory, src_mask, p["src_attn"], p["ln1_a"], p["ln1_b"], h,
                  cross=True, causal=False)
    # sublayer 2: position-wise feed-forward
    x = fused_ffn(x, p["ln2_a"], p["ln2_b"], p["ff_w1"], p["ff_b1"], p["ff_w2"], p["ff_b2"])
    return x


def decoder_forward(params, x, memory, src_mask, tgt_mask, h):
    for p in params["layers"]:
        x = decoder_layer(p, x, memory, src_mask, tgt_mask, h)
    return layernorm(x, params["norm_a"], params["norm_b"])


# ----------------------------------------------------------------------------- params

def _dense(key, din, dout):
    kw, kb = jax.random.split(key)
    w = jax.random.normal(kw, (din, dout), jnp.float32) / jnp.sqrt(jnp.float32(din))
    b = 0.01 * jax.random.normal(kb, (dout,), jnp.float32)
    return w, b


def init_params(key, n_layers, d_model, d_ff):
    """Raw f32 parameters, mirroring the torch module."""
    layers = []
    keys = jax.random.split(key, n_layers)
    for lk in keys:
        ks = jax.random.split(lk, 10)
        sa, xa = {}, {}
        for name, kk in zip(("q", "k", "v", "o"), ks[0:4]):
            sa["w" + name], sa["b" + name] = _dense(kk, d_model, d_model)
        for name, kk in zip(("q", "k", "v", "o"), ks[4:8]):
            xa["w" + name], xa["b" + name] = _dense(kk, d_model, d_model)
        ff_w1, ff_b1 = _dense(ks[8], d_model, d_ff)
        ff_w2, ff_b2 = _dense(ks[9], d_ff, d_model)
        layers.append(dict(
            self_attn=sa, src_attn=xa,
            ff_w1=ff_w1, ff_b1=ff_b1, ff_w2=ff_w2, ff_b2=ff_b2,
            ln0_a=jnp.ones((d_model,), jnp.float32), ln0_b=jnp.zeros((d_model,), jnp.float32),
            ln1_a=jnp.ones((d_model,), jnp.float32), ln1_b=jnp.zeros((d_model,), jnp.float32),
            ln2_a=jnp.ones((d_model,), jnp.float32), ln2_b=jnp.zeros((d_model,), jnp.float32),
        ))
    return dict(layers=layers,
                norm_a=jnp.ones((d_model,), jnp.float32),
                norm_b=jnp.zeros((d_model,), jnp.float32))


def _prepare_attn(p, h):
    """One-time conversion to kernel layout: bf16 weights, head-split Wq/Wv."""
    D = p["wq"].shape[0]
    dh = D // h

    def split_w(w):          # (D, D) -> (h, D, dh)   columns of head h are contiguous
        return jnp.transpose(w.reshape(D, h, dh), (1, 0, 2)).astype(_MXU_DTYPE)

    def split_b(b):          # (D,)   -> (h, 1, dh)
        return b.reshape(h, 1, dh).astype(jnp.float32)

    return dict(
        wq=split_w(p["wq"]), bq=split_b(p["bq"]),
        wk=p["wk"].astype(_MXU_DTYPE), bk=p["bk"].reshape(1, D).astype(jnp.float32),
        wv=split_w(p["wv"]), bv=split_b(p["bv"]),
        wo=p["wo"].astype(_MXU_DTYPE), bo=p["bo"].reshape(1, D).astype(jnp.float32),
    )


def prepare_params(params, h):
    """Convert raw f32 params into the bf16 / head-split layout the kernels expect."""
    layers = []
    for p in params["layers"]:
        layers.append(dict(
            self_attn=_prepare_attn(p["self_attn"], h),
            src_attn=_prepare_attn(p["src_attn"], h),
            ff_w1=p["ff_w1"].astype(_MXU_DTYPE), ff_b1=p["ff_b1"].reshape(1, -1),
            ff_w2=p["ff_w2"].astype(_MXU_DTYPE), ff_b2=p["ff_b2"].reshape(1, -1),
            ln0_a=p["ln0_a"].reshape(1, -1), ln0_b=p["ln0_b"].reshape(1, -1),
            ln1_a=p["ln1_a"].reshape(1, -1), ln1_b=p["ln1_b"].reshape(1, -1),
            ln2_a=p["ln2_a"].reshape(1, -1), ln2_b=p["ln2_b"].reshape(1, -1),
        ))
    return dict(layers=layers,
                norm_a=params["norm_a"].reshape(1, -1),
                norm_b=params["norm_b"].reshape(1, -1))


# ----------------------------------------------------------------------------- main

if __name__ == "__main__":
    B, T_TGT, T_SRC, D_MODEL, D_FF, HEADS, N_LAYERS = 2, 8, 16, 128, 256, 4, 2

    key = jax.random.PRNGKey(0)
    k_params, k_x, k_mem = jax.random.split(key, 3)

    raw_params = init_params(k_params, N_LAYERS, D_MODEL, D_FF)
    params = prepare_params(raw_params, HEADS)     # bf16 / head-split, done once

    x = jax.random.normal(k_x, (B, T_TGT, D_MODEL), jnp.float32)
    memory = jax.random.normal(k_mem, (B, T_SRC, D_MODEL), jnp.float32)

    # src_mask: (B, 1, T_src) padding mask (all valid here).
    # tgt_mask: the standard subsequent (causal/tril) mask -> generated in-kernel
    #           from iota, so we pass None instead of DMA'ing a (B, T, T) mask.
    src_mask = jnp.ones((B, 1, T_SRC), jnp.int32)
    tgt_mask = None

    fwd = jax.jit(functools.partial(decoder_forward, h=HEADS))
    out = fwd(params, x, memory, src_mask, tgt_mask)
    out = jax.block_until_ready(out)

    assert out.shape == (B, T_TGT, D_MODEL)
    assert bool(jnp.all(jnp.isfinite(out)))
    print("KERNEL_OK")
</pallas_src>

<mosaic_0001>
module attributes {stable_mosaic.version = 11 : i64} {
  func.func @_fused_mha_kernel(%arg0: i32, %arg1: i32, %arg2: memref<1x8x128xf32, #tpu.memory_space<vmem>>, %arg3: memref<1x16x128xf32, #tpu.memory_space<vmem>>, %arg4: memref<1x1x16xi32, #tpu.memory_space<vmem>>, %arg5: memref<1x128xf32, #tpu.memory_space<vmem>>, %arg6: memref<1x128xf32, #tpu.memory_space<vmem>>, %arg7: memref<4x128x32xbf16, #tpu.memory_space<vmem>>, %arg8: memref<4x1x32xf32, #tpu.memory_space<vmem>>, %arg9: memref<128x128xbf16, #tpu.memory_space<vmem>>, %arg10: memref<1x128xf32, #tpu.memory_space<vmem>>, %arg11: memref<4x128x32xbf16, #tpu.memory_space<vmem>>, %arg12: memref<4x1x32xf32, #tpu.memory_space<vmem>>, %arg13: memref<128x128xbf16, #tpu.memory_space<vmem>>, %arg14: memref<1x128xf32, #tpu.memory_space<vmem>>, %arg15: memref<1x8x128xf32, #tpu.memory_space<vmem>>, %arg16: memref<8x128xbf16, #tpu.memory_space<vmem>>) attributes {dimension_semantics = [#tpu.dimension_semantics<parallel>, #tpu.dimension_semantics<parallel>], iteration_bounds = array<i64: 2, 1>, scalar_prefetch = 0 : i64, scratch_operands = 1 : i64, tpu.core_type = #tpu.core_type<tc>, window_params = [{transform_indices = @transform_0, window_bounds = array<i64: 1, 8, 128>}, {transform_indices = @transform_1, window_bounds = array<i64: 1, 16, 128>}, {transform_indices = @transform_2, window_bounds = array<i64: 1, 1, 16>}, {pipeline_mode = #tpu.pipeline_mode<synchronous>, transform_indices = @transform_3, window_bounds = array<i64: 1, 128>}, {pipeline_mode = #tpu.pipeline_mode<synchronous>, transform_indices = @transform_4, window_bounds = array<i64: 1, 128>}, {pipeline_mode = #tpu.pipeline_mode<synchronous>, transform_indices = @transform_5, window_bounds = array<i64: 4, 128, 32>}, {pipeline_mode = #tpu.pipeline_mode<synchronous>, transform_indices = @transform_6, window_bounds = array<i64: 4, 1, 32>}, {pipeline_mode = #tpu.pipeline_mode<synchronous>, transform_indices = @transform_7, window_bounds = array<i64: 128, 128>}, {pipeline_mode = #tpu.pipeline_mode<synchronous>, transform_indices = @transform_8, window_bounds = array<i64: 1, 128>}, {pipeline_mode = #tpu.pipeline_mode<synchronous>, transform_indices = @transform_9, window_bounds = array<i64: 4, 128, 32>}, {pipeline_mode = #tpu.pipeline_mode<synchronous>, transform_indices = @transform_10, window_bounds = array<i64: 4, 1, 32>}, {pipeline_mode = #tpu.pipeline_mode<synchronous>, transform_indices = @transform_11, window_bounds = array<i64: 128, 128>}, {pipeline_mode = #tpu.pipeline_mode<synchronous>, transform_indices = @transform_12, window_bounds = array<i64: 1, 128>}, {transform_indices = @transform_13, window_bounds = array<i64: 1, 8, 128>}]} {
    %c0 = arith.constant 0 : index
    %c0_0 = arith.constant 0 : index
    %c0_1 = arith.constant 0 : index
    %0 = vector.load %arg2[%c0, %c0_0, %c0_1] : memref<1x8x128xf32, #tpu.memory_space<vmem>>, vector<1x8x128xf32>
    %1 = vector.shape_cast %0 : vector<1x8x128xf32> to vector<8x128xf32>
    %c0_2 = arith.constant 0 : index
    %c0_3 = arith.constant 0 : index
    %2 = vector.load %arg5[%c0_2, %c0_3] : memref<1x128xf32, #tpu.memory_space<vmem>>, vector<1x128xf32>
    %c0_4 = arith.constant 0 : index
    %c0_5 = arith.constant 0 : index
    %3 = vector.load %arg6[%c0_4, %c0_5] : memref<1x128xf32, #tpu.memory_space<vmem>>, vector<1x128xf32>
    %cst = arith.constant dense<0.000000e+00> : vector<8xf32>
    %4 = vector.multi_reduction <add>, %1, %cst [1] : vector<8x128xf32> to vector<8xf32>
    %5 = vector.shape_cast %4 : vector<8xf32> to vector<8x1xf32>
    %cst_6 = arith.constant 1.280000e+02 : f32
    %6 = vector.broadcast %cst_6 : f32 to vector<8x1xf32>
    %7 = arith.divf %5, %6 : vector<8x1xf32>
    %8 = vector.broadcast %7 : vector<8x1xf32> to vector<8x128xf32>
    %9 = arith.subf %1, %8 : vector<8x128xf32>
    %10 = arith.mulf %9, %9 : vector<8x128xf32>
    %cst_7 = arith.constant dense<0.000000e+00> : vector<8xf32>
    %11 = vector.multi_reduction <add>, %10, %cst_7 [1] : vector<8x128xf32> to vector<8xf32>
    %12 = vector.shape_cast %11 : vector<8xf32> to vector<8x1xf32>
    %cst_8 = arith.constant 0.00787401571 : f32
    %13 = vector.broadcast %cst_8 : f32 to vector<8x1xf32>
    %14 = arith.mulf %12, %13 : vector<8x1xf32>
    %15 = vector.broadcast %2 : vector<1x128xf32> to vector<8x128xf32>
    %16 = arith.mulf %15, %9 : vector<8x128xf32>
    %17 = math.sqrt %14 : vector<8x1xf32>
    %cst_9 = arith.constant 9.99999997E-7 : f32
    %18 = vector.broadcast %cst_9 : f32 to vector<8x1xf32>
    %19 = arith.addf %17, %18 : vector<8x1xf32>
    %20 = vector.broadcast %19 : vector<8x1xf32> to vector<8x128xf32>
    %21 = arith.divf %16, %20 : vector<8x128xf32>
    %22 = vector.broadcast %3 : vector<1x128xf32> to vector<8x128xf32>
    %23 = arith.addf %21, %22 : vector<8x128xf32>
    %c0_10 = arith.constant 0 : index
    %c0_11 = arith.constant 0 : index
    %c0_12 = arith.constant 0 : index
    %24 = vector.load %arg3[%c0_10, %c0_11, %c0_12] : memref<1x16x128xf32, #tpu.memory_space<vmem>>, vector<1x16x128xf32>
    %25 = vector.shape_cast %24 : vector<1x16x128xf32> to vector<16x128xf32>
    %26 = arith.truncf %23 : vector<8x128xf32> to vector<8x128xbf16>
    %27 = arith.truncf %25 : vector<16x128xf32> to vector<16x128xbf16>
    %c0_13 = arith.constant 0 : index
    %c0_14 = arith.constant 0 : index
    %28 = vector.load %arg9[%c0_13, %c0_14] : memref<128x128xbf16, #tpu.memory_space<vmem>>, vector<128x128xbf16>
    %cst_15 = arith.constant dense<0.000000e+00> : vector<16x128xf32>
    %29 = tpu.matmul %27, %28, %cst_15 {dimension_numbers = #tpu.dot_dimension_numbers<[1], [0], [0], [1], [0, 0, 1, 1], [], []>} : vector<16x128xbf16>, vector<128x128xbf16>, vector<16x128xf32> -> vector<16x128xf32>
    %c0_16 = arith.constant 0 : index
    %c0_17 = arith.constant 0 : index
    %30 = vector.load %arg10[%c0_16, %c0_17] : memref<1x128xf32, #tpu.memory_space<vmem>>, vector<1x128xf32>
    %31 = vector.broadcast %30 : vector<1x128xf32> to vector<16x128xf32>
    %32 = arith.addf %29, %31 : vector<16x128xf32>
    %33 = tpu.transpose %32, [1, 0] : vector<16x128xf32> -> vector<128x16xf32>
    %34 = arith.truncf %33 : vector<128x16xf32> to vector<128x16xbf16>
    %c0_18 = arith.constant 0 : index
    %c0_19 = arith.constant 0 : index
    %c0_20 = arith.constant 0 : index
    %35 = vector.load %arg4[%c0_18, %c0_19, %c0_20] : memref<1x1x16xi32, #tpu.memory_space<vmem>>, vector<1x1x16xi32>
    %36 = vector.shape_cast %35 : vector<1x1x16xi32> to vector<1x16xi32>
    %c0_i32 = arith.constant 0 : i32
    %37 = vector.broadcast %c0_i32 : i32 to vector<1x16xi32>
    %38 = arith.cmpi ne, %36, %37 : vector<1x16xi32>
    %39 = vector.shape_cast %38 : vector<1x16xi1> to vector<1x16xi1>
    %40 = vector.broadcast %39 : vector<1x16xi1> to vector<8x16xi1>
    %c0_21 = arith.constant 0 : index
    %c0_22 = arith.constant 0 : index
    %c0_23 = arith.constant 0 : index
    %41 = vector.load %arg7[%c0_21, %c0_22, %c0_23] : memref<4x128x32xbf16, #tpu.memory_space<vmem>>, vector<1x128x32xbf16>
    %42 = vector.shape_cast %41 : vector<1x128x32xbf16> to vector<128x32xbf16>
    %cst_24 = arith.constant dense<0.000000e+00> : vector<8x32xf32>
    %43 = tpu.matmul %26, %42, %cst_24 {dimension_numbers = #tpu.dot_dimension_numbers<[1], [0], [0], [1], [0, 0, 1, 1], [], []>} : vector<8x128xbf16>, vector<128x32xbf16>, vector<8x32xf32> -> vector<8x32xf32>
    %c0_25 = arith.constant 0 : index
    %c0_26 = arith.constant 0 : index
    %c0_27 = arith.constant 0 : index
    %44 = vector.load %arg8[%c0_25, %c0_26, %c0_27] : memref<4x1x32xf32, #tpu.memory_space<vmem>>, vector<1x1x32xf32>
    %45 = vector.shape_cast %44 : vector<1x1x32xf32> to vector<1x32xf32>
    %46 = vector.broadcast %45 : vector<1x32xf32> to vector<8x32xf32>
    %47 = arith.addf %43, %46 : vector<8x32xf32>
    %cst_28 = arith.constant 0.176776692 : f32
    %48 = vector.broadcast %cst_28 : f32 to vector<8x32xf32>
    %49 = arith.mulf %47, %48 : vector<8x32xf32>
    %c0_29 = arith.constant 0 : index
    %c0_30 = arith.constant 0 : index
    %c0_31 = arith.constant 0 : index
    %50 = vector.load %arg11[%c0_29, %c0_30, %c0_31] : memref<4x128x32xbf16, #tpu.memory_space<vmem>>, vector<1x128x32xbf16>
    %51 = vector.shape_cast %50 : vector<1x128x32xbf16> to vector<128x32xbf16>
    %cst_32 = arith.constant dense<0.000000e+00> : vector<16x32xf32>
    %52 = tpu.matmul %27, %51, %cst_32 {dimension_numbers = #tpu.dot_dimension_numbers<[1], [0], [0], [1], [0, 0, 1, 1], [], []>} : vector<16x128xbf16>, vector<128x32xbf16>, vector<16x32xf32> -> vector<16x32xf32>
    %c0_33 = arith.constant 0 : index
    %c0_34 = arith.constant 0 : index
    %c0_35 = arith.constant 0 : index
    %53 = vector.load %arg12[%c0_33, %c0_34, %c0_35] : memref<4x1x32xf32, #tpu.memory_space<vmem>>, vector<1x1x32xf32>
    %54 = vector.shape_cast %53 : vector<1x1x32xf32> to vector<1x32xf32>
    %55 = vector.broadcast %54 : vector<1x32xf32> to vector<16x32xf32>
    %56 = arith.addf %52, %55 : vector<16x32xf32>
    %57 = arith.truncf %49 : vector<8x32xf32> to vector<8x32xbf16>
    %58 = vector.extract_strided_slice %34 {offsets = [0, 0], sizes = [32, 16], strides = [1, 1]} : vector<128x16xbf16> to vector<32x16xbf16>
    %cst_36 = arith.constant dense<0.000000e+00> : vector<8x16xf32>
    %59 = tpu.matmul %57, %58, %cst_36 {dimension_numbers = #tpu.dot_dimension_numbers<[1], [0], [0], [1], [0, 0, 1, 1], [], []>} : vector<8x32xbf16>, vector<32x16xbf16>, vector<8x16xf32> -> vector<8x16xf32>
    %cst_37 = arith.constant -1.000000e+09 : f32
    %60 = vector.broadcast %cst_37 : f32 to vector<8x16xf32>
    %61 = arith.select %40, %59, %60 : vector<8x16xi1>, vector<8x16xf32>
    %cst_38 = arith.constant dense<0xFF800000> : vector<8xf32>
    %62 = vector.multi_reduction <maximumf>, %61, %cst_38 [1] : vector<8x16xf32> to vector<8xf32>
    %63 = vector.shape_cast %62 : vector<8xf32> to vector<8x1xf32>
    %64 = vector.broadcast %63 : vector<8x1xf32> to vector<8x16xf32>
    %65 = arith.subf %61, %64 : vector<8x16xf32>
    %66 = math.exp %65 : vector<8x16xf32>
    %cst_39 = arith.constant dense<0.000000e+00> : vector<8xf32>
    %67 = vector.multi_reduction <add>, %66, %cst_39 [1] : vector<8x16xf32> to vector<8xf32>
    %68 = vector.shape_cast %67 : vector<8xf32> to vector<8x1xf32>
    %69 = tpu.reciprocal %68 {approx = true} : vector<8x1xf32> -> vector<8x1xf32>
    %70 = vector.broadcast %69 : vector<8x1xf32> to vector<8x16xf32>
    %71 = arith.mulf %66, %70 : vector<8x16xf32>
    %72 = arith.truncf %71 : vector<8x16xf32> to vector<8x16xbf16>
    %73 = arith.truncf %56 : vector<16x32xf32> to vector<16x32xbf16>
    %cst_40 = arith.constant dense<0.000000e+00> : vector<8x32xf32>
    %74 = tpu.matmul %72, %73, %cst_40 {dimension_numbers = #tpu.dot_dimension_numbers<[1], [0], [0], [1], [0, 0, 1, 1], [], []>} : vector<8x16xbf16>, vector<16x32xbf16>, vector<8x32xf32> -> vector<8x32xf32>
    %75 = arith.truncf %74 : vector<8x32xf32> to vector<8x32xbf16>
    %c0_41 = arith.constant 0 : index
    %c0_42 = arith.constant 0 : index
    %76 = vector.load %arg16[%c0_41, %c0_42] : memref<8x128xbf16, #tpu.memory_space<vmem>>, vector<8x32xbf16>
    tpu.vector_store %arg16[%c0_41, %c0_42], %75 {strides = array<i32>} : memref<8x128xbf16, #tpu.memory_space<vmem>>, vector<8x32xbf16>,
    %c1 = arith.constant 1 : index
    %c0_43 = arith.constant 0 : index
    %c0_44 = arith.constant 0 : index
    %77 = vector.load %arg7[%c1, %c0_43, %c0_44] : memref<4x128x32xbf16, #tpu.memory_space<vmem>>, vector<1x128x32xbf16>
    %78 = vector.shape_cast %77 : vector<1x128x32xbf16> to vector<128x32xbf16>
    %cst_45 = arith.constant dense<0.000000e+00> : vector<8x32xf32>
    %79 = tpu.matmul %26, %78, %cst_45 {dimension_numbers = #tpu.dot_dimension_numbers<[1], [0], [0], [1], [0, 0, 1, 1], [], []>} : vector<8x128xbf16>, vector<128x32xbf16>, vector<8x32xf32> -> vector<8x32xf32>
    %c1_46 = arith.constant 1 : index
    %c0_47 = arith.constant 0 : index
    %c0_48 = arith.constant 0 : index
    %80 = vector.load %arg8[%c1_46, %c0_47, %c0_48] : memref<4x1x32xf32, #tpu.memory_space<vmem>>, vector<1x1x32xf32>
    %81 = vector.shape_cast %80 : vector<1x1x32xf32> to vector<1x32xf32>
    %82 = vector.broadcast %81 : vector<1x32xf32> to vector<8x32xf32>
    %83 = arith.addf %79, %82 : vector<8x32xf32>
    %cst_49 = arith.constant 0.176776692 : f32
    %84 = vector.broadcast %cst_49 : f32 to vector<8x32xf32>
    %85 = arith.mulf %83, %84 : vector<8x32xf32>
    %c1_50 = arith.constant 1 : index
    %c0_51 = arith.constant 0 : index
    %c0_52 = arith.constant 0 : index
    %86 = vector.load %arg11[%c1_50, %c0_51, %c0_52] : memref<4x128x32xbf16, #tpu.memory_space<vmem>>, vector<1x128x32xbf16>
    %87 = vector.shape_cast %86 : vector<1x128x32xbf16> to vector<128x32xbf16>
    %cst_53 = arith.constant dense<0.000000e+00> : vector<16x32xf32>
    %88 = tpu.matmul %27, %87, %cst_53 {dimension_numbers = #tpu.dot_dimension_numbers<[1], [0], [0], [1], [0, 0, 1, 1], [], []>} : vector<16x128xbf16>, vector<128x32xbf16>, vector<16x32xf32> -> vector<16x32xf32>
    %c1_54 = arith.constant 1 : index
    %c0_55 = arith.constant 0 : index
    %c0_56 = arith.constant 0 : index
    %89 = vector.load %arg12[%c1_54, %c0_55, %c0_56] : memref<4x1x32xf32, #tpu.memory_space<vmem>>, vector<1x1x32xf32>
    %90 = vector.shape_cast %89 : vector<1x1x32xf32> to vector<1x32xf32>
    %91 = vector.broadcast %90 : vector<1x32xf32> to vector<16x32xf32>
    %92 = arith.addf %88, %91 : vector<16x32xf32>
    %93 = arith.truncf %85 : vector<8x32xf32> to vector<8x32xbf16>
    %94 = vector.extract_strided_slice %34 {offsets = [32, 0], sizes = [32, 16], strides = [1, 1]} : vector<128x16xbf16> to vector<32x16xbf16>
    %cst_57 = arith.constant dense<0.000000e+00> : vector<8x16xf32>
    %95 = tpu.matmul %93, %94, %cst_57 {dimension_numbers = #tpu.dot_dimension_numbers<[1], [0], [0], [1], [0, 0, 1, 1], [], []>} : vector<8x32xbf16>, vector<32x16xbf16>, vector<8x16xf32> -> vector<8x16xf32>
    %cst_58 = arith.constant -1.000000e+09 : f32
    %96 = vector.broadcast %cst_58 : f32 to vector<8x16xf32>
    %97 = arith.select %40, %95, %96 : vector<8x16xi1>, vector<8x16xf32>
    %cst_59 = arith.constant dense<0xFF800000> : vector<8xf32>
    %98 = vector.multi_reduction <maximumf>, %97, %cst_59 [1] : vector<8x16xf32> to vector<8xf32>
    %99 = vector.shape_cast %98 : vector<8xf32> to vector<8x1xf32>
    %100 = vector.broadcast %99 : vector<8x1xf32> to vector<8x16xf32>
    %101 = arith.subf %97, %100 : vector<8x16xf32>
    %102 = math.exp %101 : vector<8x16xf32>
    %cst_60 = arith.constant dense<0.000000e+00> : vector<8xf32>
    %103 = vector.multi_reduction <add>, %102, %cst_60 [1] : vector<8x16xf32> to vector<8xf32>
    %104 = vector.shape_cast %103 : vector<8xf32> to vector<8x1xf32>
    %105 = tpu.reciprocal %104 {approx = true} : vector<8x1xf32> -> vector<8x1xf32>
    %106 = vector.broadcast %105 : vector<8x1xf32> to vector<8x16xf32>
    %107 = arith.mulf %102, %106 : vector<8x16xf32>
    %108 = arith.truncf %107 : vector<8x16xf32> to vector<8x16xbf16>
    %109 = arith.truncf %92 : vector<16x32xf32> to vector<16x32xbf16>
    %cst_61 = arith.constant dense<0.000000e+00> : vector<8x32xf32>
    %110 = tpu.matmul %108, %109, %cst_61 {dimension_numbers = #tpu.dot_dimension_numbers<[1], [0], [0], [1], [0, 0, 1, 1], [], []>} : vector<8x16xbf16>, vector<16x32xbf16>, vector<8x32xf32> -> vector<8x32xf32>
    %111 = arith.truncf %110 : vector<8x32xf32> to vector<8x32xbf16>
    %c0_62 = arith.constant 0 : index
    %c32 = arith.constant 32 : index
    %112 = vector.load %arg16[%c0_62, %c32] : memref<8x128xbf16, #tpu.memory_space<vmem>>, vector<8x32xbf16>
    tpu.vector_store %arg16[%c0_62, %c32], %111 {strides = array<i32>} : memref<8x128xbf16, #tpu.memory_space<vmem>>, vector<8x32xbf16>,
    %c2 = arith.constant 2 : index
    %c0_63 = arith.constant 0 : index
    %c0_64 = arith.constant 0 : index
    %113 = vector.load %arg7[%c2, %c0_63, %c0_64] : memref<4x128x32xbf16, #tpu.memory_space<vmem>>, vector<1x128x32xbf16>
    %114 = vector.shape_cast %113 : vector<1x128x32xbf16> to vector<128x32xbf16>
    %cst_65 = arith.constant dense<0.000000e+00> : vector<8x32xf32>
    %115 = tpu.matmul %26, %114, %cst_65 {dimension_numbers = #tpu.dot_dimension_numbers<[1], [0], [0], [1], [0, 0, 1, 1], [], []>} : vector<8x128xbf16>, vector<128x32xbf16>, vector<8x32xf32> -> vector<8x32xf32>
    %c2_66 = arith.constant 2 : index
    %c0_67 = arith.constant 0 : index
    %c0_68 = arith.constant 0 : index
    %116 = vector.load %arg8[%c2_66, %c0_67, %c0_68] : memref<4x1x32xf32, #tpu.memory_space<vmem>>, vector<1x1x32xf32>
    %117 = vector.shape_cast %116 : vector<1x1x32xf32> to vector<1x32xf32>
    %118 = vector.broadcast %117 : vector<1x32xf32> to vector<8x32xf32>
    %119 = arith.addf %115, %118 : vector<8x32xf32>
    %cst_69 = arith.constant 0.176776692 : f32
    %120 = vector.broadcast %cst_69 : f32 to vector<8x32xf32>
    %121 = arith.mulf %119, %120 : vector<8x32xf32>
    %c2_70 = arith.constant 2 : index
    %c0_71 = arith.constant 0 : index
    %c0_72 = arith.constant 0 : index
    %122 = vector.load %arg11[%c2_70, %c0_71, %c0_72] : memref<4x128x32xbf16, #tpu.memory_space<vmem>>, vector<1x128x32xbf16>
    %123 = vector.shape_cast %122 : vector<1x128x32xbf16> to vector<128x32xbf16>
    %cst_73 = arith.constant dense<0.000000e+00> : vector<16x32xf32>
    %124 = tpu.matmul %27, %123, %cst_73 {dimension_numbers = #tpu.dot_dimension_numbers<[1], [0], [0], [1], [0, 0, 1, 1], [], []>} : vector<16x128xbf16>, vector<128x32xbf16>, vector<16x32xf32> -> vector<16x32xf32>
    %c2_74 = arith.constant 2 : index
    %c0_75 = arith.constant 0 : index
    %c0_76 = arith.constant 0 : index
    %125 = vector.load %arg12[%c2_74, %c0_75, %c0_76] : memref<4x1x32xf32, #tpu.memory_space<vmem>>, vector<1x1x32xf32>
    %126 = vector.shape_cast %125 : vector<1x1x32xf32> to vector<1x32xf32>
    %127 = vector.broadcast %126 : vector<1x32xf32> to vector<16x32xf32>
    %128 = arith.addf %124, %127 : vector<16x32xf32>
    %129 = arith.truncf %121 : vector<8x32xf32> to vector<8x32xbf16>
    %130 = vector.extract_strided_slice %34 {offsets = [64, 0], sizes = [32, 16], strides = [1, 1]} : vector<128x16xbf16> to vector<32x16xbf16>
    %cst_77 = arith.constant dense<0.000000e+00> : vector<8x16xf32>
    %131 = tpu.matmul %129, %130, %cst_77 {dimension_numbers = #tpu.dot_dimension_numbers<[1], [0], [0], [1], [0, 0, 1, 1], [], []>} : vector<8x32xbf16>, vector<32x16xbf16>, vector<8x16xf32> -> vector<8x16xf32>
    %cst_78 = arith.constant -1.000000e+09 : f32
    %132 = vector.broadcast %cst_78 : f32 to vector<8x16xf32>
    %133 = arith.select %40, %131, %132 : vector<8x16xi1>, vector<8x16xf32>
    %cst_79 = arith.constant dense<0xFF800000> : vector<8xf32>
    %134 = vector.multi_reduction <maximumf>, %133, %cst_79 [1] : vector<8x16xf32> to vector<8xf32>
    %135 = vector.shape_cast %134 : vector<8xf32> to vector<8x1xf32>
    %136 = vector.broadcast %135 : vector<8x1xf32> to vector<8x16xf32>
    %137 = arith.subf %133, %136 : vector<8x16xf32>
    %138 = math.exp %137 : vector<8x16xf32>
    %cst_80 = arith.constant dense<0.000000e+00> : vector<8xf32>
    %139 = vector.multi_reduction <add>, %138, %cst_80 [1] : vector<8x16xf32> to vector<8xf32>
    %140 = vector.shape_cast %139 : vector<8xf32> to vector<8x1xf32>
    %141 = tpu.reciprocal %140 {approx = true} : vector<8x1xf32> -> vector<8x1xf32>
    %142 = vector.broadcast %141 : vector<8x1xf32> to vector<8x16xf32>
    %143 = arith.mulf %138, %142 : vector<8x16xf32>
    %144 = arith.truncf %143 : vector<8x16xf32> to vector<8x16xbf16>
    %145 = arith.truncf %128 : vector<16x32xf32> to vector<16x32xbf16>
    %cst_81 = arith.constant dense<0.000000e+00> : vector<8x32xf32>
    %146 = tpu.matmul %144, %145, %cst_81 {dimension_numbers = #tpu.dot_dimension_numbers<[1], [0], [0], [1], [0, 0, 1, 1], [], []>} : vector<8x16xbf16>, vector<16x32xbf16>, vector<8x32xf32> -> vector<8x32xf32>
    %147 = arith.truncf %146 : vector<8x32xf32> to vector<8x32xbf16>
    %c0_82 = arith.constant 0 : index
    %c64 = arith.constant 64 : index
    %148 = vector.load %arg16[%c0_82, %c64] : memref<8x128xbf16, #tpu.memory_space<vmem>>, vector<8x32xbf16>
    tpu.vector_store %arg16[%c0_82, %c64], %147 {strides = array<i32>} : memref<8x128xbf16, #tpu.memory_space<vmem>>, vector<8x32xbf16>,
    %c3 = arith.constant 3 : index
    %c0_83 = arith.constant 0 : index
    %c0_84 = arith.constant 0 : index
    %149 = vector.load %arg7[%c3, %c0_83, %c0_84] : memref<4x128x32xbf16, #tpu.memory_space<vmem>>, vector<1x128x32xbf16>
    %150 = vector.shape_cast %149 : vector<1x128x32xbf16> to vector<128x32xbf16>
    %cst_85 = arith.constant dense<0.000000e+00> : vector<8x32xf32>
    %151 = tpu.matmul %26, %150, %cst_85 {dimension_numbers = #tpu.dot_dimension_numbers<[1], [0], [0], [1], [0, 0, 1, 1], [], []>} : vector<8x128xbf16>, vector<128x32xbf16>, vector<8x32xf32> -> vector<8x32xf32>
    %c3_86 = arith.constant 3 : index
    %c0_87 = arith.constant 0 : index
    %c0_88 = arith.constant 0 : index
    %152 = vector.load %arg8[%c3_86, %c0_87, %c0_88] : memref<4x1x32xf32, #tpu.memory_space<vmem>>, vector<1x1x32xf32>
    %153 = vector.shape_cast %152 : vector<1x1x32xf32> to vector<1x32xf32>
    %154 = vector.broadcast %153 : vector<1x32xf32> to vector<8x32xf32>
    %155 = arith.addf %151, %154 : vector<8x32xf32>
    %cst_89 = arith.constant 0.176776692 : f32
    %156 = vector.broadcast %cst_89 : f32 to vector<8x32xf32>
    %157 = arith.mulf %155, %156 : vector<8x32xf32>
    %c3_90 = arith.constant 3 : index
    %c0_91 = arith.constant 0 : index
    %c0_92 = arith.constant 0 : index
    %158 = vector.load %arg11[%c3_90, %c0_91, %c0_92] : memref<4x128x32xbf16, #tpu.memory_space<vmem>>, vector<1x128x32xbf16>
    %159 = vector.shape_cast %158 : vector<1x128x32xbf16> to vector<128x32xbf16>
    %cst_93 = arith.constant dense<0.000000e+00> : vector<16x32xf32>
    %160 = tpu.matmul %27, %159, %cst_93 {dimension_numbers = #tpu.dot_dimension_numbers<[1], [0], [0], [1], [0, 0, 1, 1], [], []>} : vector<16x128xbf16>, vector<128x32xbf16>, vector<16x32xf32> -> vector<16x32xf32>
    %c3_94 = arith.constant 3 : index
    %c0_95 = arith.constant 0 : index
    %c0_96 = arith.constant 0 : index
    %161 = vector.load %arg12[%c3_94, %c0_95, %c0_96] : memref<4x1x32xf32, #tpu.memory_space<vmem>>, vector<1x1x32xf32>
    %162 = vector.shape_cast %161 : vector<1x1x32xf32> to vector<1x32xf32>
    %163 = vector.broadcast %162 : vector<1x32xf32> to vector<16x32xf32>
    %164 = arith.addf %160, %163 : vector<16x32xf32>
    %165 = arith.truncf %157 : vector<8x32xf32> to vector<8x32xbf16>
    %166 = vector.extract_strided_slice %34 {offsets = [96, 0], sizes = [32, 16], strides = [1, 1]} : vector<128x16xbf16> to vector<32x16xbf16>
    %cst_97 = arith.constant dense<0.000000e+00> : vector<8x16xf32>
    %167 = tpu.matmul %165, %166, %cst_97 {dimension_numbers = #tpu.dot_dimension_numbers<[1], [0], [0], [1], [0, 0, 1, 1], [], []>} : vector<8x32xbf16>, vector<32x16xbf16>, vector<8x16xf32> -> vector<8x16xf32>
    %cst_98 = arith.constant -1.000000e+09 : f32
    %168 = vector.broadcast %cst_98 : f32 to vector<8x16xf32>
    %169 = arith.select %40, %167, %168 : vector<8x16xi1>, vector<8x16xf32>
    %cst_99 = arith.constant dense<0xFF800000> : vector<8xf32>
    %170 = vector.multi_reduction <maximumf>, %169, %cst_99 [1] : vector<8x16xf32> to vector<8xf32>
    %171 = vector.shape_cast %170 : vector<8xf32> to vector<8x1xf32>
    %172 = vector.broadcast %171 : vector<8x1xf32> to vector<8x16xf32>
    %173 = arith.subf %169, %172 : vector<8x16xf32>
    %174 = math.exp %173 : vector<8x16xf32>
    %cst_100 = arith.constant dense<0.000000e+00> : vector<8xf32>
    %175 = vector.multi_reduction <add>, %174, %cst_100 [1] : vector<8x16xf32> to vector<8xf32>
    %176 = vector.shape_cast %175 : vector<8xf32> to vector<8x1xf32>
    %177 = tpu.reciprocal %176 {approx = true} : vector<8x1xf32> -> vector<8x1xf32>
    %178 = vector.broadcast %177 : vector<8x1xf32> to vector<8x16xf32>
    %179 = arith.mulf %174, %178 : vector<8x16xf32>
    %180 = arith.truncf %179 : vector<8x16xf32> to vector<8x16xbf16>
    %181 = arith.truncf %164 : vector<16x32xf32> to vector<16x32xbf16>
    %cst_101 = arith.constant dense<0.000000e+00> : vector<8x32xf32>
    %182 = tpu.matmul %180, %181, %cst_101 {dimension_numbers = #tpu.dot_dimension_numbers<[1], [0], [0], [1], [0, 0, 1, 1], [], []>} : vector<8x16xbf16>, vector<16x32xbf16>, vector<8x32xf32> -> vector<8x32xf32>
    %183 = arith.truncf %182 : vector<8x32xf32> to vector<8x32xbf16>
    %c0_102 = arith.constant 0 : index
    %c96 = arith.constant 96 : index
    %184 = vector.load %arg16[%c0_102, %c96] : memref<8x128xbf16, #tpu.memory_space<vmem>>, vector<8x32xbf16>
    tpu.vector_store %arg16[%c0_102, %c96], %183 {strides = array<i32>} : memref<8x128xbf16, #tpu.memory_space<vmem>>, vector<8x32xbf16>,
    %c0_103 = arith.constant 0 : index
    %c0_104 = arith.constant 0 : index
    %185 = vector.load %arg16[%c0_103, %c0_104] : memref<8x128xbf16, #tpu.memory_space<vmem>>, vector<8x128xbf16>
    %c0_105 = arith.constant 0 : index
    %c0_106 = arith.constant 0 : index
    %186 = vector.load %arg13[%c0_105, %c0_106] : memref<128x128xbf16, #tpu.memory_space<vmem>>, vector<128x128xbf16>
    %cst_107 = arith.constant dense<0.000000e+00> : vector<8x128xf32>
    %187 = tpu.matmul %185, %186, %cst_107 {dimension_numbers = #tpu.dot_dimension_numbers<[1], [0], [0], [1], [0, 0, 1, 1], [], []>} : vector<8x128xbf16>, vector<128x128xbf16>, vector<8x128xf32> -> vector<8x128xf32>
    %c0_108 = arith.constant 0 : index
    %c0_109 = arith.constant 0 : index
    %188 = vector.load %arg14[%c0_108, %c0_109] : memref<1x128xf32, #tpu.memory_space<vmem>>, vector<1x128xf32>
    %189 = vector.broadcast %188 : vector<1x128xf32> to vector<8x128xf32>
    %190 = arith.addf %187, %189 : vector<8x128xf32>
    %191 = arith.addf %1, %190 : vector<8x128xf32>
    %c0_110 = arith.constant 0 : index
    %c0_111 = arith.constant 0 : index
    %c0_112 = arith.constant 0 : index
    %192 = vector.load %arg15[%c0_110, %c0_111, %c0_112] : memref<1x8x128xf32, #tpu.memory_space<vmem>>, vector<1x8x128xf32>
    %193 = vector.shape_cast %192 : vector<1x8x128xf32> to vector<8x128xf32>
    %194 = vector.shape_cast %191 : vector<8x128xf32> to vector<1x8x128xf32>
    tpu.vector_store %arg15[%c0_110, %c0_111, %c0_112], %194 {strides = array<i32>} : memref<1x8x128xf32, #tpu.memory_space<vmem>>, vector<1x8x128xf32>,
    return
  }
  func.func @transform_0(%arg0: i32, %arg1: i32) -> (i32, i32, i32) {
    %c0_i32 = arith.constant 0 : i32
    %c0_i32_0 = arith.constant 0 : i32
    return %arg0, %arg1, %c0_i32 : i32, i32, i32
  }
  func.func @transform_1(%arg0: i32, %arg1: i32) -> (i32, i32, i32) {
    %c0_i32 = arith.constant 0 : i32
    %c0_i32_0 = arith.constant 0 : i32
    %c0_i32_1 = arith.constant 0 : i32
    return %arg0, %c0_i32, %c0_i32_0 : i32, i32, i32
  }
  func.func @transform_2(%arg0: i32, %arg1: i32) -> (i32, i32, i32) {
    %c0_i32 = arith.constant 0 : i32
    %c0_i32_0 = arith.constant 0 : i32
    %c0_i32_1 = arith.constant 0 : i32
    return %arg0, %c0_i32, %c0_i32_0 : i32, i32, i32
  }
  func.func @transform_3(%arg0: i32, %arg1: i32) -> (i32, i32) {
    %c0_i32 = arith.constant 0 : i32
    %c0_i32_0 = arith.constant 0 : i32
    %c0_i32_1 = arith.constant 0 : i32
    return %c0_i32, %c0_i32_0 : i32, i32
  }
  func.func @transform_4(%arg0: i32, %arg1: i32) -> (i32, i32) {
    %c0_i32 = arith.constant 0 : i32
    %c0_i32_0 = arith.constant 0 : i32
    %c0_i32_1 = arith.constant 0 : i32
    return %c0_i32, %c0_i32_0 : i32, i32
  }
  func.func @transform_5(%arg0: i32, %arg1: i32) -> (i32, i32, i32) {
    %c0_i32 = arith.constant 0 : i32
    %c0_i32_0 = arith.constant 0 : i32
    %c0_i32_1 = arith.constant 0 : i32
    %c0_i32_2 = arith.constant 0 : i32
    return %c0_i32, %c0_i32_0, %c0_i32_1 : i32, i32, i32
  }
  func.func @transform_6(%arg0: i32, %arg1: i32) -> (i32, i32, i32) {
    %c0_i32 = arith.constant 0 : i32
    %c0_i32_0 = arith.constant 0 : i32
    %c0_i32_1 = arith.constant 0 : i32
    %c0_i32_2 = arith.constant 0 : i32
    return %c0_i32, %c0_i32_0, %c0_i32_1 : i32, i32, i32
  }
  func.func @transform_7(%arg0: i32, %arg1: i32) -> (i32, i32) {
    %c0_i32 = arith.constant 0 : i32
    %c0_i32_0 = arith.constant 0 : i32
    %c0_i32_1 = arith.constant 0 : i32
    return %c0_i32, %c0_i32_0 : i32, i32
  }
  func.func @transform_8(%arg0: i32, %arg1: i32) -> (i32, i32) {
    %c0_i32 = arith.constant 0 : i32
    %c0_i32_0 = arith.constant 0 : i32
    %c0_i32_1 = arith.constant 0 : i32
    return %c0_i32, %c0_i32_0 : i32, i32
  }
  func.func @transform_9(%arg0: i32, %arg1: i32) -> (i32, i32, i32) {
    %c0_i32 = arith.constant 0 : i32
    %c0_i32_0 = arith.constant 0 : i32
    %c0_i32_1 = arith.constant 0 : i32
    %c0_i32_2 = arith.constant 0 : i32
    return %c0_i32, %c0_i32_0, %c0_i32_1 : i32, i32, i32
  }
  func.func @transform_10(%arg0: i32, %arg1: i32) -> (i32, i32, i32) {
    %c0_i32 = arith.constant 0 : i32
    %c0_i32_0 = arith.constant 0 : i32
    %c0_i32_1 = arith.constant 0 : i32
    %c0_i32_2 = arith.constant 0 : i32
    return %c0_i32, %c0_i32_0, %c0_i32_1 : i32, i32, i32
  }
  func.func @transform_11(%arg0: i32, %arg1: i32) -> (i32, i32) {
    %c0_i32 = arith.constant 0 : i32
    %c0_i32_0 = arith.constant 0 : i32
    %c0_i32_1 = arith.constant 0 : i32
    return %c0_i32, %c0_i32_0 : i32, i32
  }
  func.func @transform_12(%arg0: i32, %arg1: i32) -> (i32, i32) {
    %c0_i32 = arith.constant 0 : i32
    %c0_i32_0 = arith.constant 0 : i32
    %c0_i32_1 = arith.constant 0 : i32
    return %c0_i32, %c0_i32_0 : i32, i32
  }
  func.func @transform_13(%arg0: i32, %arg1: i32) -> (i32, i32, i32) {
    %c0_i32 = arith.constant 0 : i32
    %c0_i32_0 = arith.constant 0 : i32
    return %arg0, %arg1, %c0_i32 : i32, i32, i32
  }
}

module attributes {stable_mosaic.version = 11 : i64} {
  func.func @_fused_mha_kernel(%arg0: i32, %arg1: i32, %arg2: memref<1x8x128xf32, #tpu.memory_space<vmem>>, %arg3: memref<1x128xf32, #tpu.memory_space<vmem>>, %arg4: memref<1x128xf32, #tpu.memory_space<vmem>>, %arg5: memref<4x128x32xbf16, #tpu.memory_space<vmem>>, %arg6: memref<4x1x32xf32, #tpu.memory_space<vmem>>, %arg7: memref<128x128xbf16, #tpu.memory_space<vmem>>, %arg8: memref<1x128xf32, #tpu.memory_space<vmem>>, %arg9: memref<4x128x32xbf16, #tpu.memory_space<vmem>>, %arg10: memref<4x1x32xf32, #tpu.memory_space<vmem>>, %arg11: memref<128x128xbf16, #tpu.memory_space<vmem>>, %arg12: memref<1x128xf32, #tpu.memory_space<vmem>>, %arg13: memref<1x8x128xf32, #tpu.memory_space<vmem>>, %arg14: memref<8x128xbf16, #tpu.memory_space<vmem>>) attributes {dimension_semantics = [#tpu.dimension_semantics<parallel>, #tpu.dimension_semantics<parallel>], iteration_bounds = array<i64: 2, 1>, scalar_prefetch = 0 : i64, scratch_operands = 1 : i64, tpu.core_type = #tpu.core_type<tc>, window_params = [{transform_indices = @transform_0, window_bounds = array<i64: 1, 8, 128>}, {pipeline_mode = #tpu.pipeline_mode<synchronous>, transform_indices = @transform_1, window_bounds = array<i64: 1, 128>}, {pipeline_mode = #tpu.pipeline_mode<synchronous>, transform_indices = @transform_2, window_bounds = array<i64: 1, 128>}, {pipeline_mode = #tpu.pipeline_mode<synchronous>, transform_indices = @transform_3, window_bounds = array<i64: 4, 128, 32>}, {pipeline_mode = #tpu.pipeline_mode<synchronous>, transform_indices = @transform_4, window_bounds = array<i64: 4, 1, 32>}, {pipeline_mode = #tpu.pipeline_mode<synchronous>, transform_indices = @transform_5, window_bounds = array<i64: 128, 128>}, {pipeline_mode = #tpu.pipeline_mode<synchronous>, transform_indices = @transform_6, window_bounds = array<i64: 1, 128>}, {pipeline_mode = #tpu.pipeline_mode<synchronous>, transform_indices = @transform_7, window_bounds = array<i64: 4, 128, 32>}, {pipeline_mode = #tpu.pipeline_mode<synchronous>, transform_indices = @transform_8, window_bounds = array<i64: 4, 1, 32>}, {pipeline_mode = #tpu.pipeline_mode<synchronous>, transform_indices = @transform_9, window_bounds = array<i64: 128, 128>}, {pipeline_mode = #tpu.pipeline_mode<synchronous>, transform_indices = @transform_10, window_bounds = array<i64: 1, 128>}, {transform_indices = @transform_11, window_bounds = array<i64: 1, 8, 128>}]} {
    %c0 = arith.constant 0 : index
    %c0_0 = arith.constant 0 : index
    %c0_1 = arith.constant 0 : index
    %0 = vector.load %arg2[%c0, %c0_0, %c0_1] : memref<1x8x128xf32, #tpu.memory_space<vmem>>, vector<1x8x128xf32>
    %1 = vector.shape_cast %0 : vector<1x8x128xf32> to vector<8x128xf32>
    %c0_2 = arith.constant 0 : index
    %c0_3 = arith.constant 0 : index
    %2 = vector.load %arg3[%c0_2, %c0_3] : memref<1x128xf32, #tpu.memory_space<vmem>>, vector<1x128xf32>
    %c0_4 = arith.constant 0 : index
    %c0_5 = arith.constant 0 : index
    %3 = vector.load %arg4[%c0_4, %c0_5] : memref<1x128xf32, #tpu.memory_space<vmem>>, vector<1x128xf32>
    %cst = arith.constant dense<0.000000e+00> : vector<8xf32>
    %4 = vector.multi_reduction <add>, %1, %cst [1] : vector<8x128xf32> to vector<8xf32>
    %5 = vector.shape_cast %4 : vector<8xf32> to vector<8x1xf32>
    %cst_6 = arith.constant 1.280000e+02 : f32
    %6 = vector.broadcast %cst_6 : f32 to vector<8x1xf32>
    %7 = arith.divf %5, %6 : vector<8x1xf32>
    %8 = vector.broadcast %7 : vector<8x1xf32> to vector<8x128xf32>
    %9 = arith.subf %1, %8 : vector<8x128xf32>
    %10 = arith.mulf %9, %9 : vector<8x128xf32>
    %cst_7 = arith.constant dense<0.000000e+00> : vector<8xf32>
    %11 = vector.multi_reduction <add>, %10, %cst_7 [1] : vector<8x128xf32> to vector<8xf32>
    %12 = vector.shape_cast %11 : vector<8xf32> to vector<8x1xf32>
    %cst_8 = arith.constant 0.00787401571 : f32
    %13 = vector.broadcast %cst_8 : f32 to vector<8x1xf32>
    %14 = arith.mulf %12, %13 : vector<8x1xf32>
    %15 = vector.broadcast %2 : vector<1x128xf32> to vector<8x128xf32>
    %16 = arith.mulf %15, %9 : vector<8x128xf32>
    %17 = math.sqrt %14 : vector<8x1xf32>
    %cst_9 = arith.constant 9.99999997E-7 : f32
    %18 = vector.broadcast %cst_9 : f32 to vector<8x1xf32>
    %19 = arith.addf %17, %18 : vector<8x1xf32>
    %20 = vector.broadcast %19 : vector<8x1xf32> to vector<8x128xf32>
    %21 = arith.divf %16, %20 : vector<8x128xf32>
    %22 = vector.broadcast %3 : vector<1x128xf32> to vector<8x128xf32>
    %23 = arith.addf %21, %22 : vector<8x128xf32>
    %24 = arith.truncf %23 : vector<8x128xf32> to vector<8x128xbf16>
    %25 = arith.truncf %23 : vector<8x128xf32> to vector<8x128xbf16>
    %c0_10 = arith.constant 0 : index
    %c0_11 = arith.constant 0 : index
    %26 = vector.load %arg7[%c0_10, %c0_11] : memref<128x128xbf16, #tpu.memory_space<vmem>>, vector<128x128xbf16>
    %cst_12 = arith.constant dense<0.000000e+00> : vector<8x128xf32>
    %27 = tpu.matmul %25, %26, %cst_12 {dimension_numbers = #tpu.dot_dimension_numbers<[1], [0], [0], [1], [0, 0, 1, 1], [], []>} : vector<8x128xbf16>, vector<128x128xbf16>, vector<8x128xf32> -> vector<8x128xf32>
    %c0_13 = arith.constant 0 : index
    %c0_14 = arith.constant 0 : index
    %28 = vector.load %arg8[%c0_13, %c0_14] : memref<1x128xf32, #tpu.memory_space<vmem>>, vector<1x128xf32>
    %29 = vector.broadcast %28 : vector<1x128xf32> to vector<8x128xf32>
    %30 = arith.addf %27, %29 : vector<8x128xf32>
    %31 = tpu.transpose %30, [1, 0] : vector<8x128xf32> -> vector<128x8xf32>
    %32 = arith.truncf %31 : vector<128x8xf32> to vector<128x8xbf16>
    %33 = tpu.iota {dimensions = array<i32: 0>} : vector<8x8xi32>
    %c8_i32 = arith.constant 8 : i32
    %34 = arith.muli %arg1, %c8_i32 : i32
    %35 = vector.broadcast %34 : i32 to vector<8x8xi32>
    %36 = arith.addi %33, %35 : vector<8x8xi32>
    %37 = tpu.iota {dimensions = array<i32: 1>} : vector<8x8xi32>
    %38 = arith.cmpi sle, %37, %36 : vector<8x8xi32>
    %c0_15 = arith.constant 0 : index
    %c0_16 = arith.constant 0 : index
    %c0_17 = arith.constant 0 : index
    %39 = vector.load %arg5[%c0_15, %c0_16, %c0_17] : memref<4x128x32xbf16, #tpu.memory_space<vmem>>, vector<1x128x32xbf16>
    %40 = vector.shape_cast %39 : vector<1x128x32xbf16> to vector<128x32xbf16>
    %cst_18 = arith.constant dense<0.000000e+00> : vector<8x32xf32>
    %41 = tpu.matmul %24, %40, %cst_18 {dimension_numbers = #tpu.dot_dimension_numbers<[1], [0], [0], [1], [0, 0, 1, 1], [], []>} : vector<8x128xbf16>, vector<128x32xbf16>, vector<8x32xf32> -> vector<8x32xf32>
    %c0_19 = arith.constant 0 : index
    %c0_20 = arith.constant 0 : index
    %c0_21 = arith.constant 0 : index
    %42 = vector.load %arg6[%c0_19, %c0_20, %c0_21] : memref<4x1x32xf32, #tpu.memory_space<vmem>>, vector<1x1x32xf32>
    %43 = vector.shape_cast %42 : vector<1x1x32xf32> to vector<1x32xf32>
    %44 = vector.broadcast %43 : vector<1x32xf32> to vector<8x32xf32>
    %45 = arith.addf %41, %44 : vector<8x32xf32>
    %cst_22 = arith.constant 0.176776692 : f32
    %46 = vector.broadcast %cst_22 : f32 to vector<8x32xf32>
    %47 = arith.mulf %45, %46 : vector<8x32xf32>
    %c0_23 = arith.constant 0 : index
    %c0_24 = arith.constant 0 : index
    %c0_25 = arith.constant 0 : index
    %48 = vector.load %arg9[%c0_23, %c0_24, %c0_25] : memref<4x128x32xbf16, #tpu.memory_space<vmem>>, vector<1x128x32xbf16>
    %49 = vector.shape_cast %48 : vector<1x128x32xbf16> to vector<128x32xbf16>
    %cst_26 = arith.constant dense<0.000000e+00> : vector<8x32xf32>
    %50 = tpu.matmul %25, %49, %cst_26 {dimension_numbers = #tpu.dot_dimension_numbers<[1], [0], [0], [1], [0, 0, 1, 1], [], []>} : vector<8x128xbf16>, vector<128x32xbf16>, vector<8x32xf32> -> vector<8x32xf32>
    %c0_27 = arith.constant 0 : index
    %c0_28 = arith.constant 0 : index
    %c0_29 = arith.constant 0 : index
    %51 = vector.load %arg10[%c0_27, %c0_28, %c0_29] : memref<4x1x32xf32, #tpu.memory_space<vmem>>, vector<1x1x32xf32>
    %52 = vector.shape_cast %51 : vector<1x1x32xf32> to vector<1x32xf32>
    %53 = vector.broadcast %52 : vector<1x32xf32> to vector<8x32xf32>
    %54 = arith.addf %50, %53 : vector<8x32xf32>
    %55 = arith.truncf %47 : vector<8x32xf32> to vector<8x32xbf16>
    %56 = vector.extract_strided_slice %32 {offsets = [0, 0], sizes = [32, 8], strides = [1, 1]} : vector<128x8xbf16> to vector<32x8xbf16>
    %cst_30 = arith.constant dense<0.000000e+00> : vector<8x8xf32>
    %57 = tpu.matmul %55, %56, %cst_30 {dimension_numbers = #tpu.dot_dimension_numbers<[1], [0], [0], [1], [0, 0, 1, 1], [], []>} : vector<8x32xbf16>, vector<32x8xbf16>, vector<8x8xf32> -> vector<8x8xf32>
    %cst_31 = arith.constant -1.000000e+09 : f32
    %58 = vector.broadcast %cst_31 : f32 to vector<8x8xf32>
    %59 = arith.select %38, %57, %58 : vector<8x8xi1>, vector<8x8xf32>
    %cst_32 = arith.constant dense<0xFF800000> : vector<8xf32>
    %60 = vector.multi_reduction <maximumf>, %59, %cst_32 [1] : vector<8x8xf32> to vector<8xf32>
    %61 = vector.shape_cast %60 : vector<8xf32> to vector<8x1xf32>
    %62 = vector.broadcast %61 : vector<8x1xf32> to vector<8x8xf32>
    %63 = arith.subf %59, %62 : vector<8x8xf32>
    %64 = math.exp %63 : vector<8x8xf32>
    %cst_33 = arith.constant dense<0.000000e+00> : vector<8xf32>
    %65 = vector.multi_reduction <add>, %64, %cst_33 [1] : vector<8x8xf32> to vector<8xf32>
    %66 = vector.shape_cast %65 : vector<8xf32> to vector<8x1xf32>
    %67 = tpu.reciprocal %66 {approx = true} : vector<8x1xf32> -> vector<8x1xf32>
    %68 = vector.broadcast %67 : vector<8x1xf32> to vector<8x8xf32>
    %69 = arith.mulf %64, %68 : vector<8x8xf32>
    %70 = arith.truncf %69 : vector<8x8xf32> to vector<8x8xbf16>
    %71 = arith.truncf %54 : vector<8x32xf32> to vector<8x32xbf16>
    %cst_34 = arith.constant dense<0.000000e+00> : vector<8x32xf32>
    %72 = tpu.matmul %70, %71, %cst_34 {dimension_numbers = #tpu.dot_dimension_numbers<[1], [0], [0], [1], [0, 0, 1, 1], [], []>} : vector<8x8xbf16>, vector<8x32xbf16>, vector<8x32xf32> -> vector<8x32xf32>
    %73 = arith.truncf %72 : vector<8x32xf32> to vector<8x32xbf16>
    %c0_35 = arith.constant 0 : index
    %c0_36 = arith.constant 0 : index
    %74 = vector.load %arg14[%c0_35, %c0_36] : memref<8x128xbf16, #tpu.memory_space<vmem>>, vector<8x32xbf16>
    tpu.vector_store %arg14[%c0_35, %c0_36], %73 {strides = array<i32>} : memref<8x128xbf16, #tpu.memory_space<vmem>>, vector<8x32xbf16>,
    %c1 = arith.constant 1 : index
    %c0_37 = arith.constant 0 : index
    %c0_38 = arith.constant 0 : index
    %75 = vector.load %arg5[%c1, %c0_37, %c0_38] : memref<4x128x32xbf16, #tpu.memory_space<vmem>>, vector<1x128x32xbf16>
    %76 = vector.shape_cast %75 : vector<1x128x32xbf16> to vector<128x32xbf16>
    %cst_39 = arith.constant dense<0.000000e+00> : vector<8x32xf32>
    %77 = tpu.matmul %24, %76, %cst_39 {dimension_numbers = #tpu.dot_dimension_numbers<[1], [0], [0], [1], [0, 0, 1, 1], [], []>} : vector<8x128xbf16>, vector<128x32xbf16>, vector<8x32xf32> -> vector<8x32xf32>
    %c1_40 = arith.constant 1 : index
    %c0_41 = arith.constant 0 : index
    %c0_42 = arith.constant 0 : index
    %78 = vector.load %arg6[%c1_40, %c0_41, %c0_42] : memref<4x1x32xf32, #tpu.memory_space<vmem>>, vector<1x1x32xf32>
    %79 = vector.shape_cast %78 : vector<1x1x32xf32> to vector<1x32xf32>
    %80 = vector.broadcast %79 : vector<1x32xf32> to vector<8x32xf32>
    %81 = arith.addf %77, %80 : vector<8x32xf32>
    %cst_43 = arith.constant 0.176776692 : f32
    %82 = vector.broadcast %cst_43 : f32 to vector<8x32xf32>
    %83 = arith.mulf %81, %82 : vector<8x32xf32>
    %c1_44 = arith.constant 1 : index
    %c0_45 = arith.constant 0 : index
    %c0_46 = arith.constant 0 : index
    %84 = vector.load %arg9[%c1_44, %c0_45, %c0_46] : memref<4x128x32xbf16, #tpu.memory_space<vmem>>, vector<1x128x32xbf16>
    %85 = vector.shape_cast %84 : vector<1x128x32xbf16> to vector<128x32xbf16>
    %cst_47 = arith.constant dense<0.000000e+00> : vector<8x32xf32>
    %86 = tpu.matmul %25, %85, %cst_47 {dimension_numbers = #tpu.dot_dimension_numbers<[1], [0], [0], [1], [0, 0, 1, 1], [], []>} : vector<8x128xbf16>, vector<128x32xbf16>, vector<8x32xf32> -> vector<8x32xf32>
    %c1_48 = arith.constant 1 : index
    %c0_49 = arith.constant 0 : index
    %c0_50 = arith.constant 0 : index
    %87 = vector.load %arg10[%c1_48, %c0_49, %c0_50] : memref<4x1x32xf32, #tpu.memory_space<vmem>>, vector<1x1x32xf32>
    %88 = vector.shape_cast %87 : vector<1x1x32xf32> to vector<1x32xf32>
    %89 = vector.broadcast %88 : vector<1x32xf32> to vector<8x32xf32>
    %90 = arith.addf %86, %89 : vector<8x32xf32>
    %91 = arith.truncf %83 : vector<8x32xf32> to vector<8x32xbf16>
    %92 = vector.extract_strided_slice %32 {offsets = [32, 0], sizes = [32, 8], strides = [1, 1]} : vector<128x8xbf16> to vector<32x8xbf16>
    %cst_51 = arith.constant dense<0.000000e+00> : vector<8x8xf32>
    %93 = tpu.matmul %91, %92, %cst_51 {dimension_numbers = #tpu.dot_dimension_numbers<[1], [0], [0], [1], [0, 0, 1, 1], [], []>} : vector<8x32xbf16>, vector<32x8xbf16>, vector<8x8xf32> -> vector<8x8xf32>
    %cst_52 = arith.constant -1.000000e+09 : f32
    %94 = vector.broadcast %cst_52 : f32 to vector<8x8xf32>
    %95 = arith.select %38, %93, %94 : vector<8x8xi1>, vector<8x8xf32>
    %cst_53 = arith.constant dense<0xFF800000> : vector<8xf32>
    %96 = vector.multi_reduction <maximumf>, %95, %cst_53 [1] : vector<8x8xf32> to vector<8xf32>
    %97 = vector.shape_cast %96 : vector<8xf32> to vector<8x1xf32>
    %98 = vector.broadcast %97 : vector<8x1xf32> to vector<8x8xf32>
    %99 = arith.subf %95, %98 : vector<8x8xf32>
    %100 = math.exp %99 : vector<8x8xf32>
    %cst_54 = arith.constant dense<0.000000e+00> : vector<8xf32>
    %101 = vector.multi_reduction <add>, %100, %cst_54 [1] : vector<8x8xf32> to vector<8xf32>
    %102 = vector.shape_cast %101 : vector<8xf32> to vector<8x1xf32>
    %103 = tpu.reciprocal %102 {approx = true} : vector<8x1xf32> -> vector<8x1xf32>
    %104 = vector.broadcast %103 : vector<8x1xf32> to vector<8x8xf32>
    %105 = arith.mulf %100, %104 : vector<8x8xf32>
    %106 = arith.truncf %105 : vector<8x8xf32> to vector<8x8xbf16>
    %107 = arith.truncf %90 : vector<8x32xf32> to vector<8x32xbf16>
    %cst_55 = arith.constant dense<0.000000e+00> : vector<8x32xf32>
    %108 = tpu.matmul %106, %107, %cst_55 {dimension_numbers = #tpu.dot_dimension_numbers<[1], [0], [0], [1], [0, 0, 1, 1], [], []>} : vector<8x8xbf16>, vector<8x32xbf16>, vector<8x32xf32> -> vector<8x32xf32>
    %109 = arith.truncf %108 : vector<8x32xf32> to vector<8x32xbf16>
    %c0_56 = arith.constant 0 : index
    %c32 = arith.constant 32 : index
    %110 = vector.load %arg14[%c0_56, %c32] : memref<8x128xbf16, #tpu.memory_space<vmem>>, vector<8x32xbf16>
    tpu.vector_store %arg14[%c0_56, %c32], %109 {strides = array<i32>} : memref<8x128xbf16, #tpu.memory_space<vmem>>, vector<8x32xbf16>,
    %c2 = arith.constant 2 : index
    %c0_57 = arith.constant 0 : index
    %c0_58 = arith.constant 0 : index
    %111 = vector.load %arg5[%c2, %c0_57, %c0_58] : memref<4x128x32xbf16, #tpu.memory_space<vmem>>, vector<1x128x32xbf16>
    %112 = vector.shape_cast %111 : vector<1x128x32xbf16> to vector<128x32xbf16>
    %cst_59 = arith.constant dense<0.000000e+00> : vector<8x32xf32>
    %113 = tpu.matmul %24, %112, %cst_59 {dimension_numbers = #tpu.dot_dimension_numbers<[1], [0], [0], [1], [0, 0, 1, 1], [], []>} : vector<8x128xbf16>, vector<128x32xbf16>, vector<8x32xf32> -> vector<8x32xf32>
    %c2_60 = arith.constant 2 : index
    %c0_61 = arith.constant 0 : index
    %c0_62 = arith.constant 0 : index
    %114 = vector.load %arg6[%c2_60, %c0_61, %c0_62] : memref<4x1x32xf32, #tpu.memory_space<vmem>>, vector<1x1x32xf32>
    %115 = vector.shape_cast %114 : vector<1x1x32xf32> to vector<1x32xf32>
    %116 = vector.broadcast %115 : vector<1x32xf32> to vector<8x32xf32>
    %117 = arith.addf %113, %116 : vector<8x32xf32>
    %cst_63 = arith.constant 0.176776692 : f32
    %118 = vector.broadcast %cst_63 : f32 to vector<8x32xf32>
    %119 = arith.mulf %117, %118 : vector<8x32xf32>
    %c2_64 = arith.constant 2 : index
    %c0_65 = arith.constant 0 : index
    %c0_66 = arith.constant 0 : index
    %120 = vector.load %arg9[%c2_64, %c0_65, %c0_66] : memref<4x128x32xbf16, #tpu.memory_space<vmem>>, vector<1x128x32xbf16>
    %121 = vector.shape_cast %120 : vector<1x128x32xbf16> to vector<128x32xbf16>
    %cst_67 = arith.constant dense<0.000000e+00> : vector<8x32xf32>
    %122 = tpu.matmul %25, %121, %cst_67 {dimension_numbers = #tpu.dot_dimension_numbers<[1], [0], [0], [1], [0, 0, 1, 1], [], []>} : vector<8x128xbf16>, vector<128x32xbf16>, vector<8x32xf32> -> vector<8x32xf32>
    %c2_68 = arith.constant 2 : index
    %c0_69 = arith.constant 0 : index
    %c0_70 = arith.constant 0 : index
    %123 = vector.load %arg10[%c2_68, %c0_69, %c0_70] : memref<4x1x32xf32, #tpu.memory_space<vmem>>, vector<1x1x32xf32>
    %124 = vector.shape_cast %123 : vector<1x1x32xf32> to vector<1x32xf32>
    %125 = vector.broadcast %124 : vector<1x32xf32> to vector<8x32xf32>
    %126 = arith.addf %122, %125 : vector<8x32xf32>
    %127 = arith.truncf %119 : vector<8x32xf32> to vector<8x32xbf16>
    %128 = vector.extract_strided_slice %32 {offsets = [64, 0], sizes = [32, 8], strides = [1, 1]} : vector<128x8xbf16> to vector<32x8xbf16>
    %cst_71 = arith.constant dense<0.000000e+00> : vector<8x8xf32>
    %129 = tpu.matmul %127, %128, %cst_71 {dimension_numbers = #tpu.dot_dimension_numbers<[1], [0], [0], [1], [0, 0, 1, 1], [], []>} : vector<8x32xbf16>, vector<32x8xbf16>, vector<8x8xf32> -> vector<8x8xf32>
    %cst_72 = arith.constant -1.000000e+09 : f32
    %130 = vector.broadcast %cst_72 : f32 to vector<8x8xf32>
    %131 = arith.select %38, %129, %130 : vector<8x8xi1>, vector<8x8xf32>
    %cst_73 = arith.constant dense<0xFF800000> : vector<8xf32>
    %132 = vector.multi_reduction <maximumf>, %131, %cst_73 [1] : vector<8x8xf32> to vector<8xf32>
    %133 = vector.shape_cast %132 : vector<8xf32> to vector<8x1xf32>
    %134 = vector.broadcast %133 : vector<8x1xf32> to vector<8x8xf32>
    %135 = arith.subf %131, %134 : vector<8x8xf32>
    %136 = math.exp %135 : vector<8x8xf32>
    %cst_74 = arith.constant dense<0.000000e+00> : vector<8xf32>
    %137 = vector.multi_reduction <add>, %136, %cst_74 [1] : vector<8x8xf32> to vector<8xf32>
    %138 = vector.shape_cast %137 : vector<8xf32> to vector<8x1xf32>
    %139 = tpu.reciprocal %138 {approx = true} : vector<8x1xf32> -> vector<8x1xf32>
    %140 = vector.broadcast %139 : vector<8x1xf32> to vector<8x8xf32>
    %141 = arith.mulf %136, %140 : vector<8x8xf32>
    %142 = arith.truncf %141 : vector<8x8xf32> to vector<8x8xbf16>
    %143 = arith.truncf %126 : vector<8x32xf32> to vector<8x32xbf16>
    %cst_75 = arith.constant dense<0.000000e+00> : vector<8x32xf32>
    %144 = tpu.matmul %142, %143, %cst_75 {dimension_numbers = #tpu.dot_dimension_numbers<[1], [0], [0], [1], [0, 0, 1, 1], [], []>} : vector<8x8xbf16>, vector<8x32xbf16>, vector<8x32xf32> -> vector<8x32xf32>
    %145 = arith.truncf %144 : vector<8x32xf32> to vector<8x32xbf16>
    %c0_76 = arith.constant 0 : index
    %c64 = arith.constant 64 : index
    %146 = vector.load %arg14[%c0_76, %c64] : memref<8x128xbf16, #tpu.memory_space<vmem>>, vector<8x32xbf16>
    tpu.vector_store %arg14[%c0_76, %c64], %145 {strides = array<i32>} : memref<8x128xbf16, #tpu.memory_space<vmem>>, vector<8x32xbf16>,
    %c3 = arith.constant 3 : index
    %c0_77 = arith.constant 0 : index
    %c0_78 = arith.constant 0 : index
    %147 = vector.load %arg5[%c3, %c0_77, %c0_78] : memref<4x128x32xbf16, #tpu.memory_space<vmem>>, vector<1x128x32xbf16>
    %148 = vector.shape_cast %147 : vector<1x128x32xbf16> to vector<128x32xbf16>
    %cst_79 = arith.constant dense<0.000000e+00> : vector<8x32xf32>
    %149 = tpu.matmul %24, %148, %cst_79 {dimension_numbers = #tpu.dot_dimension_numbers<[1], [0], [0], [1], [0, 0, 1, 1], [], []>} : vector<8x128xbf16>, vector<128x32xbf16>, vector<8x32xf32> -> vector<8x32xf32>
    %c3_80 = arith.constant 3 : index
    %c0_81 = arith.constant 0 : index
    %c0_82 = arith.constant 0 : index
    %150 = vector.load %arg6[%c3_80, %c0_81, %c0_82] : memref<4x1x32xf32, #tpu.memory_space<vmem>>, vector<1x1x32xf32>
    %151 = vector.shape_cast %150 : vector<1x1x32xf32> to vector<1x32xf32>
    %152 = vector.broadcast %151 : vector<1x32xf32> to vector<8x32xf32>
    %153 = arith.addf %149, %152 : vector<8x32xf32>
    %cst_83 = arith.constant 0.176776692 : f32
    %154 = vector.broadcast %cst_83 : f32 to vector<8x32xf32>
    %155 = arith.mulf %153, %154 : vector<8x32xf32>
    %c3_84 = arith.constant 3 : index
    %c0_85 = arith.constant 0 : index
    %c0_86 = arith.constant 0 : index
    %156 = vector.load %arg9[%c3_84, %c0_85, %c0_86] : memref<4x128x32xbf16, #tpu.memory_space<vmem>>, vector<1x128x32xbf16>
    %157 = vector.shape_cast %156 : vector<1x128x32xbf16> to vector<128x32xbf16>
    %cst_87 = arith.constant dense<0.000000e+00> : vector<8x32xf32>
    %158 = tpu.matmul %25, %157, %cst_87 {dimension_numbers = #tpu.dot_dimension_numbers<[1], [0], [0], [1], [0, 0, 1, 1], [], []>} : vector<8x128xbf16>, vector<128x32xbf16>, vector<8x32xf32> -> vector<8x32xf32>
    %c3_88 = arith.constant 3 : index
    %c0_89 = arith.constant 0 : index
    %c0_90 = arith.constant 0 : index
    %159 = vector.load %arg10[%c3_88, %c0_89, %c0_90] : memref<4x1x32xf32, #tpu.memory_space<vmem>>, vector<1x1x32xf32>
    %160 = vector.shape_cast %159 : vector<1x1x32xf32> to vector<1x32xf32>
    %161 = vector.broadcast %160 : vector<1x32xf32> to vector<8x32xf32>
    %162 = arith.addf %158, %161 : vector<8x32xf32>
    %163 = arith.truncf %155 : vector<8x32xf32> to vector<8x32xbf16>
    %164 = vector.extract_strided_slice %32 {offsets = [96, 0], sizes = [32, 8], strides = [1, 1]} : vector<128x8xbf16> to vector<32x8xbf16>
    %cst_91 = arith.constant dense<0.000000e+00> : vector<8x8xf32>
    %165 = tpu.matmul %163, %164, %cst_91 {dimension_numbers = #tpu.dot_dimension_numbers<[1], [0], [0], [1], [0, 0, 1, 1], [], []>} : vector<8x32xbf16>, vector<32x8xbf16>, vector<8x8xf32> -> vector<8x8xf32>
    %cst_92 = arith.constant -1.000000e+09 : f32
    %166 = vector.broadcast %cst_92 : f32 to vector<8x8xf32>
    %167 = arith.select %38, %165, %166 : vector<8x8xi1>, vector<8x8xf32>
    %cst_93 = arith.constant dense<0xFF800000> : vector<8xf32>
    %168 = vector.multi_reduction <maximumf>, %167, %cst_93 [1] : vector<8x8xf32> to vector<8xf32>
    %169 = vector.shape_cast %168 : vector<8xf32> to vector<8x1xf32>
    %170 = vector.broadcast %169 : vector<8x1xf32> to vector<8x8xf32>
    %171 = arith.subf %167, %170 : vector<8x8xf32>
    %172 = math.exp %171 : vector<8x8xf32>
    %cst_94 = arith.constant dense<0.000000e+00> : vector<8xf32>
    %173 = vector.multi_reduction <add>, %172, %cst_94 [1] : vector<8x8xf32> to vector<8xf32>
    %174 = vector.shape_cast %173 : vector<8xf32> to vector<8x1xf32>
    %175 = tpu.reciprocal %174 {approx = true} : vector<8x1xf32> -> vector<8x1xf32>
    %176 = vector.broadcast %175 : vector<8x1xf32> to vector<8x8xf32>
    %177 = arith.mulf %172, %176 : vector<8x8xf32>
    %178 = arith.truncf %177 : vector<8x8xf32> to vector<8x8xbf16>
    %179 = arith.truncf %162 : vector<8x32xf32> to vector<8x32xbf16>
    %cst_95 = arith.constant dense<0.000000e+00> : vector<8x32xf32>
    %180 = tpu.matmul %178, %179, %cst_95 {dimension_numbers = #tpu.dot_dimension_numbers<[1], [0], [0], [1], [0, 0, 1, 1], [], []>} : vector<8x8xbf16>, vector<8x32xbf16>, vector<8x32xf32> -> vector<8x32xf32>
    %181 = arith.truncf %180 : vector<8x32xf32> to vector<8x32xbf16>
    %c0_96 = arith.constant 0 : index
    %c96 = arith.constant 96 : index
    %182 = vector.load %arg14[%c0_96, %c96] : memref<8x128xbf16, #tpu.memory_space<vmem>>, vector<8x32xbf16>
    tpu.vector_store %arg14[%c0_96, %c96], %181 {strides = array<i32>} : memref<8x128xbf16, #tpu.memory_space<vmem>>, vector<8x32xbf16>,
    %c0_97 = arith.constant 0 : index
    %c0_98 = arith.constant 0 : index
    %183 = vector.load %arg14[%c0_97, %c0_98] : memref<8x128xbf16, #tpu.memory_space<vmem>>, vector<8x128xbf16>
    %c0_99 = arith.constant 0 : index
    %c0_100 = arith.constant 0 : index
    %184 = vector.load %arg11[%c0_99, %c0_100] : memref<128x128xbf16, #tpu.memory_space<vmem>>, vector<128x128xbf16>
    %cst_101 = arith.constant dense<0.000000e+00> : vector<8x128xf32>
    %185 = tpu.matmul %183, %184, %cst_101 {dimension_numbers = #tpu.dot_dimension_numbers<[1], [0], [0], [1], [0, 0, 1, 1], [], []>} : vector<8x128xbf16>, vector<128x128xbf16>, vector<8x128xf32> -> vector<8x128xf32>
    %c0_102 = arith.constant 0 : index
    %c0_103 = arith.constant 0 : index
    %186 = vector.load %arg12[%c0_102, %c0_103] : memref<1x128xf32, #tpu.memory_space<vmem>>, vector<1x128xf32>
    %187 = vector.broadcast %186 : vector<1x128xf32> to vector<8x128xf32>
    %188 = arith.addf %185, %187 : vector<8x128xf32>
    %189 = arith.addf %1, %188 : vector<8x128xf32>
    %c0_104 = arith.constant 0 : index
    %c0_105 = arith.constant 0 : index
    %c0_106 = arith.constant 0 : index
    %190 = vector.load %arg13[%c0_104, %c0_105, %c0_106] : memref<1x8x128xf32, #tpu.memory_space<vmem>>, vector<1x8x128xf32>
    %191 = vector.shape_cast %190 : vector<1x8x128xf32> to vector<8x128xf32>
    %192 = vector.shape_cast %189 : vector<8x128xf32> to vector<1x8x128xf32>
    tpu.vector_store %arg13[%c0_104, %c0_105, %c0_106], %192 {strides = array<i32>} : memref<1x8x128xf32, #tpu.memory_space<vmem>>, vector<1x8x128xf32>,
    return
  }
  func.func @transform_0(%arg0: i32, %arg1: i32) -> (i32, i32, i32) {
    %c0_i32 = arith.constant 0 : i32
    %c0_i32_0 = arith.constant 0 : i32
    %c0_i32_1 = arith.constant 0 : i32
    return %arg0, %c0_i32, %c0_i32_0 : i32, i32, i32
  }
  func.func @transform_1(%arg0: i32, %arg1: i32) -> (i32, i32) {
    %c0_i32 = arith.constant 0 : i32
    %c0_i32_0 = arith.constant 0 : i32
    %c0_i32_1 = arith.constant 0 : i32
    return %c0_i32, %c0_i32_0 : i32, i32
  }
  func.func @transform_2(%arg0: i32, %arg1: i32) -> (i32, i32) {
    %c0_i32 = arith.constant 0 : i32
    %c0_i32_0 = arith.constant 0 : i32
    %c0_i32_1 = arith.constant 0 : i32
    return %c0_i32, %c0_i32_0 : i32, i32
  }
  func.func @transform_3(%arg0: i32, %arg1: i32) -> (i32, i32, i32) {
    %c0_i32 = arith.constant 0 : i32
    %c0_i32_0 = arith.constant 0 : i32
    %c0_i32_1 = arith.constant 0 : i32
    %c0_i32_2 = arith.constant 0 : i32
    return %c0_i32, %c0_i32_0, %c0_i32_1 : i32, i32, i32
  }
  func.func @transform_4(%arg0: i32, %arg1: i32) -> (i32, i32, i32) {
    %c0_i32 = arith.constant 0 : i32
    %c0_i32_0 = arith.constant 0 : i32
    %c0_i32_1 = arith.constant 0 : i32
    %c0_i32_2 = arith.constant 0 : i32
    return %c0_i32, %c0_i32_0, %c0_i32_1 : i32, i32, i32
  }
  func.func @transform_5(%arg0: i32, %arg1: i32) -> (i32, i32) {
    %c0_i32 = arith.constant 0 : i32
    %c0_i32_0 = arith.constant 0 : i32
    %c0_i32_1 = arith.constant 0 : i32
    return %c0_i32, %c0_i32_0 : i32, i32
  }
  func.func @transform_6(%arg0: i32, %arg1: i32) -> (i32, i32) {
    %c0_i32 = arith.constant 0 : i32
    %c0_i32_0 = arith.constant 0 : i32
    %c0_i32_1 = arith.constant 0 : i32
    return %c0_i32, %c0_i32_0 : i32, i32
  }
  func.func @transform_7(%arg0: i32, %arg1: i32) -> (i32, i32, i32) {
    %c0_i32 = arith.constant 0 : i32
    %c0_i32_0 = arith.constant 0 : i32
    %c0_i32_1 = arith.constant 0 : i32
    %c0_i32_2 = arith.constant 0 : i32
    return %c0_i32, %c0_i32_0, %c0_i32_1 : i32, i32, i32
  }
  func.func @transform_8(%arg0: i32, %arg1: i32) -> (i32, i32, i32) {
    %c0_i32 = arith.constant 0 : i32
    %c0_i32_0 = arith.constant 0 : i32
    %c0_i32_1 = arith.constant 0 : i32
    %c0_i32_2 = arith.constant 0 : i32
    return %c0_i32, %c0_i32_0, %c0_i32_1 : i32, i32, i32
  }
  func.func @transform_9(%arg0: i32, %arg1: i32) -> (i32, i32) {
    %c0_i32 = arith.constant 0 : i32
    %c0_i32_0 = arith.constant 0 : i32
    %c0_i32_1 = arith.constant 0 : i32
    return %c0_i32, %c0_i32_0 : i32, i32
  }
  func.func @transform_10(%arg0: i32, %arg1: i32) -> (i32, i32) {
    %c0_i32 = arith.constant 0 : i32
    %c0_i32_0 = arith.constant 0 : i32
    %c0_i32_1 = arith.constant 0 : i32
    return %c0_i32, %c0_i32_0 : i32, i32
  }
  func.func @transform_11(%arg0: i32, %arg1: i32) -> (i32, i32, i32) {
    %c0_i32 = arith.constant 0 : i32
    %c0_i32_0 = arith.constant 0 : i32
    return %arg0, %arg1, %c0_i32 : i32, i32, i32
  }
}

module attributes {stable_mosaic.version = 11 : i64} {
  func.func @_layernorm_kernel(%arg0: i32, %arg1: memref<16x128xf32, #tpu.memory_space<vmem>>, %arg2: memref<1x128xf32, #tpu.memory_space<vmem>>, %arg3: memref<1x128xf32, #tpu.memory_space<vmem>>, %arg4: memref<16x128xf32, #tpu.memory_space<vmem>>) attributes {dimension_semantics = [#tpu.dimension_semantics<parallel>], iteration_bounds = array<i64: 1>, scalar_prefetch = 0 : i64, scratch_operands = 0 : i64, tpu.core_type = #tpu.core_type<tc>, window_params = [{transform_indices = @transform_0, window_bounds = array<i64: 16, 128>}, {pipeline_mode = #tpu.pipeline_mode<synchronous>, transform_indices = @transform_1, window_bounds = array<i64: 1, 128>}, {pipeline_mode = #tpu.pipeline_mode<synchronous>, transform_indices = @transform_2, window_bounds = array<i64: 1, 128>}, {transform_indices = @transform_3, window_bounds = array<i64: 16, 128>}]} {
    %c0 = arith.constant 0 : index
    %c0_0 = arith.constant 0 : index
    %0 = vector.load %arg1[%c0, %c0_0] : memref<16x128xf32, #tpu.memory_space<vmem>>, vector<16x128xf32>
    %c0_1 = arith.constant 0 : index
    %c0_2 = arith.constant 0 : index
    %1 = vector.load %arg2[%c0_1, %c0_2] : memref<1x128xf32, #tpu.memory_space<vmem>>, vector<1x128xf32>
    %c0_3 = arith.constant 0 : index
    %c0_4 = arith.constant 0 : index
    %2 = vector.load %arg3[%c0_3, %c0_4] : memref<1x128xf32, #tpu.memory_space<vmem>>, vector<1x128xf32>
    %cst = arith.constant dense<0.000000e+00> : vector<16xf32>
    %3 = vector.multi_reduction <add>, %0, %cst [1] : vector<16x128xf32> to vector<16xf32>
    %4 = vector.shape_cast %3 : vector<16xf32> to vector<16x1xf32>
    %cst_5 = arith.constant 1.280000e+02 : f32
    %5 = vector.broadcast %cst_5 : f32 to vector<16x1xf32>
    %6 = arith.divf %4, %5 : vector<16x1xf32>
    %7 = vector.broadcast %6 : vector<16x1xf32> to vector<16x128xf32>
    %8 = arith.subf %0, %7 : vector<16x128xf32>
    %9 = arith.mulf %8, %8 : vector<16x128xf32>
    %cst_6 = arith.constant dense<0.000000e+00> : vector<16xf32>
    %10 = vector.multi_reduction <add>, %9, %cst_6 [1] : vector<16x128xf32> to vector<16xf32>
    %11 = vector.shape_cast %10 : vector<16xf32> to vector<16x1xf32>
    %cst_7 = arith.constant 0.00787401571 : f32
    %12 = vector.broadcast %cst_7 : f32 to vector<16x1xf32>
    %13 = arith.mulf %11, %12 : vector<16x1xf32>
    %14 = vector.broadcast %1 : vector<1x128xf32> to vector<16x128xf32>
    %15 = arith.mulf %14, %8 : vector<16x128xf32>
    %16 = math.sqrt %13 : vector<16x1xf32>
    %cst_8 = arith.constant 9.99999997E-7 : f32
    %17 = vector.broadcast %cst_8 : f32 to vector<16x1xf32>
    %18 = arith.addf %16, %17 : vector<16x1xf32>
    %19 = vector.broadcast %18 : vector<16x1xf32> to vector<16x128xf32>
    %20 = arith.divf %15, %19 : vector<16x128xf32>
    %21 = vector.broadcast %2 : vector<1x128xf32> to vector<16x128xf32>
    %22 = arith.addf %20, %21 : vector<16x128xf32>
    %c0_9 = arith.constant 0 : index
    %c0_10 = arith.constant 0 : index
    %23 = vector.load %arg4[%c0_9, %c0_10] : memref<16x128xf32, #tpu.memory_space<vmem>>, vector<16x128xf32>
    tpu.vector_store %arg4[%c0_9, %c0_10], %22 {strides = array<i32>} : memref<16x128xf32, #tpu.memory_space<vmem>>, vector<16x128xf32>,
    return
  }
  func.func @transform_0(%arg0: i32) -> (i32, i32) {
    %c0_i32 = arith.constant 0 : i32
    %c0_i32_0 = arith.constant 0 : i32
    return %arg0, %c0_i32 : i32, i32
  }
  func.func @transform_1(%arg0: i32) -> (i32, i32) {
    %c0_i32 = arith.constant 0 : i32
    %c0_i32_0 = arith.constant 0 : i32
    %c0_i32_1 = arith.constant 0 : i32
    return %c0_i32, %c0_i32_0 : i32, i32
  }
  func.func @transform_2(%arg0: i32) -> (i32, i32) {
    %c0_i32 = arith.constant 0 : i32
    %c0_i32_0 = arith.constant 0 : i32
    %c0_i32_1 = arith.constant 0 : i32
    return %c0_i32, %c0_i32_0 : i32, i32
  }
  func.func @transform_3(%arg0: i32) -> (i32, i32) {
    %c0_i32 = arith.constant 0 : i32
    %c0_i32_0 = arith.constant 0 : i32
    return %arg0, %c0_i32 : i32, i32
  }
}

module attributes {stable_mosaic.version = 11 : i64} {
  func.func @_fused_ffn_kernel(%arg0: i32, %arg1: memref<16x128xf32, #tpu.memory_space<vmem>>, %arg2: memref<1x128xf32, #tpu.memory_space<vmem>>, %arg3: memref<1x128xf32, #tpu.memory_space<vmem>>, %arg4: memref<128x256xbf16, #tpu.memory_space<vmem>>, %arg5: memref<1x256xf32, #tpu.memory_space<vmem>>, %arg6: memref<256x128xbf16, #tpu.memory_space<vmem>>, %arg7: memref<1x128xf32, #tpu.memory_space<vmem>>, %arg8: memref<16x128xf32, #tpu.memory_space<vmem>>) attributes {dimension_semantics = [#tpu.dimension_semantics<parallel>], iteration_bounds = array<i64: 1>, scalar_prefetch = 0 : i64, scratch_operands = 0 : i64, tpu.core_type = #tpu.core_type<tc>, window_params = [{transform_indices = @transform_0, window_bounds = array<i64: 16, 128>}, {pipeline_mode = #tpu.pipeline_mode<synchronous>, transform_indices = @transform_1, window_bounds = array<i64: 1, 128>}, {pipeline_mode = #tpu.pipeline_mode<synchronous>, transform_indices = @transform_2, window_bounds = array<i64: 1, 128>}, {pipeline_mode = #tpu.pipeline_mode<synchronous>, transform_indices = @transform_3, window_bounds = array<i64: 128, 256>}, {pipeline_mode = #tpu.pipeline_mode<synchronous>, transform_indices = @transform_4, window_bounds = array<i64: 1, 256>}, {pipeline_mode = #tpu.pipeline_mode<synchronous>, transform_indices = @transform_5, window_bounds = array<i64: 256, 128>}, {pipeline_mode = #tpu.pipeline_mode<synchronous>, transform_indices = @transform_6, window_bounds = array<i64: 1, 128>}, {transform_indices = @transform_7, window_bounds = array<i64: 16, 128>}]} {
    %c0 = arith.constant 0 : index
    %c0_0 = arith.constant 0 : index
    %0 = vector.load %arg1[%c0, %c0_0] : memref<16x128xf32, #tpu.memory_space<vmem>>, vector<16x128xf32>
    %c0_1 = arith.constant 0 : index
    %c0_2 = arith.constant 0 : index
    %1 = vector.load %arg2[%c0_1, %c0_2] : memref<1x128xf32, #tpu.memory_space<vmem>>, vector<1x128xf32>
    %c0_3 = arith.constant 0 : index
    %c0_4 = arith.constant 0 : index
    %2 = vector.load %arg3[%c0_3, %c0_4] : memref<1x128xf32, #tpu.memory_space<vmem>>, vector<1x128xf32>
    %cst = arith.constant dense<0.000000e+00> : vector<16xf32>
    %3 = vector.multi_reduction <add>, %0, %cst [1] : vector<16x128xf32> to vector<16xf32>
    %4 = vector.shape_cast %3 : vector<16xf32> to vector<16x1xf32>
    %cst_5 = arith.constant 1.280000e+02 : f32
    %5 = vector.broadcast %cst_5 : f32 to vector<16x1xf32>
    %6 = arith.divf %4, %5 : vector<16x1xf32>
    %7 = vector.broadcast %6 : vector<16x1xf32> to vector<16x128xf32>
    %8 = arith.subf %0, %7 : vector<16x128xf32>
    %9 = arith.mulf %8, %8 : vector<16x128xf32>
    %cst_6 = arith.constant dense<0.000000e+00> : vector<16xf32>
    %10 = vector.multi_reduction <add>, %9, %cst_6 [1] : vector<16x128xf32> to vector<16xf32>
    %11 = vector.shape_cast %10 : vector<16xf32> to vector<16x1xf32>
    %cst_7 = arith.constant 0.00787401571 : f32
    %12 = vector.broadcast %cst_7 : f32 to vector<16x1xf32>
    %13 = arith.mulf %11, %12 : vector<16x1xf32>
    %14 = vector.broadcast %1 : vector<1x128xf32> to vector<16x128xf32>
    %15 = arith.mulf %14, %8 : vector<16x128xf32>
    %16 = math.sqrt %13 : vector<16x1xf32>
    %cst_8 = arith.constant 9.99999997E-7 : f32
    %17 = vector.broadcast %cst_8 : f32 to vector<16x1xf32>
    %18 = arith.addf %16, %17 : vector<16x1xf32>
    %19 = vector.broadcast %18 : vector<16x1xf32> to vector<16x128xf32>
    %20 = arith.divf %15, %19 : vector<16x128xf32>
    %21 = vector.broadcast %2 : vector<1x128xf32> to vector<16x128xf32>
    %22 = arith.addf %20, %21 : vector<16x128xf32>
    %23 = arith.truncf %22 : vector<16x128xf32> to vector<16x128xbf16>
    %c0_9 = arith.constant 0 : index
    %c0_10 = arith.constant 0 : index
    %24 = vector.load %arg4[%c0_9, %c0_10] : memref<128x256xbf16, #tpu.memory_space<vmem>>, vector<128x256xbf16>
    %cst_11 = arith.constant dense<0.000000e+00> : vector<16x256xf32>
    %25 = tpu.matmul %23, %24, %cst_11 {dimension_numbers = #tpu.dot_dimension_numbers<[1], [0], [0], [1], [0, 0, 1, 1], [], []>} : vector<16x128xbf16>, vector<128x256xbf16>, vector<16x256xf32> -> vector<16x256xf32>
    %c0_12 = arith.constant 0 : index
    %c0_13 = arith.constant 0 : index
    %26 = vector.load %arg5[%c0_12, %c0_13] : memref<1x256xf32, #tpu.memory_space<vmem>>, vector<1x256xf32>
    %27 = vector.broadcast %26 : vector<1x256xf32> to vector<16x256xf32>
    %28 = arith.addf %25, %27 : vector<16x256xf32>
    %cst_14 = arith.constant 0.000000e+00 : f32
    %29 = vector.broadcast %cst_14 : f32 to vector<16x256xf32>
    %30 = arith.maximumf %28, %29 : vector<16x256xf32>
    %31 = arith.truncf %30 : vector<16x256xf32> to vector<16x256xbf16>
    %c0_15 = arith.constant 0 : index
    %c0_16 = arith.constant 0 : index
    %32 = vector.load %arg6[%c0_15, %c0_16] : memref<256x128xbf16, #tpu.memory_space<vmem>>, vector<256x128xbf16>
    %cst_17 = arith.constant dense<0.000000e+00> : vector<16x128xf32>
    %33 = tpu.matmul %31, %32, %cst_17 {dimension_numbers = #tpu.dot_dimension_numbers<[1], [0], [0], [1], [0, 0, 1, 1], [], []>} : vector<16x256xbf16>, vector<256x128xbf16>, vector<16x128xf32> -> vector<16x128xf32>
    %c0_18 = arith.constant 0 : index
    %c0_19 = arith.constant 0 : index
    %34 = vector.load %arg7[%c0_18, %c0_19] : memref<1x128xf32, #tpu.memory_space<vmem>>, vector<1x128xf32>
    %35 = vector.broadcast %34 : vector<1x128xf32> to vector<16x128xf32>
    %36 = arith.addf %33, %35 : vector<16x128xf32>
    %37 = arith.addf %0, %36 : vector<16x128xf32>
    %c0_20 = arith.constant 0 : index
    %c0_21 = arith.constant 0 : index
    %38 = vector.load %arg8[%c0_20, %c0_21] : memref<16x128xf32, #tpu.memory_space<vmem>>, vector<16x128xf32>
    tpu.vector_store %arg8[%c0_20, %c0_21], %37 {strides = array<i32>} : memref<16x128xf32, #tpu.memory_space<vmem>>, vector<16x128xf32>,
    return
  }
  func.func @transform_0(%arg0: i32) -> (i32, i32) {
    %c0_i32 = arith.constant 0 : i32
    %c0_i32_0 = arith.constant 0 : i32
    return %arg0, %c0_i32 : i32, i32
  }
  func.func @transform_1(%arg0: i32) -> (i32, i32) {
    %c0_i32 = arith.constant 0 : i32
    %c0_i32_0 = arith.constant 0 : i32
    %c0_i32_1 = arith.constant 0 : i32
    return %c0_i32, %c0_i32_0 : i32, i32
  }
  func.func @transform_2(%arg0: i32) -> (i32, i32) {
    %c0_i32 = arith.constant 0 : i32
    %c0_i32_0 = arith.constant 0 : i32
    %c0_i32_1 = arith.constant 0 : i32
    return %c0_i32, %c0_i32_0 : i32, i32
  }
  func.func @transform_3(%arg0: i32) -> (i32, i32) {
    %c0_i32 = arith.constant 0 : i32
    %c0_i32_0 = arith.constant 0 : i32
    %c0_i32_1 = arith.constant 0 : i32
    return %c0_i32, %c0_i32_0 : i32, i32
  }
  func.func @transform_4(%arg0: i32) -> (i32, i32) {
    %c0_i32 = arith.constant 0 : i32
    %c0_i32_0 = arith.constant 0 : i32
    %c0_i32_1 = arith.constant 0 : i32
    return %c0_i32, %c0_i32_0 : i32, i32
  }
  func.func @transform_5(%arg0: i32) -> (i32, i32) {
    %c0_i32 = arith.constant 0 : i32
    %c0_i32_0 = arith.constant 0 : i32
    %c0_i32_1 = arith.constant 0 : i32
    return %c0_i32, %c0_i32_0 : i32, i32
  }
  func.func @transform_6(%arg0: i32) -> (i32, i32) {
    %c0_i32 = arith.constant 0 : i32
    %c0_i32_0 = arith.constant 0 : i32
    %c0_i32_1 = arith.constant 0 : i32
    return %c0_i32, %c0_i32_0 : i32, i32
  }
  func.func @transform_7(%arg0: i32) -> (i32, i32) {
    %c0_i32 = arith.constant 0 : i32
    %c0_i32_0 = arith.constant 0 : i32
    return %arg0, %c0_i32 : i32, i32
  }
}

</mosaic_0001>

<llo_original>
// kernel: decoder_forward.13
$region0: #{decoder_forward.13}
  #allocation0 [shape = 'u32[]', space=smem, size = 0x4, offset = 0x4, fixed_abs, tag = 'smem constant byte address 0x4 - core index']
  #allocation1 [shape = 'u32[72,128]{1,0:T(1,128)}', space=vmem, size = 0x9000, scoped, tag = 'internal scratch']
  %s0 = inlined_call_operand.vmem [shape: f32[16,128], index: 0, kind: input, shape index: {}]
  %s1 = inlined_call_operand.vmem [shape: f32[1,128], index: 1, kind: input, shape index: {}]
  %s2 = inlined_call_operand.vmem [shape: f32[1,128], index: 2, kind: input, shape index: {}]
  %s3 = inlined_call_operand.hbm [shape: f32[16,128], index: 3, kind: output, shape index: {}]
  %s4 = sld [smem:[#allocation0]]
  $region22: #{decoder_forward.13} parent=0
    _
  %s6 = ssub.s32 1, %s4
  %s7 = scalar_select 0, %s6, %s4
  $region1: #{decoder_forward.13} parent=0
    #allocation2 [shape = 'u8[8192]{0}', space=vmem, size = 0x2000, scoped, tag = 'output window, operand 0, single buffered']
    #allocation3 [shape = 's32[1]{0}', space=sflag, size = 0x4, scoped, tag = 'scoped memory for decoder_forward.13']
    %8 = vsyncpa [#allocation3], 0
    // Predicated region
    $region2: #{decoder_forward.13} parent=1 // pred_check
      _
    $region3: #{decoder_forward.13} parent=1 // pred_check_branch
      %10 = sbr.rel (0) target = $region5
    $region4: #{decoder_forward.13} parent=1 // pred_region
      _
    $region5: #{decoder_forward.13} parent=1 // pred_fallthru
      _
    // Predicated region
    $region6: #{decoder_forward.13} parent=1 // pred_check
      _
    $region7: #{decoder_forward.13} parent=1 // pred_check_branch
      %12 = sbr.rel (0) target = $region9
    $region8: #{decoder_forward.13} parent=1 // pred_region
      _
    $region9: #{decoder_forward.13} parent=1 // pred_fallthru
      _
    // Predicated region
    $region10: #{decoder_forward.13} parent=1 // pred_check
      _
    $region11: #{decoder_forward.13} parent=1 // pred_check_branch
      %14 = sbr.rel (0) target = $region13
    $region12: #{decoder_forward.13} parent=1 // pred_region
      _
    $region13: #{decoder_forward.13} parent=1 // pred_fallthru
      _
    %v15 = vld [vmem:[%s0] sm:$0xff]
    %v16 = vld [vmem:[%s0 + $0x8] sm:$0xff]
    %v17 = vld [vmem:[%s1] sm:$0x1]
    %v18 = vld [vmem:[%s2] sm:$0x1]
    %19 = vadd.xlane.f32.xlu0 %v15
    %v20 = vpop.xlane.xlu0 %19
    %21 = vadd.xlane.f32.xlu0 %v16
    %v22 = vpop.xlane.xlu0 %21
    %v23 = vrcp.pop 128.0
    %v24 = vmul.f32 128.0, %v23
    %v25 = vsub.f32 1.0, %v24
    %v26 = vmul.f32 %v23, %v25
    %v27 = vadd.f32 %v23, %v26
    %vm28 = vweird.f32 %v23
    %v29 = vsel %vm28, %v23, %v27
    %v30 = vmul.f32 %v20, %v29
    %v31 = vmul.f32 %v22, %v29
    %v32 = vsub.f32 %v15, %v30
    %v33 = vsub.f32 %v16, %v31
    %v34 = vmul.f32 %v32, %v32
    %v35 = vmul.f32 %v33, %v33
    %36 = vadd.xlane.f32.xlu0 %v34
    %v37 = vpop.xlane.xlu0 %36
    %38 = vadd.xlane.f32.xlu0 %v35
    %v39 = vpop.xlane.xlu0 %38
    %v40 = vmul.f32 %v37, 0.007874016
    %v41 = vmul.f32 %v39, 0.007874016
    %v43 = vperm.slane %v17, 0
    %v45 = vmul.f32 %v43, %v32
    %v46 = vmul.f32 %v43, %v33
    %v47 = vrsqrt.pop %v40
    %v48 = vmul.f32 %v47, %v40
    %v49 = vmul.f32 %v48, %v47
    %v50 = vmul.f32 0.5, %v49
    %v51 = vsub.f32 1.5, %v50
    %v52 = vmul.f32 %v47, %v51
    %v53 = vmul.f32 %v40, %v52
    %vm54 = vcmp.eq.f32.partialorder %v40, inf
    %v55 = vsel %vm54, %v40, %v53
    %vm56 = vcmp.eq.f32.partialorder %v40, 0.0
    %v57 = vand.u32 %v40, 2147483648
    %v58 = vsel %vm56, %v57, %v55
    %v59 = vrsqrt.pop %v41
    %v60 = vmul.f32 %v59, %v41
    %v61 = vmul.f32 %v60, %v59
    %v62 = vmul.f32 0.5, %v61
    %v63 = vsub.f32 1.5, %v62
    %v64 = vmul.f32 %v59, %v63
    %v65 = vmul.f32 %v41, %v64
    %vm66 = vcmp.eq.f32.partialorder %v41, inf
    %v67 = vsel %vm66, %v41, %v65
    %vm68 = vcmp.eq.f32.partialorder %v41, 0.0
    %v69 = vand.u32 %v41, 2147483648
    %v70 = vsel %vm68, %v69, %v67
    %v71 = vadd.f32 %v58, 1e-06
    %v72 = vadd.f32 %v70, 1e-06
    %v73 = vrcp.pop %v71
    %v74 = vmul.f32 %v71, %v73
    %v75 = vsub.f32 1.0, %v74
    %v76 = vmul.f32 %v73, %v75
    %v77 = vadd.f32 %v73, %v76
    %vm78 = vweird.f32 %v71
    %vm79 = vweird.f32 %v73
    %vm80 = vmor %vm78, %vm79
    %v81 = vsel %vm80, %v73, %v77
    %v82 = vand.u32 2147483647, %v71
    %vm83 = vcmp.eq.f32.partialorder %v82, 8.507059e+37
    %v84 = vand.u32 %v71, 2147483648
    %v85 = vor.u32 1.1754944e-38, %v84
    %v86 = vsel %vm83, %v85, %v81
    %v87 = vmul.f32 %v45, %v86
    %v88 = vrcp.pop %v72
    %v89 = vmul.f32 %v72, %v88
    %v90 = vsub.f32 1.0, %v89
    %v91 = vmul.f32 %v88, %v90
    %v92 = vadd.f32 %v88, %v91
    %vm93 = vweird.f32 %v72
    %vm94 = vweird.f32 %v88
    %vm95 = vmor %vm93, %vm94
    %v96 = vsel %vm95, %v88, %v92
    %v97 = vand.u32 2147483647, %v72
    %vm98 = vcmp.eq.f32.partialorder %v97, 8.507059e+37
    %v99 = vand.u32 %v72, 2147483648
    %v100 = vor.u32 1.1754944e-38, %v99
    %v101 = vsel %vm98, %v100, %v96
    %v102 = vmul.f32 %v46, %v101
    %v104 = vperm.slane %v18, 0
    %v106 = vadd.f32 %v87, %v104
    %v107 = vadd.f32 %v102, %v104
    %108 = vst [vmem:[#allocation2] sm:$0xff] %v106
    %109 = vst [vmem:[#allocation2 + $0x8] sm:$0xff] %v107
    // Predicated region
    $region14: #{decoder_forward.13} parent=1 // pred_check
      _
    $region15: #{decoder_forward.13} parent=1 // pred_check_branch
      %111 = sbr.rel (0) target = $region17
    $region16: #{decoder_forward.13} parent=1 // pred_region
      %113 = vsyncadd [#allocation3], 0
      %s114 = sshll.u32 [#allocation2], 4
      %s115 = int_to_ptr.vmem [resolvable:$true] %s114
      %s116 = sshll.u32 %s3, 4
      %s117 = int_to_ptr.hbm [resolvable:$true] %s116
      %122 = dma.vmem_to_hbm [thread:$0]  %s115, 256, %s117, [#allocation3], 128, 128, 8
    $region17: #{decoder_forward.13} parent=1 // pred_fallthru
      _
    // Predicated region
    $region18: #{decoder_forward.13} parent=1 // pred_check
      _
    $region19: #{decoder_forward.13} parent=1 // pred_check_branch
      %124 = sbr.rel (0) target = $region21
    $region20: #{decoder_forward.13} parent=1 // pred_region
      %126 = dma.done [#allocation3], 256
    $region21: #{decoder_forward.13} parent=1 // pred_fallthru
      _
    %127 = vsyncpa [#allocation3], 1

// kernel: decoder_forward.9
$region0: #{decoder_forward.9}
  #allocation0 [shape = 'u32[]', space=smem, size = 0x4, offset = 0x4, fixed_abs, tag = 'smem constant byte address 0x4 - core index']
  #allocation1 [shape = 'u32[72,128]{1,0:T(1,128)}', space=vmem, size = 0x9000, scoped, tag = 'internal scratch']
  %s0 = inlined_call_operand.vmem [shape: f32[16,128], index: 0, kind: input, shape index: {}]
  %s1 = inlined_call_operand.vmem [shape: f32[1,128], index: 1, kind: input, shape index: {}]
  %s2 = inlined_call_operand.vmem [shape: f32[1,128], index: 2, kind: input, shape index: {}]
  %s3 = inlined_call_operand.vmem [shape: bf16[128,256], index: 3, kind: input, shape index: {}]
  %s4 = inlined_call_operand.vmem [shape: f32[1,256], index: 4, kind: input, shape index: {}]
  %s5 = inlined_call_operand.vmem [shape: bf16[256,128], index: 5, kind: input, shape index: {}]
  %s6 = inlined_call_operand.vmem [shape: f32[1,128], index: 6, kind: input, shape index: {}]
  %s7 = inlined_call_operand.vmem [shape: f32[16,128], index: 7, kind: output, shape index: {}]
  %s8 = sld [smem:[#allocation0]]
  $region38: #{decoder_forward.9} parent=0
    _
  %s10 = ssub.s32 1, %s8
  %s11 = scalar_select 0, %s10, %s8
  // Predicated region
  $region2: #{decoder_forward.9} parent=0 // pred_check
    _
  $region3: #{decoder_forward.9} parent=0 // pred_check_branch
    %13 = sbr.rel (0) target = $region5
  $region4: #{decoder_forward.9} parent=0 // pred_region
    _
  $region5: #{decoder_forward.9} parent=0 // pred_fallthru
    _
  // Predicated region
  $region6: #{decoder_forward.9} parent=0 // pred_check
    _
  $region7: #{decoder_forward.9} parent=0 // pred_check_branch
    %15 = sbr.rel (0) target = $region9
  $region8: #{decoder_forward.9} parent=0 // pred_region
    _
  $region9: #{decoder_forward.9} parent=0 // pred_fallthru
    _
  // Predicated region
  $region10: #{decoder_forward.9} parent=0 // pred_check
    _
  $region11: #{decoder_forward.9} parent=0 // pred_check_branch
    %17 = sbr.rel (0) target = $region13
  $region12: #{decoder_forward.9} parent=0 // pred_region
    _
  $region13: #{decoder_forward.9} parent=0 // pred_fallthru
    _
  // Predicated region
  $region14: #{decoder_forward.9} parent=0 // pred_check
    _
  $region15: #{decoder_forward.9} parent=0 // pred_check_branch
    %19 = sbr.rel (0) target = $region17
  $region16: #{decoder_forward.9} parent=0 // pred_region
    _
  $region17: #{decoder_forward.9} parent=0 // pred_fallthru
    _
  // Predicated region
  $region18: #{decoder_forward.9} parent=0 // pred_check
    _
  $region19: #{decoder_forward.9} parent=0 // pred_check_branch
    %21 = sbr.rel (0) target = $region21
  $region20: #{decoder_forward.9} parent=0 // pred_region
    _
  $region21: #{decoder_forward.9} parent=0 // pred_fallthru
    _
  // Predicated region
  $region22: #{decoder_forward.9} parent=0 // pred_check
    _
  $region23: #{decoder_forward.9} parent=0 // pred_check_branch
    %23 = sbr.rel (0) target = $region25
  $region24: #{decoder_forward.9} parent=0 // pred_region
    _
  $region25: #{decoder_forward.9} parent=0 // pred_fallthru
    _
  // Predicated region
  $region26: #{decoder_forward.9} parent=0 // pred_check
    _
  $region27: #{decoder_forward.9} parent=0 // pred_check_branch
    %25 = sbr.rel (0) target = $region29
  $region28: #{decoder_forward.9} parent=0 // pred_region
    _
  $region29: #{decoder_forward.9} parent=0 // pred_fallthru
    _
  %v26 = vld [vmem:[%s0] sm:$0xff]
  %v27 = vld [vmem:[%s0 + $0x8] sm:$0xff]
  %v28 = vld [vmem:[%s1] sm:$0x1]
  %v29 = vld [vmem:[%s2] sm:$0x1]
  %30 = vadd.xlane.f32.xlu0 %v26
  %v31 = vpop.xlane.xlu0 %30
  %32 = vadd.xlane.f32.xlu0 %v27
  %v33 = vpop.xlane.xlu0 %32
  %v34 = vrcp.pop 128.0
  %v35 = vmul.f32 128.0, %v34
  %v36 = vsub.f32 1.0, %v35
  %v37 = vmul.f32 %v34, %v36
  %v38 = vadd.f32 %v34, %v37
  %vm39 = vweird.f32 %v34
  %v40 = vsel %vm39, %v34, %v38
  %v41 = vmul.f32 %v31, %v40
  %v42 = vmul.f32 %v33, %v40
  %v43 = vsub.f32 %v26, %v41
  %v44 = vsub.f32 %v27, %v42
  %v45 = vmul.f32 %v43, %v43
  %v46 = vmul.f32 %v44, %v44
  %47 = vadd.xlane.f32.xlu0 %v45
  %v48 = vpop.xlane.xlu0 %47
  %49 = vadd.xlane.f32.xlu0 %v46
  %v50 = vpop.xlane.xlu0 %49
  %v51 = vmul.f32 %v48, 0.007874016
  %v52 = vmul.f32 %v50, 0.007874016
  %v54 = vperm.slane %v28, 0
  %v56 = vmul.f32 %v54, %v43
  %v57 = vmul.f32 %v54, %v44
  %v58 = vrsqrt.pop %v51
  %v59 = vmul.f32 %v58, %v51
  %v60 = vmul.f32 %v59, %v58
  %v61 = vmul.f32 0.5, %v60
  %v62 = vsub.f32 1.5, %v61
  %v63 = vmul.f32 %v58, %v62
  %v64 = vmul.f32 %v51, %v63
  %vm65 = vcmp.eq.f32.partialorder %v51, inf
  %v66 = vsel %vm65, %v51, %v64
  %vm67 = vcmp.eq.f32.partialorder %v51, 0.0
  %v68 = vand.u32 %v51, 2147483648
  %v69 = vsel %vm67, %v68, %v66
  %v70 = vrsqrt.pop %v52
  %v71 = vmul.f32 %v70, %v52
  %v72 = vmul.f32 %v71, %v70
  %v73 = vmul.f32 0.5, %v72
  %v74 = vsub.f32 1.5, %v73
  %v75 = vmul.f32 %v70, %v74
  %v76 = vmul.f32 %v52, %v75
  %vm77 = vcmp.eq.f32.partialorder %v52, inf
  %v78 = vsel %vm77, %v52, %v76
  %vm79 = vcmp.eq.f32.partialorder %v52, 0.0
  %v80 = vand.u32 %v52, 2147483648
  %v81 = vsel %vm79, %v80, %v78
  %v82 = vadd.f32 %v69, 1e-06
  %v83 = vadd.f32 %v81, 1e-06
  %v84 = vrcp.pop %v82
  %v85 = vmul.f32 %v82, %v84
  %v86 = vsub.f32 1.0, %v85
  %v87 = vmul.f32 %v84, %v86
  %v88 = vadd.f32 %v84, %v87
  %vm89 = vweird.f32 %v82
  %vm90 = vweird.f32 %v84
  %vm91 = vmor %vm89, %vm90
  %v92 = vsel %vm91, %v84, %v88
  %v93 = vand.u32 2147483647, %v82
  %vm94 = vcmp.eq.f32.partialorder %v93, 8.507059e+37
  %v95 = vand.u32 %v82, 2147483648
  %v96 = vor.u32 1.1754944e-38, %v95
  %v97 = vsel %vm94, %v96, %v92
  %v98 = vmul.f32 %v56, %v97
  %v99 = vrcp.pop %v83
  %v100 = vmul.f32 %v83, %v99
  %v101 = vsub.f32 1.0, %v100
  %v102 = vmul.f32 %v99, %v101
  %v103 = vadd.f32 %v99, %v102
  %vm104 = vweird.f32 %v83
  %vm105 = vweird.f32 %v99
  %vm106 = vmor %vm104, %vm105
  %v107 = vsel %vm106, %v99, %v103
  %v108 = vand.u32 2147483647, %v83
  %vm109 = vcmp.eq.f32.partialorder %v108, 8.507059e+37
  %v110 = vand.u32 %v83, 2147483648
  %v111 = vor.u32 1.1754944e-38, %v110
  %v112 = vsel %vm109, %v111, %v107
  %v113 = vmul.f32 %v57, %v112
  %v115 = vperm.slane %v29, 0
  %v117 = vadd.f32 %v98, %v115
  %v118 = vadd.f32 %v113, %v115
  %v119 = vpack.c.bf16 %v118, %v117
  %v120 = vld [vmem:[%s3] sm:$0xff]
  %v121 = vld [vmem:[%s3 + $0x8] sm:$0xff]
  %v122 = vld [vmem:[%s3 + $0x10] sm:$0xff]
  %v123 = vld [vmem:[%s3 + $0x18] sm:$0xff]
  %v124 = vld [vmem:[%s3 + $0x20] sm:$0xff]
  %v125 = vld [vmem:[%s3 + $0x28] sm:$0xff]
  %v126 = vld [vmem:[%s3 + $0x30] sm:$0xff]
  %v127 = vld [vmem:[%s3 + $0x38] sm:$0xff]
  %v128 = vld [vmem:[%s3 + $0x40] sm:$0xff]
  %v129 = vld [vmem:[%s3 + $0x48] sm:$0xff]
  %v130 = vld [vmem:[%s3 + $0x50] sm:$0xff]
  %v131 = vld [vmem:[%s3 + $0x58] sm:$0xff]
  %v132 = vld [vmem:[%s3 + $0x60] sm:$0xff]
  %v133 = vld [vmem:[%s3 + $0x68] sm:$0xff]
  %v134 = vld [vmem:[%s3 + $0x70] sm:$0xff]
  %v135 = vld [vmem:[%s3 + $0x78] sm:$0xff]
  %v136 = vld [vmem:[%s4] sm:$0x3]
  %v138 = vperm.slane %v136, 0
  %v139 = vperm.slane %v136, 1
  %v158 = vunpack.c.l.b16 %v120
  %v159 = vunpack.c.h.b16 %v120
  %v160 = vunpack.c.l.b16 %v121
  %v161 = vunpack.c.h.b16 %v121
  %v162 = vunpack.c.l.b16 %v122
  %v163 = vunpack.c.h.b16 %v122
  %v164 = vunpack.c.l.b16 %v123
  %v165 = vunpack.c.h.b16 %v123
  %v166 = vunpack.c.l.b16 %v124
  %v167 = vunpack.c.h.b16 %v124
  %v168 = vunpack.c.l.b16 %v125
  %v169 = vunpack.c.h.b16 %v125
  %v170 = vunpack.c.l.b16 %v126
  %v171 = vunpack.c.h.b16 %v126
  %v172 = vunpack.c.l.b16 %v127
  %v173 = vunpack.c.h.b16 %v127
  %v174 = vunpack.c.l.b16 %v128
  %v175 = vunpack.c.h.b16 %v128
  %v176 = vunpack.c.l.b16 %v129
  %v177 = vunpack.c.h.b16 %v129
  %v178 = vunpack.c.l.b16 %v130
  %v179 = vunpack.c.h.b16 %v130
  %v180 = vunpack.c.l.b16 %v131
  %v181 = vunpack.c.h.b16 %v131
  %v182 = vunpack.c.l.b16 %v132
  %v183 = vunpack.c.h.b16 %v132
  %v184 = vunpack.c.l.b16 %v133
  %v185 = vunpack.c.h.b16 %v133
  %v186 = vunpack.c.l.b16 %v134
  %v187 = vunpack.c.h.b16 %v134
  %v188 = vunpack.c.l.b16 %v135
  %v189 = vunpack.c.h.b16 %v135
  %v190 = vpack.c.b16 %v160, %v158
  %v191 = vpack.c.b16 %v161, %v159
  %v192 = vpack.c.b16 %v164, %v162
  %v193 = vpack.c.b16 %v165, %v163
  %v194 = vpack.c.b16 %v168, %v166
  %v195 = vpack.c.b16 %v169, %v167
  %v196 = vpack.c.b16 %v172, %v170
  %v197 = vpack.c.b16 %v173, %v171
  %v198 = vpack.c.b16 %v176, %v174
  %v199 = vpack.c.b16 %v177, %v175
  %v200 = vpack.c.b16 %v180, %v178
  %v201 = vpack.c.b16 %v181, %v179
  %v202 = vpack.c.b16 %v184, %v182
  %v203 = vpack.c.b16 %v185, %v183
  %v204 = vpack.c.b16 %v188, %v186
  %v205 = vpack.c.b16 %v189, %v187
  %222 = vmatpush.bf16.msra.mxu0 %v204
  %223 = vmatpush.bf16.msra.mxu0 %v202
  %224 = vmatpush.bf16.msra.mxu0 %v200
  %225 = vmatpush.bf16.msra.mxu0 %v198
  %226 = vmatpush.bf16.msra.mxu0 %v196
  %227 = vmatpush.bf16.msra.mxu0 %v194
  %228 = vmatpush.bf16.msra.mxu0 %v192
  %229 = vmatpush.bf16.msra.mxu0 %v190
  %230 = vmatmul.bf16.gmra.mxu0 %v119
  %v231 = vpop.f32.mrf.mxu0
  %v232 = vadd.f32 %v138, %v231
  %v233 = vpop.f32.mrf.mxu0
  %v234 = vadd.f32 %v138, %v233
  %235 = vdwg.mxu0
  %236 = vmatpush.bf16.msra.mxu0 %v205
  %237 = vmatpush.bf16.msra.mxu0 %v203
  %238 = vmatpush.bf16.msra.mxu0 %v201
  %239 = vmatpush.bf16.msra.mxu0 %v199
  %240 = vmatpush.bf16.msra.mxu0 %v197
  %241 = vmatpush.bf16.msra.mxu0 %v195
  %242 = vmatpush.bf16.msra.mxu0 %v193
  %243 = vmatpush.bf16.msra.mxu0 %v191
  %244 = vmatmul.bf16.gmra.mxu0 %v119
  %v245 = vpop.f32.mrf.mxu0
  %v246 = vadd.f32 %v139, %v245
  %v247 = vpop.f32.mrf.mxu0
  %v248 = vadd.f32 %v139, %v247
  %249 = vdwg.mxu0
  %v250 = vmax.f32 %v232, 0.0
  %v251 = vmax.f32 %v246, 0.0
  %v252 = vmax.f32 %v234, 0.0
  %v253 = vmax.f32 %v248, 0.0
  %v254 = vpack.c.bf16 %v252, %v250
  %v255 = vpack.c.bf16 %v253, %v251
  %v256 = vld [vmem:[%s5] sm:$0xf]
  %v257 = vld [vmem:[%s5 + $0x4] sm:$0xf]
  %v258 = vld [vmem:[%s5 + $0x8] sm:$0xf]
  %v259 = vld [vmem:[%s5 + $0xc] sm:$0xf]
  %v260 = vld [vmem:[%s5 + $0x10] sm:$0xf]
  %v261 = vld [vmem:[%s5 + $0x14] sm:$0xf]
  %v262 = vld [vmem:[%s5 + $0x18] sm:$0xf]
  %v263 = vld [vmem:[%s5 + $0x1c] sm:$0xf]
  %v264 = vld [vmem:[%s5 + $0x20] sm:$0xf]
  %v265 = vld [vmem:[%s5 + $0x24] sm:$0xf]
  %v266 = vld [vmem:[%s5 + $0x28] sm:$0xf]
  %v267 = vld [vmem:[%s5 + $0x2c] sm:$0xf]
  %v268 = vld [vmem:[%s5 + $0x30] sm:$0xf]
  %v269 = vld [vmem:[%s5 + $0x34] sm:$0xf]
  %v270 = vld [vmem:[%s5 + $0x38] sm:$0xf]
  %v271 = vld [vmem:[%s5 + $0x3c] sm:$0xf]
  %v272 = vld [vmem:[%s5 + $0x40] sm:$0xf]
  %v273 = vld [vmem:[%s5 + $0x44] sm:$0xf]
  %v274 = vld [vmem:[%s5 + $0x48] sm:$0xf]
  %v275 = vld [vmem:[%s5 + $0x4c] sm:$0xf]
  %v276 = vld [vmem:[%s5 + $0x50] sm:$0xf]
  %v277 = vld [vmem:[%s5 + $0x54] sm:$0xf]
  %v278 = vld [vmem:[%s5 + $0x58] sm:$0xf]
  %v279 = vld [vmem:[%s5 + $0x5c] sm:$0xf]
  %v280 = vld [vmem:[%s5 + $0x60] sm:$0xf]
  %v281 = vld [vmem:[%s5 + $0x64] sm:$0xf]
  %v282 = vld [vmem:[%s5 + $0x68] sm:$0xf]
  %v283 = vld [vmem:[%s5 + $0x6c] sm:$0xf]
  %v284 = vld [vmem:[%s5 + $0x70] sm:$0xf]
  %v285 = vld [vmem:[%s5 + $0x74] sm:$0xf]
  %v286 = vld [vmem:[%s5 + $0x78] sm:$0xf]
  %v287 = vld [vmem:[%s5 + $0x7c] sm:$0xf]
  %v288 = vld [vmem:[%s6] sm:$0x1]
  %v290 = vperm.slane %v288, 0
  %v324 = vunpack.c.l.b16 %v256
  %v325 = vunpack.c.l.b16 %v257
  %v326 = vunpack.c.l.b16 %v258
  %v327 = vunpack.c.l.b16 %v259
  %v328 = vunpack.c.l.b16 %v260
  %v329 = vunpack.c.l.b16 %v261
  %v330 = vunpack.c.l.b16 %v262
  %v331 = vunpack.c.l.b16 %v263
  %v332 = vunpack.c.l.b16 %v264
  %v333 = vunpack.c.l.b16 %v265
  %v334 = vunpack.c.l.b16 %v266
  %v335 = vunpack.c.l.b16 %v267
  %v336 = vunpack.c.l.b16 %v268
  %v337 = vunpack.c.l.b16 %v269
  %v338 = vunpack.c.l.b16 %v270
  %v339 = vunpack.c.l.b16 %v271
  %v340 = vunpack.c.l.b16 %v272
  %v341 = vunpack.c.l.b16 %v273
  %v342 = vunpack.c.l.b16 %v274
  %v343 = vunpack.c.l.b16 %v275
  %v344 = vunpack.c.l.b16 %v276
  %v345 = vunpack.c.l.b16 %v277
  %v346 = vunpack.c.l.b16 %v278
  %v347 = vunpack.c.l.b16 %v279
  %v348 = vunpack.c.l.b16 %v280
  %v349 = vunpack.c.l.b16 %v281
  %v350 = vunpack.c.l.b16 %v282
  %v351 = vunpack.c.l.b16 %v283
  %v352 = vunpack.c.l.b16 %v284
  %v353 = vunpack.c.l.b16 %v285
  %v354 = vunpack.c.l.b16 %v286
  %v355 = vunpack.c.l.b16 %v287
  %v356 = vpack.c.b16 %v325, %v324
  %v357 = vpack.c.b16 %v327, %v326
  %v358 = vpack.c.b16 %v329, %v328
  %v359 = vpack.c.b16 %v331, %v330
  %v360 = vpack.c.b16 %v333, %v332
  %v361 = vpack.c.b16 %v335, %v334
  %v362 = vpack.c.b16 %v337, %v336
  %v363 = vpack.c.b16 %v339, %v338
  %v364 = vpack.c.b16 %v341, %v340
  %v365 = vpack.c.b16 %v343, %v342
  %v366 = vpack.c.b16 %v345, %v344
  %v367 = vpack.c.b16 %v347, %v346
  %v368 = vpack.c.b16 %v349, %v348
  %v369 = vpack.c.b16 %v351, %v350
  %v370 = vpack.c.b16 %v353, %v352
  %v371 = vpack.c.b16 %v355, %v354
  %388 = vmatpush.bf16.msra.mxu0 %v363
  %389 = vmatpush.bf16.msra.mxu0 %v362
  %390 = vmatpush.bf16.msra.mxu0 %v361
  %391 = vmatpush.bf16.msra.mxu0 %v360
  %392 = vmatpush.bf16.msra.mxu0 %v359
  %393 = vmatpush.bf16.msra.mxu0 %v358
  %394 = vmatpush.bf16.msra.mxu0 %v357
  %395 = vmatpush.bf16.msra.mxu0 %v356
  %396 = vmatmul.bf16.gmra.mxu0 %v254
  %v397 = vpop.f32.mrf.mxu0
  %v398 = vadd.f32 %v290, %v397
  %v399 = vpop.f32.mrf.mxu0
  %v400 = vadd.f32 %v290, %v399
  %401 = vdwg.mxu0
  %402 = vmatpush.bf16.msra.mxu0 %v371
  %403 = vmatpush.bf16.msra.mxu0 %v370
  %404 = vmatpush.bf16.msra.mxu0 %v369
  %405 = vmatpush.bf16.msra.mxu0 %v368
  %406 = vmatpush.bf16.msra.mxu0 %v367
  %407 = vmatpush.bf16.msra.mxu0 %v366
  %408 = vmatpush.bf16.msra.mxu0 %v365
  %409 = vmatpush.bf16.msra.mxu0 %v364
  %410 = vmatmul.bf16.gmra.mxu0 %v255
  %v411 = vpop.f32.mrf.mxu0
  %v412 = vadd.f32 %v398, %v411
  %v413 = vpop.f32.mrf.mxu0
  %v414 = vadd.f32 %v400, %v413
  %415 = vdwg.mxu0
  %v416 = vadd.f32 %v26, %v412
  %v417 = vadd.f32 %v27, %v414
  %418 = vst [vmem:[%s7] sm:$0xff] %v416
  %419 = vst [vmem:[%s7 + $0x8] sm:$0xff] %v417
  // Predicated region
  $region30: #{decoder_forward.9} parent=0 // pred_check
    _
  $region31: #{decoder_forward.9} parent=0 // pred_check_branch
    %421 = sbr.rel (0) target = $region33
  $region32: #{decoder_forward.9} parent=0 // pred_region
    _
  $region33: #{decoder_forward.9} parent=0 // pred_fallthru
    _
  // Predicated region
  $region34: #{decoder_forward.9} parent=0 // pred_check
    _
  $region35: #{decoder_forward.9} parent=0 // pred_check_branch
    %423 = sbr.rel (0) target = $region37
  $region36: #{decoder_forward.9} parent=0 // pred_region
    _
  $region37: #{decoder_forward.9} parent=0 // pred_fallthru
    _

// kernel: decoder_forward.8
$region0: #{decoder_forward.8}
  #allocation0 [shape = 'u32[]', space=smem, size = 0x4, offset = 0x4, fixed_abs, tag = 'smem constant byte address 0x4 - core index']
  #allocation1 [shape = 'u32[72,128]{1,0:T(1,128)}', space=vmem, size = 0x9000, scoped, tag = 'internal scratch']
  #allocation2 [shape = 'bf16[8,128]{1,0:T(8,128)(2,1)}', space=vmem, size = 0x800, scoped, tag = 'scratch operand']
  %s0 = inlined_call_operand.vmem [shape: f32[2,8,128], index: 0, kind: input, shape index: {}]
  %s1 = inlined_call_operand.vmem [shape: f32[2,16,128], index: 1, kind: input, shape index: {}]
  %s2 = inlined_call_operand.vmem [shape: s32[2,1,16], index: 2, kind: input, shape index: {}]
  %s3 = inlined_call_operand.vmem [shape: f32[1,128], index: 3, kind: input, shape index: {}]
  %s4 = inlined_call_operand.vmem [shape: f32[1,128], index: 4, kind: input, shape index: {}]
  %s5 = inlined_call_operand.vmem [shape: bf16[4,128,32], index: 5, kind: input, shape index: {}]
  %s6 = inlined_call_operand.vmem [shape: f32[4,1,32], index: 6, kind: input, shape index: {}]
  %s7 = inlined_call_operand.vmem [shape: bf16[128,128], index: 7, kind: input, shape index: {}]
  %s8 = inlined_call_operand.vmem [shape: f32[1,128], index: 8, kind: input, shape index: {}]
  %s9 = inlined_call_operand.vmem [shape: bf16[4,128,32], index: 9, kind: input, shape index: {}]
  %s10 = inlined_call_operand.vmem [shape: f32[4,1,32], index: 10, kind: input, shape index: {}]
  %s11 = inlined_call_operand.vmem [shape: bf16[128,128], index: 11, kind: input, shape index: {}]
  %s12 = inlined_call_operand.vmem [shape: f32[1,128], index: 12, kind: input, shape index: {}]
  %s13 = inlined_call_operand.vmem [shape: f32[2,8,128], index: 13, kind: output, shape index: {}]
  %s14 = sld [smem:[#allocation0]]
  $region85: #{decoder_forward.8} parent=0
    _
  %s16 = ssub.s32 1, %s14
  %s17 = scalar_select 0, %s16, %s14
  loop: start=0, step=1, limit=4
  $region2: #{decoder_forward.8} parent=0 // loop_pre_header
    _
  $region3: #{decoder_forward.8} parent=0 // loop_header
    %s19 = sphi 0, %s23
    %p20 = scmp.ge.s32.totalorder %s19, 4
    %s26 = sphi 0, %s38
    %s27 = sphi 0, %s34
    %s28 = sphi 0, %s26
    %s29 = sphi 0, %s27
    %s30 = sphi 0, %s28
    %s31 = sphi 0, %s29
    %s43 = sphi 0, %s45
    %s46 = sphi 0, %s43
    %s47 = sphi 0, %s46
    %s63 = sphi 0, %s47
    %s69 = sphi 0, %s71
    %s72 = sphi 0, %s69
    %s73 = sphi 0, %s72
    %s89 = sphi 0, %s73
    %s95 = sphi 0, %s97
    %s98 = sphi 0, %s95
    %s99 = sphi 0, %s98
    %s115 = sphi 0, %s99
    %s119 = sphi 0, %s119
    %s121 = sphi 0, %s119
    %s122 = sphi 0, %s121
    %s136 = sphi 0, %s122
    %s140 = sphi 0, %s140
    %s142 = sphi 0, %s140
    %s143 = sphi 0, %s142
    %s157 = sphi 0, %s143
    %s161 = sphi 0, %s161
    %s163 = sphi 0, %s161
    %s164 = sphi 0, %s163
    %s178 = sphi 0, %s164
    %s182 = sphi 0, %s182
    %s184 = sphi 0, %s182
    %s185 = sphi 0, %s184
    %s199 = sphi 0, %s185
    %s203 = sphi 0, %s203
    %s205 = sphi 0, %s203
    %s206 = sphi 0, %s205
    %s220 = sphi 0, %s206
    %s224 = sphi 0, %s224
    %s226 = sphi 0, %s224
    %s227 = sphi 0, %s226
    %s241 = sphi 0, %s227
    %s245 = sphi 0, %s245
    %s247 = sphi 0, %s245
    %s248 = sphi 0, %s247
    %s262 = sphi 0, %s248
    %s266 = sphi 0, %s266
    %s268 = sphi 0, %s266
    %s269 = sphi 0, %s268
    %s283 = sphi 0, %s269
    %s287 = sphi 0, %s287
    %s289 = sphi 0, %s287
    %s290 = sphi 0, %s289
    %s304 = sphi 0, %s290
    %s308 = sphi 0, %s308
    %s310 = sphi 0, %s308
    %s311 = sphi 0, %s310
    %s325 = sphi 0, %s311
    %s333 = sphi 0, %s335
    %s336 = sphi 0, %s333
    %s337 = sphi 0, %s336
    %s353 = sphi 0, %s337
  $region4: #{decoder_forward.8} parent=0 // loop_header_branch
    %22 = sbr.rel (%p20) target = $region8
  $region5: #{decoder_forward.8} parent=0 // loop_body
    %s24 = ssub.s32 %s19, 1
    %s25 = ssub.s32 %s19, 2
    %s32 = sadd.s32 1, %s27
    %p33 = scmp.ge.s32.totalorder %s32, 1
    %s34 = scalar_select %p33, 0, %s32
    %s35 = sadd.s32 1, %s26
    %s36 = scalar_select %p33, %s35, %s26
    %p37 = scmp.ge.s32.totalorder %s36, 2
    %s38 = scalar_select %p37, 0, %s36
    %s39 = ssub.s32 %s26, %s38
    %s40 = ssub.s32 %s27, %s34
    %s41 = sor.u32 %s39, %s40
    %p42 = scmp.eq.s32.totalorder %s41, 0
    %s44 = sadd.s32 %s43, 1
    %s45 = scalar_select %p42, %s43, %s44
    %p48 = pneg %p42
    %p49 = scmp.eq.s32.totalorder %s19, 1
    %p50 = por %p48, %p49
    %p51 = scmp.ne.s32.totalorder %s43, %s46
    %p52 = scmp.eq.s32.totalorder %s19, 0
    %p53 = por %p51, %p52
    %p54 = scmp.ne.s32.totalorder %s43, %s46
    %p55 = scmp.eq.s32.totalorder %s24, 1
    %p56 = por %p54, %p55
    %p57 = scmp.ne.s32.totalorder %s46, %s47
    %p58 = scmp.eq.s32.totalorder %s24, 0
    %p59 = por %p57, %p58
    %p60 = scmp.ne.s32.totalorder %s46, %s47
    %p61 = scmp.eq.s32.totalorder %s25, 1
    %p62 = por %p60, %p61
    %p64 = scmp.ne.s32.totalorder %s47, %s63
    %p65 = scmp.eq.s32.totalorder %s25, 0
    %p66 = por %p64, %p65
    %s67 = ssub.s32 %s26, %s38
    %p68 = scmp.eq.s32.totalorder %s67, 0
    %s70 = sadd.s32 %s69, 1
    %s71 = scalar_select %p68, %s69, %s70
    %p74 = pneg %p68
    %p75 = scmp.eq.s32.totalorder %s19, 1
    %p76 = por %p74, %p75
    %p77 = scmp.ne.s32.totalorder %s69, %s72
    %p78 = scmp.eq.s32.totalorder %s19, 0
    %p79 = por %p77, %p78
    %p80 = scmp.ne.s32.totalorder %s69, %s72
    %p81 = scmp.eq.s32.totalorder %s24, 1
    %p82 = por %p80, %p81
    %p83 = scmp.ne.s32.totalorder %s72, %s73
    %p84 = scmp.eq.s32.totalorder %s24, 0
    %p85 = por %p83, %p84
    %p86 = scmp.ne.s32.totalorder %s72, %s73
    %p87 = scmp.eq.s32.totalorder %s25, 1
    %p88 = por %p86, %p87
    %p90 = scmp.ne.s32.totalorder %s73, %s89
    %p91 = scmp.eq.s32.totalorder %s25, 0
    %p92 = por %p90, %p91
    %s93 = ssub.s32 %s26, %s38
    %p94 = scmp.eq.s32.totalorder %s93, 0
    %s96 = sadd.s32 %s95, 1
    %s97 = scalar_select %p94, %s95, %s96
    %p100 = pneg %p94
    %p101 = scmp.eq.s32.totalorder %s19, 1
    %p102 = por %p100, %p101
    %p103 = scmp.ne.s32.totalorder %s95, %s98
    %p104 = scmp.eq.s32.totalorder %s19, 0
    %p105 = por %p103, %p104
    %p106 = scmp.ne.s32.totalorder %s95, %s98
    %p107 = scmp.eq.s32.totalorder %s24, 1
    %p108 = por %p106, %p107
    %p109 = scmp.ne.s32.totalorder %s98, %s99
    %p110 = scmp.eq.s32.totalorder %s24, 0
    %p111 = por %p109, %p110
    %p112 = scmp.ne.s32.totalorder %s98, %s99
    %p113 = scmp.eq.s32.totalorder %s25, 1
    %p114 = por %p112, %p113
    %p116 = scmp.ne.s32.totalorder %s99, %s115
    %p117 = scmp.eq.s32.totalorder %s25, 0
    %p118 = por %p116, %p117
    %s120 = sadd.s32 %s119, 1
    %p123 = scmp.eq.s32.totalorder %s19, 1
    %p124 = scmp.ne.s32.totalorder %s119, %s121
    %p125 = scmp.eq.s32.totalorder %s19, 0
    %p126 = por %p124, %p125
    %p127 = scmp.ne.s32.totalorder %s119, %s121
    %p128 = scmp.eq.s32.totalorder %s24, 1
    %p129 = por %p127, %p128
    %p130 = scmp.ne.s32.totalorder %s121, %s122
    %p131 = scmp.eq.s32.totalorder %s24, 0
    %p132 = por %p130, %p131
    %p133 = scmp.ne.s32.totalorder %s121, %s122
    %p134 = scmp.eq.s32.totalorder %s25, 1
    %p135 = por %p133, %p134
    %p137 = scmp.ne.s32.totalorder %s122, %s136
    %p138 = scmp.eq.s32.totalorder %s25, 0
    %p139 = por %p137, %p138
    %s141 = sadd.s32 %s140, 1
    %p144 = scmp.eq.s32.totalorder %s19, 1
    %p145 = scmp.ne.s32.totalorder %s140, %s142
    %p146 = scmp.eq.s32.totalorder %s19, 0
    %p147 = por %p145, %p146
    %p148 = scmp.ne.s32.totalorder %s140, %s142
    %p149 = scmp.eq.s32.totalorder %s24, 1
    %p150 = por %p148, %p149
    %p151 = scmp.ne.s32.totalorder %s142, %s143
    %p152 = scmp.eq.s32.totalorder %s24, 0
    %p153 = por %p151, %p152
    %p154 = scmp.ne.s32.totalorder %s142, %s143
    %p155 = scmp.eq.s32.totalorder %s25, 1
    %p156 = por %p154, %p155
    %p158 = scmp.ne.s32.totalorder %s143, %s157
    %p159 = scmp.eq.s32.totalorder %s25, 0
    %p160 = por %p158, %p159
    %s162 = sadd.s32 %s161, 1
    %p165 = scmp.eq.s32.totalorder %s19, 1
    %p166 = scmp.ne.s32.totalorder %s161, %s163
    %p167 = scmp.eq.s32.totalorder %s19, 0
    %p168 = por %p166, %p167
    %p169 = scmp.ne.s32.totalorder %s161, %s163
    %p170 = scmp.eq.s32.totalorder %s24, 1
    %p171 = por %p169, %p170
    %p172 = scmp.ne.s32.totalorder %s163, %s164
    %p173 = scmp.eq.s32.totalorder %s24, 0
    %p174 = por %p172, %p173
    %p175 = scmp.ne.s32.totalorder %s163, %s164
    %p176 = scmp.eq.s32.totalorder %s25, 1
    %p177 = por %p175, %p176
    %p179 = scmp.ne.s32.totalorder %s164, %s178
    %p180 = scmp.eq.s32.totalorder %s25, 0
    %p181 = por %p179, %p180
    %s183 = sadd.s32 %s182, 1
    %p186 = scmp.eq.s32.totalorder %s19, 1
    %p187 = scmp.ne.s32.totalorder %s182, %s184
    %p188 = scmp.eq.s32.totalorder %s19, 0
    %p189 = por %p187, %p188
    %p190 = scmp.ne.s32.totalorder %s182, %s184
    %p191 = scmp.eq.s32.totalorder %s24, 1
    %p192 = por %p190, %p191
    %p193 = scmp.ne.s32.totalorder %s184, %s185
    %p194 = scmp.eq.s32.totalorder %s24, 0
    %p195 = por %p193, %p194
    %p196 = scmp.ne.s32.totalorder %s184, %s185
    %p197 = scmp.eq.s32.totalorder %s25, 1
    %p198 = por %p196, %p197
    %p200 = scmp.ne.s32.totalorder %s185, %s199
    %p201 = scmp.eq.s32.totalorder %s25, 0
    %p202 = por %p200, %p201
    %s204 = sadd.s32 %s203, 1
    %p207 = scmp.eq.s32.totalorder %s19, 1
    %p208 = scmp.ne.s32.totalorder %s203, %s205
    %p209 = scmp.eq.s32.totalorder %s19, 0
    %p210 = por %p208, %p209
    %p211 = scmp.ne.s32.totalorder %s203, %s205
    %p212 = scmp.eq.s32.totalorder %s24, 1
    %p213 = por %p211, %p212
    %p214 = scmp.ne.s32.totalorder %s205, %s206
    %p215 = scmp.eq.s32.totalorder %s24, 0
    %p216 = por %p214, %p215
    %p217 = scmp.ne.s32.totalorder %s205, %s206
    %p218 = scmp.eq.s32.totalorder %s25, 1
    %p219 = por %p217, %p218
    %p221 = scmp.ne.s32.totalorder %s206, %s220
    %p222 = scmp.eq.s32.totalorder %s25, 0
    %p223 = por %p221, %p222
    %s225 = sadd.s32 %s224, 1
    %p228 = scmp.eq.s32.totalorder %s19, 1
    %p229 = scmp.ne.s32.totalorder %s224, %s226
    %p230 = scmp.eq.s32.totalorder %s19, 0
    %p231 = por %p229, %p230
    %p232 = scmp.ne.s32.totalorder %s224, %s226
    %p233 = scmp.eq.s32.totalorder %s24, 1
    %p234 = por %p232, %p233
    %p235 = scmp.ne.s32.totalorder %s226, %s227
    %p236 = scmp.eq.s32.totalorder %s24, 0
    %p237 = por %p235, %p236
    %p238 = scmp.ne.s32.totalorder %s226, %s227
    %p239 = scmp.eq.s32.totalorder %s25, 1
    %p240 = por %p238, %p239
    %p242 = scmp.ne.s32.totalorder %s227, %s241
    %p243 = scmp.eq.s32.totalorder %s25, 0
    %p244 = por %p242, %p243
    %s246 = sadd.s32 %s245, 1
    %p249 = scmp.eq.s32.totalorder %s19, 1
    %p250 = scmp.ne.s32.totalorder %s245, %s247
    %p251 = scmp.eq.s32.totalorder %s19, 0
    %p252 = por %p250, %p251
    %p253 = scmp.ne.s32.totalorder %s245, %s247
    %p254 = scmp.eq.s32.totalorder %s24, 1
    %p255 = por %p253, %p254
    %p256 = scmp.ne.s32.totalorder %s247, %s248
    %p257 = scmp.eq.s32.totalorder %s24, 0
    %p258 = por %p256, %p257
    %p259 = scmp.ne.s32.totalorder %s247, %s248
    %p260 = scmp.eq.s32.totalorder %s25, 1
    %p261 = por %p259, %p260
    %p263 = scmp.ne.s32.totalorder %s248, %s262
    %p264 = scmp.eq.s32.totalorder %s25, 0
    %p265 = por %p263, %p264
    %s267 = sadd.s32 %s266, 1
    %p270 = scmp.eq.s32.totalorder %s19, 1
    %p271 = scmp.ne.s32.totalorder %s266, %s268
    %p272 = scmp.eq.s32.totalorder %s19, 0
    %p273 = por %p271, %p272
    %p274 = scmp.ne.s32.totalorder %s266, %s268
    %p275 = scmp.eq.s32.totalorder %s24, 1
    %p276 = por %p274, %p275
    %p277 = scmp.ne.s32.totalorder %s268, %s269
    %p278 = scmp.eq.s32.totalorder %s24, 0
    %p279 = por %p277, %p278
    %p280 = scmp.ne.s32.totalorder %s268, %s269
    %p281 = scmp.eq.s32.totalorder %s25, 1
    %p282 = por %p280, %p281
    %p284 = scmp.ne.s32.totalorder %s269, %s283
    %p285 = scmp.eq.s32.totalorder %s25, 0
    %p286 = por %p284, %p285
    %s288 = sadd.s32 %s287, 1
    %p291 = scmp.eq.s32.totalorder %s19, 1
    %p292 = scmp.ne.s32.totalorder %s287, %s289
    %p293 = scmp.eq.s32.totalorder %s19, 0
    %p294 = por %p292, %p293
    %p295 = scmp.ne.s32.totalorder %s287, %s289
    %p296 = scmp.eq.s32.totalorder %s24, 1
    %p297 = por %p295, %p296
    %p298 = scmp.ne.s32.totalorder %s289, %s290
    %p299 = scmp.eq.s32.totalorder %s24, 0
    %p300 = por %p298, %p299
    %p301 = scmp.ne.s32.totalorder %s289, %s290
    %p302 = scmp.eq.s32.totalorder %s25, 1
    %p303 = por %p301, %p302
    %p305 = scmp.ne.s32.totalorder %s290, %s304
    %p306 = scmp.eq.s32.totalorder %s25, 0
    %p307 = por %p305, %p306
    %s309 = sadd.s32 %s308, 1
    %p312 = scmp.eq.s32.totalorder %s19, 1
    %p313 = scmp.ne.s32.totalorder %s308, %s310
    %p314 = scmp.eq.s32.totalorder %s19, 0
    %p315 = por %p313, %p314
    %p316 = scmp.ne.s32.totalorder %s308, %s310
    %p317 = scmp.eq.s32.totalorder %s24, 1
    %p318 = por %p316, %p317
    %p319 = scmp.ne.s32.totalorder %s310, %s311
    %p320 = scmp.eq.s32.totalorder %s24, 0
    %p321 = por %p319, %p320
    %p322 = scmp.ne.s32.totalorder %s310, %s311
    %p323 = scmp.eq.s32.totalorder %s25, 1
    %p324 = por %p322, %p323
    %p326 = scmp.ne.s32.totalorder %s311, %s325
    %p327 = scmp.eq.s32.totalorder %s25, 0
    %p328 = por %p326, %p327
    %s329 = ssub.s32 %s26, %s38
    %s330 = ssub.s32 %s27, %s34
    %s331 = sor.u32 %s329, %s330
    %p332 = scmp.eq.s32.totalorder %s331, 0
    %s334 = sadd.s32 %s333, 1
    %s335 = scalar_select %p332, %s333, %s334
    %p338 = pneg %p332
    %p339 = scmp.eq.s32.totalorder %s19, 1
    %p340 = por %p338, %p339
    %p341 = scmp.ne.s32.totalorder %s333, %s336
    %p342 = scmp.eq.s32.totalorder %s19, 0
    %p343 = por %p341, %p342
    %p344 = scmp.ne.s32.totalorder %s333, %s336
    %p345 = scmp.eq.s32.totalorder %s24, 1
    %p346 = por %p344, %p345
    %p347 = scmp.ne.s32.totalorder %s336, %s337
    %p348 = scmp.eq.s32.totalorder %s24, 0
    %p349 = por %p347, %p348
    %p350 = scmp.ne.s32.totalorder %s336, %s337
    %p351 = scmp.eq.s32.totalorder %s25, 1
    %p352 = por %p350, %p351
    %p354 = scmp.ne.s32.totalorder %s337, %s353
    %p355 = scmp.eq.s32.totalorder %s25, 0
    %p356 = por %p354, %p355
    %p357 = scmp.le.s32.totalorder 1, %s19
    %p358 = scmp.lt.s32.totalorder %s19, 3
    %p359 = pnand %p357, %p358
    %p360 = pneg %p359
    // Predicated region
    $region9: #{decoder_forward.8} parent=5 // pred_check
      _
    $region10: #{decoder_forward.8} parent=5 // pred_check_branch
      %362 = sbr.rel (%p359) target = $region12
    $region11: #{decoder_forward.8} parent=5 // pred_region
      %s363 = ssub.s32 %s19, 1
      // Predicated region
      $region13: #{decoder_forward.8} parent=11 // pred_check
        %p364 = pneg %p132
      $region14: #{decoder_forward.8} parent=11 // pred_check_branch
        %366 = sbr.rel (%p364) target = $region16
      $region15: #{decoder_forward.8} parent=11 // pred_region
        _
      $region16: #{decoder_forward.8} parent=11 // pred_fallthru
        _
      // Predicated region
      $region17: #{decoder_forward.8} parent=11 // pred_check
        %p367 = pneg %p153
      $region18: #{decoder_forward.8} parent=11 // pred_check_branch
        %369 = sbr.rel (%p367) target = $region20
      $region19: #{decoder_forward.8} parent=11 // pred_region
        _
      $region20: #{decoder_forward.8} parent=11 // pred_fallthru
        _
      // Predicated region
      $region21: #{decoder_forward.8} parent=11 // pred_check
        %p370 = pneg %p174
      $region22: #{decoder_forward.8} parent=11 // pred_check_branch
        %372 = sbr.rel (%p370) target = $region24
      $region23: #{decoder_forward.8} parent=11 // pred_region
        _
      $region24: #{decoder_forward.8} parent=11 // pred_fallthru
        _
      // Predicated region
      $region25: #{decoder_forward.8} parent=11 // pred_check
        %p373 = pneg %p195
      $region26: #{decoder_forward.8} parent=11 // pred_check_branch
        %375 = sbr.rel (%p373) target = $region28
      $region27: #{decoder_forward.8} parent=11 // pred_region
        _
      $region28: #{decoder_forward.8} parent=11 // pred_fallthru
        _
      // Predicated region
      $region29: #{decoder_forward.8} parent=11 // pred_check
        %p376 = pneg %p216
      $region30: #{decoder_forward.8} parent=11 // pred_check_branch
        %378 = sbr.rel (%p376) target = $region32
      $region31: #{decoder_forward.8} parent=11 // pred_region
        _
      $region32: #{decoder_forward.8} parent=11 // pred_fallthru
        _
      // Predicated region
      $region33: #{decoder_forward.8} parent=11 // pred_check
        %p379 = pneg %p237
      $region34: #{decoder_forward.8} parent=11 // pred_check_branch
        %381 = sbr.rel (%p379) target = $region36
      $region35: #{decoder_forward.8} parent=11 // pred_region
        _
      $region36: #{decoder_forward.8} parent=11 // pred_fallthru
        _
      // Predicated region
      $region37: #{decoder_forward.8} parent=11 // pred_check
        %p382 = pneg %p258
      $region38: #{decoder_forward.8} parent=11 // pred_check_branch
        %384 = sbr.rel (%p382) target = $region40
      $region39: #{decoder_forward.8} parent=11 // pred_region
        _
      $region40: #{decoder_forward.8} parent=11 // pred_fallthru
        _
      // Predicated region
      $region41: #{decoder_forward.8} parent=11 // pred_check
        %p385 = pneg %p279
      $region42: #{decoder_forward.8} parent=11 // pred_check_branch
        %387 = sbr.rel (%p385) target = $region44
      $region43: #{decoder_forward.8} parent=11 // pred_region
        _
      $region44: #{decoder_forward.8} parent=11 // pred_fallthru
        _
      // Predicated region
      $region45: #{decoder_forward.8} parent=11 // pred_check
        %p388 = pneg %p300
      $region46: #{decoder_forward.8} parent=11 // pred_check_branch
        %390 = sbr.rel (%p388) target = $region48
      $region47: #{decoder_forward.8} parent=11 // pred_region
        _
      $region48: #{decoder_forward.8} parent=11 // pred_fallthru
        _
      // Predicated region
      $region49: #{decoder_forward.8} parent=11 // pred_check
        %p391 = pneg %p321
      $region50: #{decoder_forward.8} parent=11 // pred_check_branch
        %393 = sbr.rel (%p391) target = $region52
      $region51: #{decoder_forward.8} parent=11 // pred_region
        _
      $region52: #{decoder_forward.8} parent=11 // pred_fallthru
        _
    $region12: #{decoder_forward.8} parent=5 // pred_fallthru
      _
    %p394 = scmp.lt.s32.totalorder %s19, 2
    // Predicated region
    $region53: #{decoder_forward.8} parent=5 // pred_check
      %p395 = pneg %p394
    $region54: #{decoder_forward.8} parent=5 // pred_check_branch
      %397 = sbr.rel (%p395) target = $region56
    $region55: #{decoder_forward.8} parent=5 // pred_region
      // Predicated region
      $region57: #{decoder_forward.8} parent=55 // pred_check
        %p398 = pneg %p53
      $region58: #{decoder_forward.8} parent=55 // pred_check_branch
        %400 = sbr.rel (%p398) target = $region60
      $region59: #{decoder_forward.8} parent=55 // pred_region
        %p401 = scmp.lt.s32.totalorder %s26, 1
        %s402 = scalar_select %p401, %s26, 1
        %p403 = scmp.lt.s32.totalorder %s27, 0
        %s404 = scalar_select %p403, %s27, 0
        %s405 = sadd.s32 %s404, %s402
        %s406 = smul.addr %s405, 8
        %s407 = scalar_lea.vmem %s0, %s406
      $region60: #{decoder_forward.8} parent=55 // pred_fallthru
        _
      // Predicated region
      $region61: #{decoder_forward.8} parent=55 // pred_check
        %p408 = pneg %p79
      $region62: #{decoder_forward.8} parent=55 // pred_check_branch
        %410 = sbr.rel (%p408) target = $region64
      $region63: #{decoder_forward.8} parent=55 // pred_region
        %p411 = scmp.lt.s32.totalorder %s26, 1
        %s412 = scalar_select %p411, %s26, 1
        %s413 = smul.addr %s412, 2
        %s414 = smul.addr %s413, 8
        %s415 = scalar_lea.vmem %s1, %s414
      $region64: #{decoder_forward.8} parent=55 // pred_fallthru
        _
      // Predicated region
      $region65: #{decoder_forward.8} parent=55 // pred_check
        %p416 = pneg %p105
      $region66: #{decoder_forward.8} parent=55 // pred_check_branch
        %418 = sbr.rel (%p416) target = $region68
      $region67: #{decoder_forward.8} parent=55 // pred_region
        %p419 = scmp.lt.s32.totalorder %s26, 1
        %s420 = scalar_select %p419, %s26, 1
        %s421 = scalar_lea.vmem %s2, %s420
      $region68: #{decoder_forward.8} parent=55 // pred_fallthru
        _
    $region56: #{decoder_forward.8} parent=5 // pred_fallthru
      _
    %p422 = scmp.le.s32.totalorder 1, %s19
    %p423 = scmp.lt.s32.totalorder %s19, 3
    %p424 = pnand %p422, %p423
    %p425 = pneg %p424
    // Predicated region
    $region69: #{decoder_forward.8} parent=5 // pred_check
      _
    $region70: #{decoder_forward.8} parent=5 // pred_check_branch
      %427 = sbr.rel (%p424) target = $region72
    $region71: #{decoder_forward.8} parent=5 // pred_region
      %s428 = ssub.s32 %s19, 1
      %p429 = scmp.lt.s32.totalorder %s28, 1
      %s430 = scalar_select %p429, %s28, 1
      %p431 = scmp.lt.s32.totalorder %s29, 0
      %s432 = scalar_select %p431, %s29, 0
      %s433 = sadd.s32 %s432, %s430
      %s434 = smul.addr %s433, 8
      %s435 = scalar_lea.vmem %s0, %s434
      %p436 = pneg %p59
      %p437 = pneg %p56
      %p438 = scmp.lt.s32.totalorder %s28, 1
      %s439 = scalar_select %p438, %s28, 1
      %s440 = smul.addr %s439, 2
      %s441 = smul.addr %s440, 8
      %s442 = scalar_lea.vmem %s1, %s441
      %p443 = pneg %p85
      %p444 = pneg %p82
      %p445 = scmp.lt.s32.totalorder %s28, 1
      %s446 = scalar_select %p445, %s28, 1
      %s447 = scalar_lea.vmem %s2, %s446
      %p448 = pneg %p111
      %p449 = pneg %p108
      %p450 = pneg %p132
      %p451 = pneg %p129
      %p452 = pneg %p153
      %p453 = pneg %p150
      %p454 = pneg %p174
      %p455 = pneg %p171
      %p456 = pneg %p195
      %p457 = pneg %p192
      %p458 = pneg %p216
      %p459 = pneg %p213
      %p460 = pneg %p237
      %p461 = pneg %p234
      %p462 = pneg %p258
      %p463 = pneg %p255
      %p464 = pneg %p279
      %p465 = pneg %p276
      %p466 = pneg %p300
      %p467 = pneg %p297
      %p468 = pneg %p321
      %p469 = pneg %p318
      %p470 = pneg %p349
      %p471 = pneg %p346
      %p472 = scmp.lt.s32.totalorder %s28, 1
      %s473 = scalar_select %p472, %s28, 1
      %p474 = scmp.lt.s32.totalorder %s29, 0
      %s475 = scalar_select %p474, %s29, 0
      %s476 = sadd.s32 %s475, %s473
      %s477 = smul.addr %s476, 8
      %s478 = scalar_lea.vmem %s13, %s477
      %p479 = scmp.lt.s32.totalorder %s28, 1
      %s480 = scalar_select %p479, %s28, 1
      %p481 = scmp.lt.s32.totalorder %s29, 0
      %s482 = scalar_select %p481, %s29, 0
      %s483 = sadd.s32 %s482, %s480
      %s484 = smul.addr %s483, 8
      %s485 = scalar_lea.vmem %s0, %s484
      %p486 = scmp.lt.s32.totalorder %s28, 1
      %s487 = scalar_select %p486, %s28, 1
      %s488 = smul.addr %s487, 2
      %s489 = smul.addr %s488, 8
      %s490 = scalar_lea.vmem %s1, %s489
      %p491 = scmp.lt.s32.totalorder %s28, 1
      %s492 = scalar_select %p491, %s28, 1
      %s493 = scalar_lea.vmem %s2, %s492
      %p494 = scmp.lt.s32.totalorder %s28, 1
      %s495 = scalar_select %p494, %s28, 1
      %p496 = scmp.lt.s32.totalorder %s29, 0
      %s497 = scalar_select %p496, %s29, 0
      %s498 = sadd.s32 %s497, %s495
      %s499 = smul.addr %s498, 8
      %s500 = scalar_lea.vmem %s13, %s499
      %v502 = vld [vmem:[%s485] sm:$0xff]
      %v503 = vld [vmem:[%s3] sm:$0x1]
      %v504 = vld [vmem:[%s4] sm:$0x1]
      %505 = vadd.xlane.f32.xlu0 %v502
      %v506 = vpop.xlane.xlu0 %505
      %v507 = vrcp.pop 128.0
      %v508 = vmul.f32 128.0, %v507
      %v509 = vsub.f32 1.0, %v508
      %v510 = vmul.f32 %v507, %v509
      %v511 = vadd.f32 %v507, %v510
      %vm512 = vweird.f32 %v507
      %v513 = vsel %vm512, %v507, %v511
      %v514 = vmul.f32 %v506, %v513
      %v515 = vsub.f32 %v502, %v514
      %v516 = vmul.f32 %v515, %v515
      %517 = vadd.xlane.f32.xlu0 %v516
      %v518 = vpop.xlane.xlu0 %517
      %v519 = vmul.f32 %v518, 0.007874016
      %v521 = vperm.slane %v503, 0
      %v523 = vmul.f32 %v521, %v515
      %v524 = vrsqrt.pop %v519
      %v525 = vmul.f32 %v524, %v519
      %v526 = vmul.f32 %v525, %v524
      %v527 = vmul.f32 0.5, %v526
      %v528 = vsub.f32 1.5, %v527
      %v529 = vmul.f32 %v524, %v528
      %v530 = vmul.f32 %v519, %v529
      %vm531 = vcmp.eq.f32.partialorder %v519, inf
      %v532 = vsel %vm531, %v519, %v530
      %vm533 = vcmp.eq.f32.partialorder %v519, 0.0
      %v534 = vand.u32 %v519, 2147483648
      %v535 = vsel %vm533, %v534, %v532
      %v536 = vadd.f32 %v535, 1e-06
      %v537 = vrcp.pop %v536
      %v538 = vmul.f32 %v536, %v537
      %v539 = vsub.f32 1.0, %v538
      %v540 = vmul.f32 %v537, %v539
      %v541 = vadd.f32 %v537, %v540
      %vm542 = vweird.f32 %v536
      %vm543 = vweird.f32 %v537
      %vm544 = vmor %vm542, %vm543
      %v545 = vsel %vm544, %v537, %v541
      %v546 = vand.u32 2147483647, %v536
      %vm547 = vcmp.eq.f32.partialorder %v546, 8.507059e+37
      %v548 = vand.u32 %v536, 2147483648
      %v549 = vor.u32 1.1754944e-38, %v548
      %v550 = vsel %vm547, %v549, %v545
      %v551 = vmul.f32 %v523, %v550
      %v553 = vperm.slane %v504, 0
      %v555 = vadd.f32 %v551, %v553
      %v556 = vld [vmem:[%s490] sm:$0xff]
      %v557 = vld [vmem:[%s490 + $0x8] sm:$0xff]
      %v558 = vpack.c.bf16 %v555, %v555
      %v559 = vpack.c.bf16 %v557, %v556
      %v560 = vld [vmem:[%s7] sm:$0xf]
      %v561 = vld [vmem:[%s7 + $0x4] sm:$0xf]
      %v562 = vld [vmem:[%s7 + $0x8] sm:$0xf]
      %v563 = vld [vmem:[%s7 + $0xc] sm:$0xf]
      %v564 = vld [vmem:[%s7 + $0x10] sm:$0xf]
      %v565 = vld [vmem:[%s7 + $0x14] sm:$0xf]
      %v566 = vld [vmem:[%s7 + $0x18] sm:$0xf]
      %v567 = vld [vmem:[%s7 + $0x1c] sm:$0xf]
      %v568 = vld [vmem:[%s7 + $0x20] sm:$0xf]
      %v569 = vld [vmem:[%s7 + $0x24] sm:$0xf]
      %v570 = vld [vmem:[%s7 + $0x28] sm:$0xf]
      %v571 = vld [vmem:[%s7 + $0x2c] sm:$0xf]
      %v572 = vld [vmem:[%s7 + $0x30] sm:$0xf]
      %v573 = vld [vmem:[%s7 + $0x34] sm:$0xf]
      %v574 = vld [vmem:[%s7 + $0x38] sm:$0xf]
      %v575 = vld [vmem:[%s7 + $0x3c] sm:$0xf]
      %v576 = vld [vmem:[%s8] sm:$0x1]
      %v578 = vperm.slane %v576, 0
      %v596 = vunpack.c.l.b16 %v560
      %v597 = vunpack.c.l.b16 %v561
      %v598 = vunpack.c.l.b16 %v562
      %v599 = vunpack.c.l.b16 %v563
      %v600 = vunpack.c.l.b16 %v564
      %v601 = vunpack.c.l.b16 %v565
      %v602 = vunpack.c.l.b16 %v566
      %v603 = vunpack.c.l.b16 %v567
      %v604 = vunpack.c.l.b16 %v568
      %v605 = vunpack.c.l.b16 %v569
      %v606 = vunpack.c.l.b16 %v570
      %v607 = vunpack.c.l.b16 %v571
      %v608 = vunpack.c.l.b16 %v572
      %v609 = vunpack.c.l.b16 %v573
      %v610 = vunpack.c.l.b16 %v574
      %v611 = vunpack.c.l.b16 %v575
      %v612 = vpack.c.b16 %v597, %v596
      %v613 = vpack.c.b16 %v599, %v598
      %v614 = vpack.c.b16 %v601, %v600
      %v615 = vpack.c.b16 %v603, %v602
      %v616 = vpack.c.b16 %v605, %v604
      %v617 = vpack.c.b16 %v607, %v606
      %v618 = vpack.c.b16 %v609, %v608
      %v619 = vpack.c.b16 %v611, %v610
      %628 = vmatpush.bf16.msra.mxu0 %v619
      %629 = vmatpush.bf16.msra.mxu0 %v618
      %630 = vmatpush.bf16.msra.mxu0 %v617
      %631 = vmatpush.bf16.msra.mxu0 %v616
      %632 = vmatpush.bf16.msra.mxu0 %v615
      %633 = vmatpush.bf16.msra.mxu0 %v614
      %634 = vmatpush.bf16.msra.mxu0 %v613
      %635 = vmatpush.bf16.msra.mxu0 %v612
      %636 = vmatmul.bf16.gmra.mxu0 %v559
      %v637 = vpop.f32.mrf.mxu0
      %v638 = vadd.f32 %v578, %v637
      %v639 = vpop.f32.mrf.mxu0
      %v640 = vadd.f32 %v578, %v639
      %641 = vdwg.mxu0
      %642 = vxpose.xlu0.b32.start [1/16] %v638, 128
      %643 = vxpose.xlu0.b32.cont [2/16] %v640, 128
      %644 = vxpose.xlu0.b32.cont [3/16] 0.0, 128
      %645 = vxpose.xlu0.b32.cont [4/16] 0.0, 128
      %646 = vxpose.xlu0.b32.cont [5/16] 0.0, 128
      %647 = vxpose.xlu0.b32.cont [6/16] 0.0, 128
      %648 = vxpose.xlu0.b32.cont [7/16] 0.0, 128
      %649 = vxpose.xlu0.b32.cont [8/16] 0.0, 128
      %650 = vxpose.xlu0.b32.cont [9/16] 0.0, 128
      %651 = vxpose.xlu0.b32.cont [10/16] 0.0, 128
      %652 = vxpose.xlu0.b32.cont [11/16] 0.0, 128
      %653 = vxpose.xlu0.b32.cont [12/16] 0.0, 128
      %654 = vxpose.xlu0.b32.cont [13/16] 0.0, 128
      %655 = vxpose.xlu0.b32.cont [14/16] 0.0, 128
      %656 = vxpose.xlu0.b32.cont [15/16] 0.0, 128
      %657 = vxpose.xlu0.b32.end [16/16] 0.0, 128
      %v658 = vpop.trf.xlu0
      %v659 = vpop.trf.xlu0
      %v660 = vpop.trf.xlu0
      %v661 = vpop.trf.xlu0
      %v662 = vpop.trf.xlu0
      %v663 = vpop.trf.xlu0
      %v664 = vpop.trf.xlu0
      %v665 = vpop.trf.xlu0
      %v666 = vpop.trf.xlu0
      %v667 = vpop.trf.xlu0
      %v668 = vpop.trf.xlu0
      %v669 = vpop.trf.xlu0
      %v670 = vpop.trf.xlu0
      %v671 = vpop.trf.xlu0
      %v672 = vpop.trf.xlu0
      %v673 = vpop.trf.xlu0
      %v674 = vpack.c.bf16 %v658, %v658
      %v675 = vpack.c.bf16 %v659, %v659
      %v676 = vpack.c.bf16 %v660, %v660
      %v677 = vpack.c.bf16 %v661, %v661
      %v678 = vpack.c.bf16 %v662, %v662
      %v679 = vpack.c.bf16 %v663, %v663
      %v680 = vpack.c.bf16 %v664, %v664
      %v681 = vpack.c.bf16 %v665, %v665
      %v682 = vpack.c.bf16 %v666, %v666
      %v683 = vpack.c.bf16 %v667, %v667
      %v684 = vpack.c.bf16 %v668, %v668
      %v685 = vpack.c.bf16 %v669, %v669
      %v686 = vpack.c.bf16 %v670, %v670
      %v687 = vpack.c.bf16 %v671, %v671
      %v688 = vpack.c.bf16 %v672, %v672
      %v689 = vpack.c.bf16 %v673, %v673
      %v690 = vld [vmem:[%s493] sm:$0x1]
      %vm691 = vcmp.ne.s32.totalorder %v690, 0
      %v692 = vsel %vm691, 1, 0
      %v693 = vperm.slane %v692, 0
      %vm694 = vcmp.eq.s32.totalorder %v693, 1
      %v695 = vld [vmem:[%s5] sm:$0xf]
      %v696 = vld [vmem:[%s5 + $0x4] sm:$0xf]
      %v697 = vld [vmem:[%s5 + $0x8] sm:$0xf]
      %v698 = vld [vmem:[%s5 + $0xc] sm:$0xf]
      %v699 = vld [vmem:[%s5 + $0x10] sm:$0xf]
      %v700 = vld [vmem:[%s5 + $0x14] sm:$0xf]
      %v701 = vld [vmem:[%s5 + $0x18] sm:$0xf]
      %v702 = vld [vmem:[%s5 + $0x1c] sm:$0xf]
      %v703 = vld [vmem:[%s5 + $0x20] sm:$0xf]
      %v704 = vld [vmem:[%s5 + $0x24] sm:$0xf]
      %v705 = vld [vmem:[%s5 + $0x28] sm:$0xf]
      %v706 = vld [vmem:[%s5 + $0x2c] sm:$0xf]
      %v707 = vld [vmem:[%s5 + $0x30] sm:$0xf]
      %v708 = vld [vmem:[%s5 + $0x34] sm:$0xf]
      %v709 = vld [vmem:[%s5 + $0x38] sm:$0xf]
      %v710 = vld [vmem:[%s5 + $0x3c] sm:$0xf]
      %v711 = vld [vmem:[%s6] sm:$0x1]
      %v713 = vperm.slane %v711, 0
      %v731 = vunpack.c.l.b16 %v695
      %v732 = vunpack.c.l.b16 %v696
      %v733 = vunpack.c.l.b16 %v697
      %v734 = vunpack.c.l.b16 %v698
      %v735 = vunpack.c.l.b16 %v699
      %v736 = vunpack.c.l.b16 %v700
      %v737 = vunpack.c.l.b16 %v701
      %v738 = vunpack.c.l.b16 %v702
      %v739 = vunpack.c.l.b16 %v703
      %v740 = vunpack.c.l.b16 %v704
      %v741 = vunpack.c.l.b16 %v705
      %v742 = vunpack.c.l.b16 %v706
      %v743 = vunpack.c.l.b16 %v707
      %v744 = vunpack.c.l.b16 %v708
      %v745 = vunpack.c.l.b16 %v709
      %v746 = vunpack.c.l.b16 %v710
      %v747 = vpack.c.b16 %v732, %v731
      %v748 = vpack.c.b16 %v734, %v733
      %v749 = vpack.c.b16 %v736, %v735
      %v750 = vpack.c.b16 %v738, %v737
      %v751 = vpack.c.b16 %v740, %v739
      %v752 = vpack.c.b16 %v742, %v741
      %v753 = vpack.c.b16 %v744, %v743
      %v754 = vpack.c.b16 %v746, %v745
      %763 = vmatpush.bf16.msra.mxu0 %v754
      %764 = vmatpush.bf16.msra.mxu0 %v753
      %765 = vmatpush.bf16.msra.mxu0 %v752
      %766 = vmatpush.bf16.msra.mxu0 %v751
      %767 = vmatpush.bf16.msra.mxu0 %v750
      %768 = vmatpush.bf16.msra.mxu0 %v749
      %769 = vmatpush.bf16.msra.mxu0 %v748
      %770 = vmatpush.bf16.msra.mxu0 %v747
      %771 = vmatmul.bf16.gmra.mxu0 %v558
      %v772 = vpop.f32.mrf.mxu0
      %v773 = vadd.f32 %v713, %v772
      %v774 = vpop.f32.mrf.mxu0
      %775 = vdwg.mxu0
      %v776 = vmul.f32 %v773, 0.17677669
      %v777 = vld [vmem:[%s9] sm:$0xf]
      %v778 = vld [vmem:[%s9 + $0x4] sm:$0xf]
      %v779 = vld [vmem:[%s9 + $0x8] sm:$0xf]
      %v780 = vld [vmem:[%s9 + $0xc] sm:$0xf]
      %v781 = vld [vmem:[%s9 + $0x10] sm:$0xf]
      %v782 = vld [vmem:[%s9 + $0x14] sm:$0xf]
      %v783 = vld [vmem:[%s9 + $0x18] sm:$0xf]
      %v784 = vld [vmem:[%s9 + $0x1c] sm:$0xf]
      %v785 = vld [vmem:[%s9 + $0x20] sm:$0xf]
      %v786 = vld [vmem:[%s9 + $0x24] sm:$0xf]
      %v787 = vld [vmem:[%s9 + $0x28] sm:$0xf]
      %v788 = vld [vmem:[%s9 + $0x2c] sm:$0xf]
      %v789 = vld [vmem:[%s9 + $0x30] sm:$0xf]
      %v790 = vld [vmem:[%s9 + $0x34] sm:$0xf]
      %v791 = vld [vmem:[%s9 + $0x38] sm:$0xf]
      %v792 = vld [vmem:[%s9 + $0x3c] sm:$0xf]
      %v793 = vld [vmem:[%s10] sm:$0x1]
      %v795 = vperm.slane %v793, 0
      %v813 = vunpack.c.l.b16 %v777
      %v814 = vunpack.c.l.b16 %v778
      %v815 = vunpack.c.l.b16 %v779
      %v816 = vunpack.c.l.b16 %v780
      %v817 = vunpack.c.l.b16 %v781
      %v818 = vunpack.c.l.b16 %v782
      %v819 = vunpack.c.l.b16 %v783
      %v820 = vunpack.c.l.b16 %v784
      %v821 = vunpack.c.l.b16 %v785
      %v822 = vunpack.c.l.b16 %v786
      %v823 = vunpack.c.l.b16 %v787
      %v824 = vunpack.c.l.b16 %v788
      %v825 = vunpack.c.l.b16 %v789
      %v826 = vunpack.c.l.b16 %v790
      %v827 = vunpack.c.l.b16 %v791
      %v828 = vunpack.c.l.b16 %v792
      %v829 = vpack.c.b16 %v814, %v813
      %v830 = vpack.c.b16 %v816, %v815
      %v831 = vpack.c.b16 %v818, %v817
      %v832 = vpack.c.b16 %v820, %v819
      %v833 = vpack.c.b16 %v822, %v821
      %v834 = vpack.c.b16 %v824, %v823
      %v835 = vpack.c.b16 %v826, %v825
      %v836 = vpack.c.b16 %v828, %v827
      %845 = vmatpush.bf16.msra.mxu0 %v836
      %846 = vmatpush.bf16.msra.mxu0 %v835
      %847 = vmatpush.bf16.msra.mxu0 %v834
      %848 = vmatpush.bf16.msra.mxu0 %v833
      %849 = vmatpush.bf16.msra.mxu0 %v832
      %850 = vmatpush.bf16.msra.mxu0 %v831
      %851 = vmatpush.bf16.msra.mxu0 %v830
      %852 = vmatpush.bf16.msra.mxu0 %v829
      %853 = vmatmul.bf16.gmra.mxu0 %v559
      %v854 = vpop.f32.mrf.mxu0
      %v855 = vadd.f32 %v795, %v854
      %v856 = vpop.f32.mrf.mxu0
      %v857 = vadd.f32 %v795, %v856
      %858 = vdwg.mxu0
      %v859 = vpack.c.bf16 %v776, %v776
      %v864 = vunpack.c.l.b16 %v674
      %v865 = vunpack.c.l.b16 %v675
      %v866 = vunpack.c.l.b16 %v676
      %v867 = vunpack.c.l.b16 %v677
      %v868 = vpack.c.b16 %v865, %v864
      %v869 = vpack.c.b16 %v867, %v866
      %vm872 = vcmask 261120
      %v874 = vsel %vm872, %v859, 0
      %876 = vmatpush.bf16.msra.mxu0 0
      %877 = vmatpush.bf16.msra.mxu0 0
      %878 = vmatpush.bf16.msra.mxu0 0
      %879 = vmatpush.bf16.msra.mxu0 0
      %880 = vmatpush.bf16.msra.mxu0 0
      %881 = vmatpush.bf16.msra.mxu0 0
      %882 = vmatpush.bf16.msra.mxu0 %v869
      %883 = vmatpush.bf16.msra.mxu0 %v868
      %884 = vmatmul.bf16.gmra.mxu0 %v874
      %v885 = vpop.f32.mrf.mxu0
      %v886 = vadd.f32 0.0, %v885
      %v887 = vpop.f32.mrf.mxu0
      %888 = vdwg.mxu0
      %v889 = vsel %vm694, %v886, -1e+09
      %vm890 = vcmask 130048
      %v891 = vsel %vm890, %v889, -inf
      %892 = vmax.xlane.f32.xlu0 %v891
      %v893 = vpop.xlane.xlu0 %892
      %v894 = vsub.f32 %v889, %v893
      %v895 = vmul.f32 %v894, 1.442695
      %v896 = vpow.pop %v895
      %v897 = vsel %vm890, %v896, 0.0
      %898 = vadd.xlane.f32.xlu0 %v897
      %v899 = vpop.xlane.xlu0 %898
      %v900 = vrcp.pop %v899
      %v901 = vmul.f32 %v896, %v900
      %v902 = vpack.c.bf16 %v901, %v901
      %v903 = vpack.c.bf16 %v857, %v855
      %v905 = vsel %vm890, %v902, 0
      %907 = vmatpush.bf16.msra.mxu0 0
      %908 = vmatpush.bf16.msra.mxu0 0
      %909 = vmatpush.bf16.msra.mxu0 0
      %910 = vmatpush.bf16.msra.mxu0 0
      %911 = vmatpush.bf16.msra.mxu0 0
      %912 = vmatpush.bf16.msra.mxu0 0
      %913 = vmatpush.bf16.msra.mxu0 0
      %914 = vmatpush.bf16.msra.mxu0 %v903
      %915 = vmatmul.bf16.gmra.mxu0 %v905
      %v916 = vpop.f32.mrf.mxu0
      %v917 = vadd.f32 0.0, %v916
      %v918 = vpop.f32.mrf.mxu0
      %919 = vdwg.mxu0
      %v920 = vpack.c.bf16 %v917, %v917
      %vm921 = vcmask 257024
      %922 = vst.msk [vmem:[#allocation2] sm:$0xf] %vm921, %v920
      %s923 = scalar_lea.vmem %s5, 64
      %v924 = vld [vmem:[%s923] sm:$0xf]
      %v925 = vld [vmem:[%s923 + $0x4] sm:$0xf]
      %v926 = vld [vmem:[%s923 + $0x8] sm:$0xf]
      %v927 = vld [vmem:[%s923 + $0xc] sm:$0xf]
      %v928 = vld [vmem:[%s923 + $0x10] sm:$0xf]
      %v929 = vld [vmem:[%s923 + $0x14] sm:$0xf]
      %v930 = vld [vmem:[%s923 + $0x18] sm:$0xf]
      %v931 = vld [vmem:[%s923 + $0x1c] sm:$0xf]
      %v932 = vld [vmem:[%s923 + $0x20] sm:$0xf]
      %v933 = vld [vmem:[%s923 + $0x24] sm:$0xf]
      %v934 = vld [vmem:[%s923 + $0x28] sm:$0xf]
      %v935 = vld [vmem:[%s923 + $0x2c] sm:$0xf]
      %v936 = vld [vmem:[%s923 + $0x30] sm:$0xf]
      %v937 = vld [vmem:[%s923 + $0x34] sm:$0xf]
      %v938 = vld [vmem:[%s923 + $0x38] sm:$0xf]
      %v939 = vld [vmem:[%s923 + $0x3c] sm:$0xf]
      %s940 = scalar_lea.vmem %s6, 1
      %v941 = vld [vmem:[%s940] sm:$0x1]
      %v943 = vperm.slane %v941, 0
      %v961 = vunpack.c.l.b16 %v924
      %v962 = vunpack.c.l.b16 %v925
      %v963 = vunpack.c.l.b16 %v926
      %v964 = vunpack.c.l.b16 %v927
      %v965 = vunpack.c.l.b16 %v928
      %v966 = vunpack.c.l.b16 %v929
      %v967 = vunpack.c.l.b16 %v930
      %v968 = vunpack.c.l.b16 %v931
      %v969 = vunpack.c.l.b16 %v932
      %v970 = vunpack.c.l.b16 %v933
      %v971 = vunpack.c.l.b16 %v934
      %v972 = vunpack.c.l.b16 %v935
      %v973 = vunpack.c.l.b16 %v936
      %v974 = vunpack.c.l.b16 %v937
      %v975 = vunpack.c.l.b16 %v938
      %v976 = vunpack.c.l.b16 %v939
      %v977 = vpack.c.b16 %v962, %v961
      %v978 = vpack.c.b16 %v964, %v963
      %v979 = vpack.c.b16 %v966, %v965
      %v980 = vpack.c.b16 %v968, %v967
      %v981 = vpack.c.b16 %v970, %v969
      %v982 = vpack.c.b16 %v972, %v971
      %v983 = vpack.c.b16 %v974, %v973
      %v984 = vpack.c.b16 %v976, %v975
      %993 = vmatpush.bf16.msra.mxu0 %v984
      %994 = vmatpush.bf16.msra.mxu0 %v983
      %995 = vmatpush.bf16.msra.mxu0 %v982
      %996 = vmatpush.bf16.msra.mxu0 %v981
      %997 = vmatpush.bf16.msra.mxu0 %v980
      %998 = vmatpush.bf16.msra.mxu0 %v979
      %999 = vmatpush.bf16.msra.mxu0 %v978
      %1000 = vmatpush.bf16.msra.mxu0 %v977
      %1001 = vmatmul.bf16.gmra.mxu0 %v558
      %v1002 = vpop.f32.mrf.mxu0
      %v1003 = vadd.f32 %v943, %v1002
      %v1004 = vpop.f32.mrf.mxu0
      %1005 = vdwg.mxu0
      %v1006 = vmul.f32 %v1003, 0.17677669
      %s1007 = scalar_lea.vmem %s9, 64
      %v1008 = vld [vmem:[%s1007] sm:$0xf]
      %v1009 = vld [vmem:[%s1007 + $0x4] sm:$0xf]
      %v1010 = vld [vmem:[%s1007 + $0x8] sm:$0xf]
      %v1011 = vld [vmem:[%s1007 + $0xc] sm:$0xf]
      %v1012 = vld [vmem:[%s1007 + $0x10] sm:$0xf]
      %v1013 = vld [vmem:[%s1007 + $0x14] sm:$0xf]
      %v1014 = vld [vmem:[%s1007 + $0x18] sm:$0xf]
      %v1015 = vld [vmem:[%s1007 + $0x1c] sm:$0xf]
      %v1016 = vld [vmem:[%s1007 + $0x20] sm:$0xf]
      %v1017 = vld [vmem:[%s1007 + $0x24] sm:$0xf]
      %v1018 = vld [vmem:[%s1007 + $0x28] sm:$0xf]
      %v1019 = vld [vmem:[%s1007 + $0x2c] sm:$0xf]
      %v1020 = vld [vmem:[%s1007 + $0x30] sm:$0xf]
      %v1021 = vld [vmem:[%s1007 + $0x34] sm:$0xf]
      %v1022 = vld [vmem:[%s1007 + $0x38] sm:$0xf]
      %v1023 = vld [vmem:[%s1007 + $0x3c] sm:$0xf]
      %s1024 = scalar_lea.vmem %s10, 1
      %v1025 = vld [vmem:[%s1024] sm:$0x1]
      %v1027 = vperm.slane %v1025, 0
      %v1045 = vunpack.c.l.b16 %v1008
      %v1046 = vunpack.c.l.b16 %v1009
      %v1047 = vunpack.c.l.b16 %v1010
      %v1048 = vunpack.c.l.b16 %v1011
      %v1049 = vunpack.c.l.b16 %v1012
      %v1050 = vunpack.c.l.b16 %v1013
      %v1051 = vunpack.c.l.b16 %v1014
      %v1052 = vunpack.c.l.b16 %v1015
      %v1053 = vunpack.c.l.b16 %v1016
      %v1054 = vunpack.c.l.b16 %v1017
      %v1055 = vunpack.c.l.b16 %v1018
      %v1056 = vunpack.c.l.b16 %v1019
      %v1057 = vunpack.c.l.b16 %v1020
      %v1058 = vunpack.c.l.b16 %v1021
      %v1059 = vunpack.c.l.b16 %v1022
      %v1060 = vunpack.c.l.b16 %v1023
      %v1061 = vpack.c.b16 %v1046, %v1045
      %v1062 = vpack.c.b16 %v1048, %v1047
      %v1063 = vpack.c.b16 %v1050, %v1049
      %v1064 = vpack.c.b16 %v1052, %v1051
      %v1065 = vpack.c.b16 %v1054, %v1053
      %v1066 = vpack.c.b16 %v1056, %v1055
      %v1067 = vpack.c.b16 %v1058, %v1057
      %v1068 = vpack.c.b16 %v1060, %v1059
      %1077 = vmatpush.bf16.msra.mxu0 %v1068
      %1078 = vmatpush.bf16.msra.mxu0 %v1067
      %1079 = vmatpush.bf16.msra.mxu0 %v1066
      %1080 = vmatpush.bf16.msra.mxu0 %v1065
      %1081 = vmatpush.bf16.msra.mxu0 %v1064
      %1082 = vmatpush.bf16.msra.mxu0 %v1063
      %1083 = vmatpush.bf16.msra.mxu0 %v1062
      %1084 = vmatpush.bf16.msra.mxu0 %v1061
      %1085 = vmatmul.bf16.gmra.mxu0 %v559
      %v1086 = vpop.f32.mrf.mxu0
      %v1087 = vadd.f32 %v1027, %v1086
      %v1088 = vpop.f32.mrf.mxu0
      %v1089 = vadd.f32 %v1027, %v1088
      %1090 = vdwg.mxu0
      %v1091 = vpack.c.bf16 %v1006, %v1006
      %v1096 = vunpack.c.l.b16 %v678
      %v1097 = vunpack.c.l.b16 %v679
      %v1098 = vunpack.c.l.b16 %v680
      %v1099 = vunpack.c.l.b16 %v681
      %v1100 = vpack.c.b16 %v1097, %v1096
      %v1101 = vpack.c.b16 %v1099, %v1098
      %v1105 = vsel %vm872, %v1091, 0
      %1107 = vmatpush.bf16.msra.mxu0 0
      %1108 = vmatpush.bf16.msra.mxu0 0
      %1109 = vmatpush.bf16.msra.mxu0 0
      %1110 = vmatpush.bf16.msra.mxu0 0
      %1111 = vmatpush.bf16.msra.mxu0 0
      %1112 = vmatpush.bf16.msra.mxu0 0
      %1113 = vmatpush.bf16.msra.mxu0 %v1101
      %1114 = vmatpush.bf16.msra.mxu0 %v1100
      %1115 = vmatmul.bf16.gmra.mxu0 %v1105
      %v1116 = vpop.f32.mrf.mxu0
      %v1117 = vadd.f32 0.0, %v1116
      %v1118 = vpop.f32.mrf.mxu0
      %1119 = vdwg.mxu0
      %v1120 = vsel %vm694, %v1117, -1e+09
      %v1121 = vsel %vm890, %v1120, -inf
      %1122 = vmax.xlane.f32.xlu0 %v1121
      %v1123 = vpop.xlane.xlu0 %1122
      %v1124 = vsub.f32 %v1120, %v1123
      %v1125 = vmul.f32 %v1124, 1.442695
      %v1126 = vpow.pop %v1125
      %v1127 = vsel %vm890, %v1126, 0.0
      %1128 = vadd.xlane.f32.xlu0 %v1127
      %v1129 = vpop.xlane.xlu0 %1128
      %v1130 = vrcp.pop %v1129
      %v1131 = vmul.f32 %v1126, %v1130
      %v1132 = vpack.c.bf16 %v1131, %v1131
      %v1133 = vpack.c.bf16 %v1089, %v1087
      %v1135 = vsel %vm890, %v1132, 0
      %1137 = vmatpush.bf16.msra.mxu0 0
      %1138 = vmatpush.bf16.msra.mxu0 0
      %1139 = vmatpush.bf16.msra.mxu0 0
      %1140 = vmatpush.bf16.msra.mxu0 0
      %1141 = vmatpush.bf16.msra.mxu0 0
      %1142 = vmatpush.bf16.msra.mxu0 0
      %1143 = vmatpush.bf16.msra.mxu0 0
      %1144 = vmatpush.bf16.msra.mxu0 %v1133
      %1145 = vmatmul.bf16.gmra.mxu0 %v1135
      %v1146 = vpop.f32.mrf.mxu0
      %v1147 = vadd.f32 0.0, %v1146
      %v1148 = vpop.f32.mrf.mxu0
      %1149 = vdwg.mxu0
      %v1150 = vpack.c.bf16 %v1147, %v1147
      %1152 = vrot.lane.b32.xlu0 %v1150, 32
      %v1153 = vpop.permute.xlu0 %1152
      %vm1155 = vcmask 519424
      %1156 = vst.msk [vmem:[#allocation2] sm:$0xf] %vm1155, %v1153
      %s1157 = scalar_lea.vmem %s5, 128
      %v1158 = vld [vmem:[%s1157] sm:$0xf]
      %v1159 = vld [vmem:[%s1157 + $0x4] sm:$0xf]
      %v1160 = vld [vmem:[%s1157 + $0x8] sm:$0xf]
      %v1161 = vld [vmem:[%s1157 + $0xc] sm:$0xf]
      %v1162 = vld [vmem:[%s1157 + $0x10] sm:$0xf]
      %v1163 = vld [vmem:[%s1157 + $0x14] sm:$0xf]
      %v1164 = vld [vmem:[%s1157 + $0x18] sm:$0xf]
      %v1165 = vld [vmem:[%s1157 + $0x1c] sm:$0xf]
      %v1166 = vld [vmem:[%s1157 + $0x20] sm:$0xf]
      %v1167 = vld [vmem:[%s1157 + $0x24] sm:$0xf]
      %v1168 = vld [vmem:[%s1157 + $0x28] sm:$0xf]
      %v1169 = vld [vmem:[%s1157 + $0x2c] sm:$0xf]
      %v1170 = vld [vmem:[%s1157 + $0x30] sm:$0xf]
      %v1171 = vld [vmem:[%s1157 + $0x34] sm:$0xf]
      %v1172 = vld [vmem:[%s1157 + $0x38] sm:$0xf]
      %v1173 = vld [vmem:[%s1157 + $0x3c] sm:$0xf]
      %s1174 = scalar_lea.vmem %s6, 2
      %v1175 = vld [vmem:[%s1174] sm:$0x1]
      %v1177 = vperm.slane %v1175, 0
      %v1195 = vunpack.c.l.b16 %v1158
      %v1196 = vunpack.c.l.b16 %v1159
      %v1197 = vunpack.c.l.b16 %v1160
      %v1198 = vunpack.c.l.b16 %v1161
      %v1199 = vunpack.c.l.b16 %v1162
      %v1200 = vunpack.c.l.b16 %v1163
      %v1201 = vunpack.c.l.b16 %v1164
      %v1202 = vunpack.c.l.b16 %v1165
      %v1203 = vunpack.c.l.b16 %v1166
      %v1204 = vunpack.c.l.b16 %v1167
      %v1205 = vunpack.c.l.b16 %v1168
      %v1206 = vunpack.c.l.b16 %v1169
      %v1207 = vunpack.c.l.b16 %v1170
      %v1208 = vunpack.c.l.b16 %v1171
      %v1209 = vunpack.c.l.b16 %v1172
      %v1210 = vunpack.c.l.b16 %v1173
      %v1211 = vpack.c.b16 %v1196, %v1195
      %v1212 = vpack.c.b16 %v1198, %v1197
      %v1213 = vpack.c.b16 %v1200, %v1199
      %v1214 = vpack.c.b16 %v1202, %v1201
      %v1215 = vpack.c.b16 %v1204, %v1203
      %v1216 = vpack.c.b16 %v1206, %v1205
      %v1217 = vpack.c.b16 %v1208, %v1207
      %v1218 = vpack.c.b16 %v1210, %v1209
      %1227 = vmatpush.bf16.msra.mxu0 %v1218
      %1228 = vmatpush.bf16.msra.mxu0 %v1217
      %1229 = vmatpush.bf16.msra.mxu0 %v1216
      %1230 = vmatpush.bf16.msra.mxu0 %v1215
      %1231 = vmatpush.bf16.msra.mxu0 %v1214
      %1232 = vmatpush.bf16.msra.mxu0 %v1213
      %1233 = vmatpush.bf16.msra.mxu0 %v1212
      %1234 = vmatpush.bf16.msra.mxu0 %v1211
      %1235 = vmatmul.bf16.gmra.mxu0 %v558
      %v1236 = vpop.f32.mrf.mxu0
      %v1237 = vadd.f32 %v1177, %v1236
      %v1238 = vpop.f32.mrf.mxu0
      %1239 = vdwg.mxu0
      %v1240 = vmul.f32 %v1237, 0.17677669
      %s1241 = scalar_lea.vmem %s9, 128
      %v1242 = vld [vmem:[%s1241] sm:$0xf]
      %v1243 = vld [vmem:[%s1241 + $0x4] sm:$0xf]
      %v1244 = vld [vmem:[%s1241 + $0x8] sm:$0xf]
      %v1245 = vld [vmem:[%s1241 + $0xc] sm:$0xf]
      %v1246 = vld [vmem:[%s1241 + $0x10] sm:$0xf]
      %v1247 = vld [vmem:[%s1241 + $0x14] sm:$0xf]
      %v1248 = vld [vmem:[%s1241 + $0x18] sm:$0xf]
      %v1249 = vld [vmem:[%s1241 + $0x1c] sm:$0xf]
      %v1250 = vld [vmem:[%s1241 + $0x20] sm:$0xf]
      %v1251 = vld [vmem:[%s1241 + $0x24] sm:$0xf]
      %v1252 = vld [vmem:[%s1241 + $0x28] sm:$0xf]
      %v1253 = vld [vmem:[%s1241 + $0x2c] sm:$0xf]
      %v1254 = vld [vmem:[%s1241 + $0x30] sm:$0xf]
      %v1255 = vld [vmem:[%s1241 + $0x34] sm:$0xf]
      %v1256 = vld [vmem:[%s1241 + $0x38] sm:$0xf]
      %v1257 = vld [vmem:[%s1241 + $0x3c] sm:$0xf]
      %s1258 = scalar_lea.vmem %s10, 2
      %v1259 = vld [vmem:[%s1258] sm:$0x1]
      %v1261 = vperm.slane %v1259, 0
      %v1279 = vunpack.c.l.b16 %v1242
      %v1280 = vunpack.c.l.b16 %v1243
      %v1281 = vunpack.c.l.b16 %v1244
      %v1282 = vunpack.c.l.b16 %v1245
      %v1283 = vunpack.c.l.b16 %v1246
      %v1284 = vunpack.c.l.b16 %v1247
      %v1285 = vunpack.c.l.b16 %v1248
      %v1286 = vunpack.c.l.b16 %v1249
      %v1287 = vunpack.c.l.b16 %v1250
      %v1288 = vunpack.c.l.b16 %v1251
      %v1289 = vunpack.c.l.b16 %v1252
      %v1290 = vunpack.c.l.b16 %v1253
      %v1291 = vunpack.c.l.b16 %v1254
      %v1292 = vunpack.c.l.b16 %v1255
      %v1293 = vunpack.c.l.b16 %v1256
      %v1294 = vunpack.c.l.b16 %v1257
      %v1295 = vpack.c.b16 %v1280, %v1279
      %v1296 = vpack.c.b16 %v1282, %v1281
      %v1297 = vpack.c.b16 %v1284, %v1283
      %v1298 = vpack.c.b16 %v1286, %v1285
      %v1299 = vpack.c.b16 %v1288, %v1287
      %v1300 = vpack.c.b16 %v1290, %v1289
      %v1301 = vpack.c.b16 %v1292, %v1291
      %v1302 = vpack.c.b16 %v1294, %v1293
      %1311 = vmatpush.bf16.msra.mxu0 %v1302
      %1312 = vmatpush.bf16.msra.mxu0 %v1301
      %1313 = vmatpush.bf16.msra.mxu0 %v1300
      %1314 = vmatpush.bf16.msra.mxu0 %v1299
      %1315 = vmatpush.bf16.msra.mxu0 %v1298
      %1316 = vmatpush.bf16.msra.mxu0 %v1297
      %1317 = vmatpush.bf16.msra.mxu0 %v1296
      %1318 = vmatpush.bf16.msra.mxu0 %v1295
      %1319 = vmatmul.bf16.gmra.mxu0 %v559
      %v1320 = vpop.f32.mrf.mxu0
      %v1321 = vadd.f32 %v1261, %v1320
      %v1322 = vpop.f32.mrf.mxu0
      %v1323 = vadd.f32 %v1261, %v1322
      %1324 = vdwg.mxu0
      %v1325 = vpack.c.bf16 %v1240, %v1240
      %v1330 = vunpack.c.l.b16 %v682
      %v1331 = vunpack.c.l.b16 %v683
      %v1332 = vunpack.c.l.b16 %v684
      %v1333 = vunpack.c.l.b16 %v685
      %v1334 = vpack.c.b16 %v1331, %v1330
      %v1335 = vpack.c.b16 %v1333, %v1332
      %v1339 = vsel %vm872, %v1325, 0
      %1341 = vmatpush.bf16.msra.mxu0 0
      %1342 = vmatpush.bf16.msra.mxu0 0
      %1343 = vmatpush.bf16.msra.mxu0 0
      %1344 = vmatpush.bf16.msra.mxu0 0
      %1345 = vmatpush.bf16.msra.mxu0 0
      %1346 = vmatpush.bf16.msra.mxu0 0
      %1347 = vmatpush.bf16.msra.mxu0 %v1335
      %1348 = vmatpush.bf16.msra.mxu0 %v1334
      %1349 = vmatmul.bf16.gmra.mxu0 %v1339
      %v1350 = vpop.f32.mrf.mxu0
      %v1351 = vadd.f32 0.0, %v1350
      %v1352 = vpop.f32.mrf.mxu0
      %1353 = vdwg.mxu0
      %v1354 = vsel %vm694, %v1351, -1e+09
      %v1355 = vsel %vm890, %v1354, -inf
      %1356 = vmax.xlane.f32.xlu0 %v1355
      %v1357 = vpop.xlane.xlu0 %1356
      %v1358 = vsub.f32 %v1354, %v1357
      %v1359 = vmul.f32 %v1358, 1.442695
      %v1360 = vpow.pop %v1359
      %v1361 = vsel %vm890, %v1360, 0.0
      %1362 = vadd.xlane.f32.xlu0 %v1361
      %v1363 = vpop.xlane.xlu0 %1362
      %v1364 = vrcp.pop %v1363
      %v1365 = vmul.f32 %v1360, %v1364
      %v1366 = vpack.c.bf16 %v1365, %v1365
      %v1367 = vpack.c.bf16 %v1323, %v1321
      %v1369 = vsel %vm890, %v1366, 0
      %1371 = vmatpush.bf16.msra.mxu0 0
      %1372 = vmatpush.bf16.msra.mxu0 0
      %1373 = vmatpush.bf16.msra.mxu0 0
      %1374 = vmatpush.bf16.msra.mxu0 0
      %1375 = vmatpush.bf16.msra.mxu0 0
      %1376 = vmatpush.bf16.msra.mxu0 0
      %1377 = vmatpush.bf16.msra.mxu0 0
      %1378 = vmatpush.bf16.msra.mxu0 %v1367
      %1379 = vmatmul.bf16.gmra.mxu0 %v1369
      %v1380 = vpop.f32.mrf.mxu0
      %v1381 = vadd.f32 0.0, %v1380
      %v1382 = vpop.f32.mrf.mxu0
      %1383 = vdwg.mxu0
      %v1384 = vpack.c.bf16 %v1381, %v1381
      %1386 = vrot.lane.b32.xlu0 %v1384, 64
      %v1387 = vpop.permute.xlu0 %1386
      %vm1389 = vcmask 781824
      %1390 = vst.msk [vmem:[#allocation2] sm:$0xf] %vm1389, %v1387
      %s1391 = scalar_lea.vmem %s5, 192
      %v1392 = vld [vmem:[%s1391] sm:$0xf]
      %v1393 = vld [vmem:[%s1391 + $0x4] sm:$0xf]
      %v1394 = vld [vmem:[%s1391 + $0x8] sm:$0xf]
      %v1395 = vld [vmem:[%s1391 + $0xc] sm:$0xf]
      %v1396 = vld [vmem:[%s1391 + $0x10] sm:$0xf]
      %v1397 = vld [vmem:[%s1391 + $0x14] sm:$0xf]
      %v1398 = vld [vmem:[%s1391 + $0x18] sm:$0xf]
      %v1399 = vld [vmem:[%s1391 + $0x1c] sm:$0xf]
      %v1400 = vld [vmem:[%s1391 + $0x20] sm:$0xf]
      %v1401 = vld [vmem:[%s1391 + $0x24] sm:$0xf]
      %v1402 = vld [vmem:[%s1391 + $0x28] sm:$0xf]
      %v1403 = vld [vmem:[%s1391 + $0x2c] sm:$0xf]
      %v1404 = vld [vmem:[%s1391 + $0x30] sm:$0xf]
      %v1405 = vld [vmem:[%s1391 + $0x34] sm:$0xf]
      %v1406 = vld [vmem:[%s1391 + $0x38] sm:$0xf]
      %v1407 = vld [vmem:[%s1391 + $0x3c] sm:$0xf]
      %s1408 = scalar_lea.vmem %s6, 3
      %v1409 = vld [vmem:[%s1408] sm:$0x1]
      %v1411 = vperm.slane %v1409, 0
      %v1429 = vunpack.c.l.b16 %v1392
      %v1430 = vunpack.c.l.b16 %v1393
      %v1431 = vunpack.c.l.b16 %v1394
      %v1432 = vunpack.c.l.b16 %v1395
      %v1433 = vunpack.c.l.b16 %v1396
      %v1434 = vunpack.c.l.b16 %v1397
      %v1435 = vunpack.c.l.b16 %v1398
      %v1436 = vunpack.c.l.b16 %v1399
      %v1437 = vunpack.c.l.b16 %v1400
      %v1438 = vunpack.c.l.b16 %v1401
      %v1439 = vunpack.c.l.b16 %v1402
      %v1440 = vunpack.c.l.b16 %v1403
      %v1441 = vunpack.c.l.b16 %v1404
      %v1442 = vunpack.c.l.b16 %v1405
      %v1443 = vunpack.c.l.b16 %v1406
      %v1444 = vunpack.c.l.b16 %v1407
      %v1445 = vpack.c.b16 %v1430, %v1429
      %v1446 = vpack.c.b16 %v1432, %v1431
      %v1447 = vpack.c.b16 %v1434, %v1433
      %v1448 = vpack.c.b16 %v1436, %v1435
      %v1449 = vpack.c.b16 %v1438, %v1437
      %v1450 = vpack.c.b16 %v1440, %v1439
      %v1451 = vpack.c.b16 %v1442, %v1441
      %v1452 = vpack.c.b16 %v1444, %v1443
      %1461 = vmatpush.bf16.msra.mxu0 %v1452
      %1462 = vmatpush.bf16.msra.mxu0 %v1451
      %1463 = vmatpush.bf16.msra.mxu0 %v1450
      %1464 = vmatpush.bf16.msra.mxu0 %v1449
      %1465 = vmatpush.bf16.msra.mxu0 %v1448
      %1466 = vmatpush.bf16.msra.mxu0 %v1447
      %1467 = vmatpush.bf16.msra.mxu0 %v1446
      %1468 = vmatpush.bf16.msra.mxu0 %v1445
      %1469 = vmatmul.bf16.gmra.mxu0 %v558
      %v1470 = vpop.f32.mrf.mxu0
      %v1471 = vadd.f32 %v1411, %v1470
      %v1472 = vpop.f32.mrf.mxu0
      %1473 = vdwg.mxu0
      %v1474 = vmul.f32 %v1471, 0.17677669
      %s1475 = scalar_lea.vmem %s9, 192
      %v1476 = vld [vmem:[%s1475] sm:$0xf]
      %v1477 = vld [vmem:[%s1475 + $0x4] sm:$0xf]
      %v1478 = vld [vmem:[%s1475 + $0x8] sm:$0xf]
      %v1479 = vld [vmem:[%s1475 + $0xc] sm:$0xf]
      %v1480 = vld [vmem:[%s1475 + $0x10] sm:$0xf]
      %v1481 = vld [vmem:[%s1475 + $0x14] sm:$0xf]
      %v1482 = vld [vmem:[%s1475 + $0x18] sm:$0xf]
      %v1483 = vld [vmem:[%s1475 + $0x1c] sm:$0xf]
      %v1484 = vld [vmem:[%s1475 + $0x20] sm:$0xf]
      %v1485 = vld [vmem:[%s1475 + $0x24] sm:$0xf]
      %v1486 = vld [vmem:[%s1475 + $0x28] sm:$0xf]
      %v1487 = vld [vmem:[%s1475 + $0x2c] sm:$0xf]
      %v1488 = vld [vmem:[%s1475 + $0x30] sm:$0xf]
      %v1489 = vld [vmem:[%s1475 + $0x34] sm:$0xf]
      %v1490 = vld [vmem:[%s1475 + $0x38] sm:$0xf]
      %v1491 = vld [vmem:[%s1475 + $0x3c] sm:$0xf]
      %s1492 = scalar_lea.vmem %s10, 3
      %v1493 = vld [vmem:[%s1492] sm:$0x1]
      %v1495 = vperm.slane %v1493, 0
      %v1513 = vunpack.c.l.b16 %v1476
      %v1514 = vunpack.c.l.b16 %v1477
      %v1515 = vunpack.c.l.b16 %v1478
      %v1516 = vunpack.c.l.b16 %v1479
      %v1517 = vunpack.c.l.b16 %v1480
      %v1518 = vunpack.c.l.b16 %v1481
      %v1519 = vunpack.c.l.b16 %v1482
      %v1520 = vunpack.c.l.b16 %v1483
      %v1521 = vunpack.c.l.b16 %v1484
      %v1522 = vunpack.c.l.b16 %v1485
      %v1523 = vunpack.c.l.b16 %v1486
      %v1524 = vunpack.c.l.b16 %v1487
      %v1525 = vunpack.c.l.b16 %v1488
      %v1526 = vunpack.c.l.b16 %v1489
      %v1527 = vunpack.c.l.b16 %v1490
      %v1528 = vunpack.c.l.b16 %v1491
      %v1529 = vpack.c.b16 %v1514, %v1513
      %v1530 = vpack.c.b16 %v1516, %v1515
      %v1531 = vpack.c.b16 %v1518, %v1517
      %v1532 = vpack.c.b16 %v1520, %v1519
      %v1533 = vpack.c.b16 %v1522, %v1521
      %v1534 = vpack.c.b16 %v1524, %v1523
      %v1535 = vpack.c.b16 %v1526, %v1525
      %v1536 = vpack.c.b16 %v1528, %v1527
      %1545 = vmatpush.bf16.msra.mxu0 %v1536
      %1546 = vmatpush.bf16.msra.mxu0 %v1535
      %1547 = vmatpush.bf16.msra.mxu0 %v1534
      %1548 = vmatpush.bf16.msra.mxu0 %v1533
      %1549 = vmatpush.bf16.msra.mxu0 %v1532
      %1550 = vmatpush.bf16.msra.mxu0 %v1531
      %1551 = vmatpush.bf16.msra.mxu0 %v1530
      %1552 = vmatpush.bf16.msra.mxu0 %v1529
      %1553 = vmatmul.bf16.gmra.mxu0 %v559
      %v1554 = vpop.f32.mrf.mxu0
      %v1555 = vadd.f32 %v1495, %v1554
      %v1556 = vpop.f32.mrf.mxu0
      %v1557 = vadd.f32 %v1495, %v1556
      %1558 = vdwg.mxu0
      %v1559 = vpack.c.bf16 %v1474, %v1474
      %v1564 = vunpack.c.l.b16 %v686
      %v1565 = vunpack.c.l.b16 %v687
      %v1566 = vunpack.c.l.b16 %v688
      %v1567 = vunpack.c.l.b16 %v689
      %v1568 = vpack.c.b16 %v1565, %v1564
      %v1569 = vpack.c.b16 %v1567, %v1566
      %v1573 = vsel %vm872, %v1559, 0
      %1575 = vmatpush.bf16.msra.mxu0 0
      %1576 = vmatpush.bf16.msra.mxu0 0
      %1577 = vmatpush.bf16.msra.mxu0 0
      %1578 = vmatpush.bf16.msra.mxu0 0
      %1579 = vmatpush.bf16.msra.mxu0 0
      %1580 = vmatpush.bf16.msra.mxu0 0
      %1581 = vmatpush.bf16.msra.mxu0 %v1569
      %1582 = vmatpush.bf16.msra.mxu0 %v1568
      %1583 = vmatmul.bf16.gmra.mxu0 %v1573
      %v1584 = vpop.f32.mrf.mxu0
      %v1585 = vadd.f32 0.0, %v1584
      %v1586 = vpop.f32.mrf.mxu0
      %1587 = vdwg.mxu0
      %v1588 = vsel %vm694, %v1585, -1e+09
      %v1589 = vsel %vm890, %v1588, -inf
      %1590 = vmax.xlane.f32.xlu0 %v1589
      %v1591 = vpop.xlane.xlu0 %1590
      %v1592 = vsub.f32 %v1588, %v1591
      %v1593 = vmul.f32 %v1592, 1.442695
      %v1594 = vpow.pop %v1593
      %v1595 = vsel %vm890, %v1594, 0.0
      %1596 = vadd.xlane.f32.xlu0 %v1595
      %v1597 = vpop.xlane.xlu0 %1596
      %v1598 = vrcp.pop %v1597
      %v1599 = vmul.f32 %v1594, %v1598
      %v1600 = vpack.c.bf16 %v1599, %v1599
      %v1601 = vpack.c.bf16 %v1557, %v1555
      %v1603 = vsel %vm890, %v1600, 0
      %1605 = vmatpush.bf16.msra.mxu0 0
      %1606 = vmatpush.bf16.msra.mxu0 0
      %1607 = vmatpush.bf16.msra.mxu0 0
      %1608 = vmatpush.bf16.msra.mxu0 0
      %1609 = vmatpush.bf16.msra.mxu0 0
      %1610 = vmatpush.bf16.msra.mxu0 0
      %1611 = vmatpush.bf16.msra.mxu0 0
      %1612 = vmatpush.bf16.msra.mxu0 %v1601
      %1613 = vmatmul.bf16.gmra.mxu0 %v1603
      %v1614 = vpop.f32.mrf.mxu0
      %v1615 = vadd.f32 0.0, %v1614
      %v1616 = vpop.f32.mrf.mxu0
      %1617 = vdwg.mxu0
      %v1618 = vpack.c.bf16 %v1615, %v1615
      %1620 = vrot.lane.b32.xlu0 %v1618, 96
      %v1621 = vpop.permute.xlu0 %1620
      %vm1623 = vcmask 1044224
      %1624 = vst.msk [vmem:[#allocation2] sm:$0xf] %vm1623, %v1621
      %v1625 = vld [vmem:[#allocation2] sm:$0xf]
      %v1626 = vld [vmem:[%s11] sm:$0xf]
      %v1627 = vld [vmem:[%s11 + $0x4] sm:$0xf]
      %v1628 = vld [vmem:[%s11 + $0x8] sm:$0xf]
      %v1629 = vld [vmem:[%s11 + $0xc] sm:$0xf]
      %v1630 = vld [vmem:[%s11 + $0x10] sm:$0xf]
      %v1631 = vld [vmem:[%s11 + $0x14] sm:$0xf]
      %v1632 = vld [vmem:[%s11 + $0x18] sm:$0xf]
      %v1633 = vld [vmem:[%s11 + $0x1c] sm:$0xf]
      %v1634 = vld [vmem:[%s11 + $0x20] sm:$0xf]
      %v1635 = vld [vmem:[%s11 + $0x24] sm:$0xf]
      %v1636 = vld [vmem:[%s11 + $0x28] sm:$0xf]
      %v1637 = vld [vmem:[%s11 + $0x2c] sm:$0xf]
      %v1638 = vld [vmem:[%s11 + $0x30] sm:$0xf]
      %v1639 = vld [vmem:[%s11 + $0x34] sm:$0xf]
      %v1640 = vld [vmem:[%s11 + $0x38] sm:$0xf]
      %v1641 = vld [vmem:[%s11 + $0x3c] sm:$0xf]
      %v1642 = vld [vmem:[%s12] sm:$0x1]
      %v1644 = vperm.slane %v1642, 0
      %v1662 = vunpack.c.l.b16 %v1626
      %v1663 = vunpack.c.l.b16 %v1627
      %v1664 = vunpack.c.l.b16 %v1628
      %v1665 = vunpack.c.l.b16 %v1629
      %v1666 = vunpack.c.l.b16 %v1630
      %v1667 = vunpack.c.l.b16 %v1631
      %v1668 = vunpack.c.l.b16 %v1632
      %v1669 = vunpack.c.l.b16 %v1633
      %v1670 = vunpack.c.l.b16 %v1634
      %v1671 = vunpack.c.l.b16 %v1635
      %v1672 = vunpack.c.l.b16 %v1636
      %v1673 = vunpack.c.l.b16 %v1637
      %v1674 = vunpack.c.l.b16 %v1638
      %v1675 = vunpack.c.l.b16 %v1639
      %v1676 = vunpack.c.l.b16 %v1640
      %v1677 = vunpack.c.l.b16 %v1641
      %v1678 = vpack.c.b16 %v1663, %v1662
      %v1679 = vpack.c.b16 %v1665, %v1664
      %v1680 = vpack.c.b16 %v1667, %v1666
      %v1681 = vpack.c.b16 %v1669, %v1668
      %v1682 = vpack.c.b16 %v1671, %v1670
      %v1683 = vpack.c.b16 %v1673, %v1672
      %v1684 = vpack.c.b16 %v1675, %v1674
      %v1685 = vpack.c.b16 %v1677, %v1676
      %1694 = vmatpush.bf16.msra.mxu0 %v1685
      %1695 = vmatpush.bf16.msra.mxu0 %v1684
      %1696 = vmatpush.bf16.msra.mxu0 %v1683
      %1697 = vmatpush.bf16.msra.mxu0 %v1682
      %1698 = vmatpush.bf16.msra.mxu0 %v1681
      %1699 = vmatpush.bf16.msra.mxu0 %v1680
      %1700 = vmatpush.bf16.msra.mxu0 %v1679
      %1701 = vmatpush.bf16.msra.mxu0 %v1678
      %1702 = vmatmul.bf16.gmra.mxu0 %v1625
      %v1703 = vpop.f32.mrf.mxu0
      %v1704 = vadd.f32 %v1644, %v1703
      %v1705 = vpop.f32.mrf.mxu0
      %1706 = vdwg.mxu0
      %v1707 = vadd.f32 %v502, %v1704
      %1708 = vst [vmem:[%s500] sm:$0xff] %v1707
      %p1709 = scmp.lt.s32.totalorder %s28, 1
      %s1710 = scalar_select %p1709, %s28, 1
      %p1711 = scmp.lt.s32.totalorder %s29, 0
      %s1712 = scalar_select %p1711, %s29, 0
      %s1713 = sadd.s32 %s1712, %s1710
      %s1714 = smul.addr %s1713, 8
      %s1715 = scalar_lea.vmem %s13, %s1714
      // Predicated region
      $region73: #{decoder_forward.8} parent=71 // pred_check
        %p1716 = pneg %p346
      $region74: #{decoder_forward.8} parent=71 // pred_check_branch
        %1718 = sbr.rel (%p1716) target = $region76
      $region75: #{decoder_forward.8} parent=71 // pred_region
        _
      $region76: #{decoder_forward.8} parent=71 // pred_fallthru
        _
    $region72: #{decoder_forward.8} parent=5 // pred_fallthru
      _
    %p1719 = scmp.le.s32.totalorder 2, %s19
    // Predicated region
    $region77: #{decoder_forward.8} parent=5 // pred_check
      %p1720 = pneg %p1719
    $region78: #{decoder_forward.8} parent=5 // pred_check_branch
      %1722 = sbr.rel (%p1720) target = $region80
    $region79: #{decoder_forward.8} parent=5 // pred_region
      %s1723 = ssub.s32 %s19, 2
      // Predicated region
      $region81: #{decoder_forward.8} parent=79 // pred_check
        %p1724 = pneg %p352
      $region82: #{decoder_forward.8} parent=79 // pred_check_branch
        %1726 = sbr.rel (%p1724) target = $region84
      $region83: #{decoder_forward.8} parent=79 // pred_region
        %p1727 = scmp.lt.s32.totalorder %s30, 1
        %s1728 = scalar_select %p1727, %s30, 1
        %p1729 = scmp.lt.s32.totalorder %s31, 0
        %s1730 = scalar_select %p1729, %s31, 0
        %s1731 = sadd.s32 %s1730, %s1728
        %s1732 = smul.addr %s1731, 8
        %s1733 = scalar_lea.vmem %s13, %s1732
      $region84: #{decoder_forward.8} parent=79 // pred_fallthru
        _
    $region80: #{decoder_forward.8} parent=5 // pred_fallthru
      _
  $region6: #{decoder_forward.8} parent=0 // loop_footer
    %s23 = sadd.s32 1, %s19
  $region7: #{decoder_forward.8} parent=0 // loop_footer_branch
    %18 = sbr.rel target = $region3
  $region8: #{decoder_forward.8} parent=0 // loop_exit
    _

// kernel: decoder_forward.7
$region0: #{decoder_forward.7}
  #allocation0 [shape = 'u32[]', space=smem, size = 0x4, offset = 0x4, fixed_abs, tag = 'smem constant byte address 0x4 - core index']
  #allocation1 [shape = 'u32[72,128]{1,0:T(1,128)}', space=vmem, size = 0x9000, scoped, tag = 'internal scratch']
  #allocation2 [shape = 'bf16[8,128]{1,0:T(8,128)(2,1)}', space=vmem, size = 0x800, scoped, tag = 'scratch operand']
  %s0 = inlined_call_operand.vmem [shape: f32[2,8,128], index: 0, kind: input, shape index: {}]
  %s1 = inlined_call_operand.vmem [shape: f32[1,128], index: 1, kind: input, shape index: {}]
  %s2 = inlined_call_operand.vmem [shape: f32[1,128], index: 2, kind: input, shape index: {}]
  %s3 = inlined_call_operand.vmem [shape: bf16[4,128,32], index: 3, kind: input, shape index: {}]
  %s4 = inlined_call_operand.vmem [shape: f32[4,1,32], index: 4, kind: input, shape index: {}]
  %s5 = inlined_call_operand.vmem [shape: bf16[128,128], index: 5, kind: input, shape index: {}]
  %s6 = inlined_call_operand.vmem [shape: f32[1,128], index: 6, kind: input, shape index: {}]
  %s7 = inlined_call_operand.vmem [shape: bf16[4,128,32], index: 7, kind: input, shape index: {}]
  %s8 = inlined_call_operand.vmem [shape: f32[4,1,32], index: 8, kind: input, shape index: {}]
  %s9 = inlined_call_operand.vmem [shape: bf16[128,128], index: 9, kind: input, shape index: {}]
  %s10 = inlined_call_operand.vmem [shape: f32[1,128], index: 10, kind: input, shape index: {}]
  %s11 = inlined_call_operand.vmem [shape: f32[2,8,128], index: 11, kind: output, shape index: {}]
  %s12 = sld [smem:[#allocation0]]
  $region77: #{decoder_forward.7} parent=0
    _
  %s14 = ssub.s32 1, %s12
  %s15 = scalar_select 0, %s14, %s12
  loop: start=0, step=1, limit=4
  $region2: #{decoder_forward.7} parent=0 // loop_pre_header
    _
  $region3: #{decoder_forward.7} parent=0 // loop_header
    %s17 = sphi 0, %s21
    %p18 = scmp.ge.s32.totalorder %s17, 4
    %s24 = sphi 0, %s36
    %s25 = sphi 0, %s32
    %s26 = sphi 0, %s24
    %s27 = sphi 0, %s25
    %s28 = sphi 0, %s26
    %s29 = sphi 0, %s27
    %s39 = sphi 0, %s41
    %s42 = sphi 0, %s39
    %s43 = sphi 0, %s42
    %s59 = sphi 0, %s43
    %s63 = sphi 0, %s63
    %s65 = sphi 0, %s63
    %s66 = sphi 0, %s65
    %s80 = sphi 0, %s66
    %s84 = sphi 0, %s84
    %s86 = sphi 0, %s84
    %s87 = sphi 0, %s86
    %s101 = sphi 0, %s87
    %s105 = sphi 0, %s105
    %s107 = sphi 0, %s105
    %s108 = sphi 0, %s107
    %s122 = sphi 0, %s108
    %s126 = sphi 0, %s126
    %s128 = sphi 0, %s126
    %s129 = sphi 0, %s128
    %s143 = sphi 0, %s129
    %s147 = sphi 0, %s147
    %s149 = sphi 0, %s147
    %s150 = sphi 0, %s149
    %s164 = sphi 0, %s150
    %s168 = sphi 0, %s168
    %s170 = sphi 0, %s168
    %s171 = sphi 0, %s170
    %s185 = sphi 0, %s171
    %s189 = sphi 0, %s189
    %s191 = sphi 0, %s189
    %s192 = sphi 0, %s191
    %s206 = sphi 0, %s192
    %s210 = sphi 0, %s210
    %s212 = sphi 0, %s210
    %s213 = sphi 0, %s212
    %s227 = sphi 0, %s213
    %s231 = sphi 0, %s231
    %s233 = sphi 0, %s231
    %s234 = sphi 0, %s233
    %s248 = sphi 0, %s234
    %s252 = sphi 0, %s252
    %s254 = sphi 0, %s252
    %s255 = sphi 0, %s254
    %s269 = sphi 0, %s255
    %s277 = sphi 0, %s279
    %s280 = sphi 0, %s277
    %s281 = sphi 0, %s280
    %s297 = sphi 0, %s281
  $region4: #{decoder_forward.7} parent=0 // loop_header_branch
    %20 = sbr.rel (%p18) target = $region8
  $region5: #{decoder_forward.7} parent=0 // loop_body
    %s22 = ssub.s32 %s17, 1
    %s23 = ssub.s32 %s17, 2
    %s30 = sadd.s32 1, %s25
    %p31 = scmp.ge.s32.totalorder %s30, 1
    %s32 = scalar_select %p31, 0, %s30
    %s33 = sadd.s32 1, %s24
    %s34 = scalar_select %p31, %s33, %s24
    %p35 = scmp.ge.s32.totalorder %s34, 2
    %s36 = scalar_select %p35, 0, %s34
    %s37 = ssub.s32 %s24, %s36
    %p38 = scmp.eq.s32.totalorder %s37, 0
    %s40 = sadd.s32 %s39, 1
    %s41 = scalar_select %p38, %s39, %s40
    %p44 = pneg %p38
    %p45 = scmp.eq.s32.totalorder %s17, 1
    %p46 = por %p44, %p45
    %p47 = scmp.ne.s32.totalorder %s39, %s42
    %p48 = scmp.eq.s32.totalorder %s17, 0
    %p49 = por %p47, %p48
    %p50 = scmp.ne.s32.totalorder %s39, %s42
    %p51 = scmp.eq.s32.totalorder %s22, 1
    %p52 = por %p50, %p51
    %p53 = scmp.ne.s32.totalorder %s42, %s43
    %p54 = scmp.eq.s32.totalorder %s22, 0
    %p55 = por %p53, %p54
    %p56 = scmp.ne.s32.totalorder %s42, %s43
    %p57 = scmp.eq.s32.totalorder %s23, 1
    %p58 = por %p56, %p57
    %p60 = scmp.ne.s32.totalorder %s43, %s59
    %p61 = scmp.eq.s32.totalorder %s23, 0
    %p62 = por %p60, %p61
    %s64 = sadd.s32 %s63, 1
    %p67 = scmp.eq.s32.totalorder %s17, 1
    %p68 = scmp.ne.s32.totalorder %s63, %s65
    %p69 = scmp.eq.s32.totalorder %s17, 0
    %p70 = por %p68, %p69
    %p71 = scmp.ne.s32.totalorder %s63, %s65
    %p72 = scmp.eq.s32.totalorder %s22, 1
    %p73 = por %p71, %p72
    %p74 = scmp.ne.s32.totalorder %s65, %s66
    %p75 = scmp.eq.s32.totalorder %s22, 0
    %p76 = por %p74, %p75
    %p77 = scmp.ne.s32.totalorder %s65, %s66
    %p78 = scmp.eq.s32.totalorder %s23, 1
    %p79 = por %p77, %p78
    %p81 = scmp.ne.s32.totalorder %s66, %s80
    %p82 = scmp.eq.s32.totalorder %s23, 0
    %p83 = por %p81, %p82
    %s85 = sadd.s32 %s84, 1
    %p88 = scmp.eq.s32.totalorder %s17, 1
    %p89 = scmp.ne.s32.totalorder %s84, %s86
    %p90 = scmp.eq.s32.totalorder %s17, 0
    %p91 = por %p89, %p90
    %p92 = scmp.ne.s32.totalorder %s84, %s86
    %p93 = scmp.eq.s32.totalorder %s22, 1
    %p94 = por %p92, %p93
    %p95 = scmp.ne.s32.totalorder %s86, %s87
    %p96 = scmp.eq.s32.totalorder %s22, 0
    %p97 = por %p95, %p96
    %p98 = scmp.ne.s32.totalorder %s86, %s87
    %p99 = scmp.eq.s32.totalorder %s23, 1
    %p100 = por %p98, %p99
    %p102 = scmp.ne.s32.totalorder %s87, %s101
    %p103 = scmp.eq.s32.totalorder %s23, 0
    %p104 = por %p102, %p103
    %s106 = sadd.s32 %s105, 1
    %p109 = scmp.eq.s32.totalorder %s17, 1
    %p110 = scmp.ne.s32.totalorder %s105, %s107
    %p111 = scmp.eq.s32.totalorder %s17, 0
    %p112 = por %p110, %p111
    %p113 = scmp.ne.s32.totalorder %s105, %s107
    %p114 = scmp.eq.s32.totalorder %s22, 1
    %p115 = por %p113, %p114
    %p116 = scmp.ne.s32.totalorder %s107, %s108
    %p117 = scmp.eq.s32.totalorder %s22, 0
    %p118 = por %p116, %p117
    %p119 = scmp.ne.s32.totalorder %s107, %s108
    %p120 = scmp.eq.s32.totalorder %s23, 1
    %p121 = por %p119, %p120
    %p123 = scmp.ne.s32.totalorder %s108, %s122
    %p124 = scmp.eq.s32.totalorder %s23, 0
    %p125 = por %p123, %p124
    %s127 = sadd.s32 %s126, 1
    %p130 = scmp.eq.s32.totalorder %s17, 1
    %p131 = scmp.ne.s32.totalorder %s126, %s128
    %p132 = scmp.eq.s32.totalorder %s17, 0
    %p133 = por %p131, %p132
    %p134 = scmp.ne.s32.totalorder %s126, %s128
    %p135 = scmp.eq.s32.totalorder %s22, 1
    %p136 = por %p134, %p135
    %p137 = scmp.ne.s32.totalorder %s128, %s129
    %p138 = scmp.eq.s32.totalorder %s22, 0
    %p139 = por %p137, %p138
    %p140 = scmp.ne.s32.totalorder %s128, %s129
    %p141 = scmp.eq.s32.totalorder %s23, 1
    %p142 = por %p140, %p141
    %p144 = scmp.ne.s32.totalorder %s129, %s143
    %p145 = scmp.eq.s32.totalorder %s23, 0
    %p146 = por %p144, %p145
    %s148 = sadd.s32 %s147, 1
    %p151 = scmp.eq.s32.totalorder %s17, 1
    %p152 = scmp.ne.s32.totalorder %s147, %s149
    %p153 = scmp.eq.s32.totalorder %s17, 0
    %p154 = por %p152, %p153
    %p155 = scmp.ne.s32.totalorder %s147, %s149
    %p156 = scmp.eq.s32.totalorder %s22, 1
    %p157 = por %p155, %p156
    %p158 = scmp.ne.s32.totalorder %s149, %s150
    %p159 = scmp.eq.s32.totalorder %s22, 0
    %p160 = por %p158, %p159
    %p161 = scmp.ne.s32.totalorder %s149, %s150
    %p162 = scmp.eq.s32.totalorder %s23, 1
    %p163 = por %p161, %p162
    %p165 = scmp.ne.s32.totalorder %s150, %s164
    %p166 = scmp.eq.s32.totalorder %s23, 0
    %p167 = por %p165, %p166
    %s169 = sadd.s32 %s168, 1
    %p172 = scmp.eq.s32.totalorder %s17, 1
    %p173 = scmp.ne.s32.totalorder %s168, %s170
    %p174 = scmp.eq.s32.totalorder %s17, 0
    %p175 = por %p173, %p174
    %p176 = scmp.ne.s32.totalorder %s168, %s170
    %p177 = scmp.eq.s32.totalorder %s22, 1
    %p178 = por %p176, %p177
    %p179 = scmp.ne.s32.totalorder %s170, %s171
    %p180 = scmp.eq.s32.totalorder %s22, 0
    %p181 = por %p179, %p180
    %p182 = scmp.ne.s32.totalorder %s170, %s171
    %p183 = scmp.eq.s32.totalorder %s23, 1
    %p184 = por %p182, %p183
    %p186 = scmp.ne.s32.totalorder %s171, %s185
    %p187 = scmp.eq.s32.totalorder %s23, 0
    %p188 = por %p186, %p187
    %s190 = sadd.s32 %s189, 1
    %p193 = scmp.eq.s32.totalorder %s17, 1
    %p194 = scmp.ne.s32.totalorder %s189, %s191
    %p195 = scmp.eq.s32.totalorder %s17, 0
    %p196 = por %p194, %p195
    %p197 = scmp.ne.s32.totalorder %s189, %s191
    %p198 = scmp.eq.s32.totalorder %s22, 1
    %p199 = por %p197, %p198
    %p200 = scmp.ne.s32.totalorder %s191, %s192
    %p201 = scmp.eq.s32.totalorder %s22, 0
    %p202 = por %p200, %p201
    %p203 = scmp.ne.s32.totalorder %s191, %s192
    %p204 = scmp.eq.s32.totalorder %s23, 1
    %p205 = por %p203, %p204
    %p207 = scmp.ne.s32.totalorder %s192, %s206
    %p208 = scmp.eq.s32.totalorder %s23, 0
    %p209 = por %p207, %p208
    %s211 = sadd.s32 %s210, 1
    %p214 = scmp.eq.s32.totalorder %s17, 1
    %p215 = scmp.ne.s32.totalorder %s210, %s212
    %p216 = scmp.eq.s32.totalorder %s17, 0
    %p217 = por %p215, %p216
    %p218 = scmp.ne.s32.totalorder %s210, %s212
    %p219 = scmp.eq.s32.totalorder %s22, 1
    %p220 = por %p218, %p219
    %p221 = scmp.ne.s32.totalorder %s212, %s213
    %p222 = scmp.eq.s32.totalorder %s22, 0
    %p223 = por %p221, %p222
    %p224 = scmp.ne.s32.totalorder %s212, %s213
    %p225 = scmp.eq.s32.totalorder %s23, 1
    %p226 = por %p224, %p225
    %p228 = scmp.ne.s32.totalorder %s213, %s227
    %p229 = scmp.eq.s32.totalorder %s23, 0
    %p230 = por %p228, %p229
    %s232 = sadd.s32 %s231, 1
    %p235 = scmp.eq.s32.totalorder %s17, 1
    %p236 = scmp.ne.s32.totalorder %s231, %s233
    %p237 = scmp.eq.s32.totalorder %s17, 0
    %p238 = por %p236, %p237
    %p239 = scmp.ne.s32.totalorder %s231, %s233
    %p240 = scmp.eq.s32.totalorder %s22, 1
    %p241 = por %p239, %p240
    %p242 = scmp.ne.s32.totalorder %s233, %s234
    %p243 = scmp.eq.s32.totalorder %s22, 0
    %p244 = por %p242, %p243
    %p245 = scmp.ne.s32.totalorder %s233, %s234
    %p246 = scmp.eq.s32.totalorder %s23, 1
    %p247 = por %p245, %p246
    %p249 = scmp.ne.s32.totalorder %s234, %s248
    %p250 = scmp.eq.s32.totalorder %s23, 0
    %p251 = por %p249, %p250
    %s253 = sadd.s32 %s252, 1
    %p256 = scmp.eq.s32.totalorder %s17, 1
    %p257 = scmp.ne.s32.totalorder %s252, %s254
    %p258 = scmp.eq.s32.totalorder %s17, 0
    %p259 = por %p257, %p258
    %p260 = scmp.ne.s32.totalorder %s252, %s254
    %p261 = scmp.eq.s32.totalorder %s22, 1
    %p262 = por %p260, %p261
    %p263 = scmp.ne.s32.totalorder %s254, %s255
    %p264 = scmp.eq.s32.totalorder %s22, 0
    %p265 = por %p263, %p264
    %p266 = scmp.ne.s32.totalorder %s254, %s255
    %p267 = scmp.eq.s32.totalorder %s23, 1
    %p268 = por %p266, %p267
    %p270 = scmp.ne.s32.totalorder %s255, %s269
    %p271 = scmp.eq.s32.totalorder %s23, 0
    %p272 = por %p270, %p271
    %s273 = ssub.s32 %s24, %s36
    %s274 = ssub.s32 %s25, %s32
    %s275 = sor.u32 %s273, %s274
    %p276 = scmp.eq.s32.totalorder %s275, 0
    %s278 = sadd.s32 %s277, 1
    %s279 = scalar_select %p276, %s277, %s278
    %p282 = pneg %p276
    %p283 = scmp.eq.s32.totalorder %s17, 1
    %p284 = por %p282, %p283
    %p285 = scmp.ne.s32.totalorder %s277, %s280
    %p286 = scmp.eq.s32.totalorder %s17, 0
    %p287 = por %p285, %p286
    %p288 = scmp.ne.s32.totalorder %s277, %s280
    %p289 = scmp.eq.s32.totalorder %s22, 1
    %p290 = por %p288, %p289
    %p291 = scmp.ne.s32.totalorder %s280, %s281
    %p292 = scmp.eq.s32.totalorder %s22, 0
    %p293 = por %p291, %p292
    %p294 = scmp.ne.s32.totalorder %s280, %s281
    %p295 = scmp.eq.s32.totalorder %s23, 1
    %p296 = por %p294, %p295
    %p298 = scmp.ne.s32.totalorder %s281, %s297
    %p299 = scmp.eq.s32.totalorder %s23, 0
    %p300 = por %p298, %p299
    %p301 = scmp.le.s32.totalorder 1, %s17
    %p302 = scmp.lt.s32.totalorder %s17, 3
    %p303 = pnand %p301, %p302
    %p304 = pneg %p303
    // Predicated region
    $region9: #{decoder_forward.7} parent=5 // pred_check
      _
    $region10: #{decoder_forward.7} parent=5 // pred_check_branch
      %306 = sbr.rel (%p303) target = $region12
    $region11: #{decoder_forward.7} parent=5 // pred_region
      %s307 = ssub.s32 %s17, 1
      // Predicated region
      $region13: #{decoder_forward.7} parent=11 // pred_check
        %p308 = pneg %p76
      $region14: #{decoder_forward.7} parent=11 // pred_check_branch
        %310 = sbr.rel (%p308) target = $region16
      $region15: #{decoder_forward.7} parent=11 // pred_region
        _
      $region16: #{decoder_forward.7} parent=11 // pred_fallthru
        _
      // Predicated region
      $region17: #{decoder_forward.7} parent=11 // pred_check
        %p311 = pneg %p97
      $region18: #{decoder_forward.7} parent=11 // pred_check_branch
        %313 = sbr.rel (%p311) target = $region20
      $region19: #{decoder_forward.7} parent=11 // pred_region
        _
      $region20: #{decoder_forward.7} parent=11 // pred_fallthru
        _
      // Predicated region
      $region21: #{decoder_forward.7} parent=11 // pred_check
        %p314 = pneg %p118
      $region22: #{decoder_forward.7} parent=11 // pred_check_branch
        %316 = sbr.rel (%p314) target = $region24
      $region23: #{decoder_forward.7} parent=11 // pred_region
        _
      $region24: #{decoder_forward.7} parent=11 // pred_fallthru
        _
      // Predicated region
      $region25: #{decoder_forward.7} parent=11 // pred_check
        %p317 = pneg %p139
      $region26: #{decoder_forward.7} parent=11 // pred_check_branch
        %319 = sbr.rel (%p317) target = $region28
      $region27: #{decoder_forward.7} parent=11 // pred_region
        _
      $region28: #{decoder_forward.7} parent=11 // pred_fallthru
        _
      // Predicated region
      $region29: #{decoder_forward.7} parent=11 // pred_check
        %p320 = pneg %p160
      $region30: #{decoder_forward.7} parent=11 // pred_check_branch
        %322 = sbr.rel (%p320) target = $region32
      $region31: #{decoder_forward.7} parent=11 // pred_region
        _
      $region32: #{decoder_forward.7} parent=11 // pred_fallthru
        _
      // Predicated region
      $region33: #{decoder_forward.7} parent=11 // pred_check
        %p323 = pneg %p181
      $region34: #{decoder_forward.7} parent=11 // pred_check_branch
        %325 = sbr.rel (%p323) target = $region36
      $region35: #{decoder_forward.7} parent=11 // pred_region
        _
      $region36: #{decoder_forward.7} parent=11 // pred_fallthru
        _
      // Predicated region
      $region37: #{decoder_forward.7} parent=11 // pred_check
        %p326 = pneg %p202
      $region38: #{decoder_forward.7} parent=11 // pred_check_branch
        %328 = sbr.rel (%p326) target = $region40
      $region39: #{decoder_forward.7} parent=11 // pred_region
        _
      $region40: #{decoder_forward.7} parent=11 // pred_fallthru
        _
      // Predicated region
      $region41: #{decoder_forward.7} parent=11 // pred_check
        %p329 = pneg %p223
      $region42: #{decoder_forward.7} parent=11 // pred_check_branch
        %331 = sbr.rel (%p329) target = $region44
      $region43: #{decoder_forward.7} parent=11 // pred_region
        _
      $region44: #{decoder_forward.7} parent=11 // pred_fallthru
        _
      // Predicated region
      $region45: #{decoder_forward.7} parent=11 // pred_check
        %p332 = pneg %p244
      $region46: #{decoder_forward.7} parent=11 // pred_check_branch
        %334 = sbr.rel (%p332) target = $region48
      $region47: #{decoder_forward.7} parent=11 // pred_region
        _
      $region48: #{decoder_forward.7} parent=11 // pred_fallthru
        _
      // Predicated region
      $region49: #{decoder_forward.7} parent=11 // pred_check
        %p335 = pneg %p265
      $region50: #{decoder_forward.7} parent=11 // pred_check_branch
        %337 = sbr.rel (%p335) target = $region52
      $region51: #{decoder_forward.7} parent=11 // pred_region
        _
      $region52: #{decoder_forward.7} parent=11 // pred_fallthru
        _
    $region12: #{decoder_forward.7} parent=5 // pred_fallthru
      _
    %p338 = scmp.lt.s32.totalorder %s17, 2
    // Predicated region
    $region53: #{decoder_forward.7} parent=5 // pred_check
      %p339 = pneg %p338
    $region54: #{decoder_forward.7} parent=5 // pred_check_branch
      %341 = sbr.rel (%p339) target = $region56
    $region55: #{decoder_forward.7} parent=5 // pred_region
      // Predicated region
      $region57: #{decoder_forward.7} parent=55 // pred_check
        %p342 = pneg %p49
      $region58: #{decoder_forward.7} parent=55 // pred_check_branch
        %344 = sbr.rel (%p342) target = $region60
      $region59: #{decoder_forward.7} parent=55 // pred_region
        %p345 = scmp.lt.s32.totalorder %s24, 1
        %s346 = scalar_select %p345, %s24, 1
        %s347 = smul.addr %s346, 8
        %s348 = scalar_lea.vmem %s0, %s347
      $region60: #{decoder_forward.7} parent=55 // pred_fallthru
        _
    $region56: #{decoder_forward.7} parent=5 // pred_fallthru
      _
    %p349 = scmp.le.s32.totalorder 1, %s17
    %p350 = scmp.lt.s32.totalorder %s17, 3
    %p351 = pnand %p349, %p350
    %p352 = pneg %p351
    // Predicated region
    $region61: #{decoder_forward.7} parent=5 // pred_check
      _
    $region62: #{decoder_forward.7} parent=5 // pred_check_branch
      %354 = sbr.rel (%p351) target = $region64
    $region63: #{decoder_forward.7} parent=5 // pred_region
      %s355 = ssub.s32 %s17, 1
      %p356 = scmp.lt.s32.totalorder %s26, 1
      %s357 = scalar_select %p356, %s26, 1
      %s358 = smul.addr %s357, 8
      %s359 = scalar_lea.vmem %s0, %s358
      %p360 = pneg %p55
      %p361 = pneg %p52
      %p362 = pneg %p76
      %p363 = pneg %p73
      %p364 = pneg %p97
      %p365 = pneg %p94
      %p366 = pneg %p118
      %p367 = pneg %p115
      %p368 = pneg %p139
      %p369 = pneg %p136
      %p370 = pneg %p160
      %p371 = pneg %p157
      %p372 = pneg %p181
      %p373 = pneg %p178
      %p374 = pneg %p202
      %p375 = pneg %p199
      %p376 = pneg %p223
      %p377 = pneg %p220
      %p378 = pneg %p244
      %p379 = pneg %p241
      %p380 = pneg %p265
      %p381 = pneg %p262
      %p382 = pneg %p293
      %p383 = pneg %p290
      %p384 = scmp.lt.s32.totalorder %s26, 1
      %s385 = scalar_select %p384, %s26, 1
      %p386 = scmp.lt.s32.totalorder %s27, 0
      %s387 = scalar_select %p386, %s27, 0
      %s388 = sadd.s32 %s387, %s385
      %s389 = smul.addr %s388, 8
      %s390 = scalar_lea.vmem %s11, %s389
      %p391 = scmp.lt.s32.totalorder %s26, 1
      %s392 = scalar_select %p391, %s26, 1
      %s393 = smul.addr %s392, 8
      %s394 = scalar_lea.vmem %s0, %s393
      %p395 = scmp.lt.s32.totalorder %s26, 1
      %s396 = scalar_select %p395, %s26, 1
      %p397 = scmp.lt.s32.totalorder %s27, 0
      %s398 = scalar_select %p397, %s27, 0
      %s399 = sadd.s32 %s398, %s396
      %s400 = smul.addr %s399, 8
      %s401 = scalar_lea.vmem %s11, %s400
      %v403 = vld [vmem:[%s394] sm:$0xff]
      %v404 = vld [vmem:[%s1] sm:$0x1]
      %v405 = vld [vmem:[%s2] sm:$0x1]
      %406 = vadd.xlane.f32.xlu0 %v403
      %v407 = vpop.xlane.xlu0 %406
      %v408 = vrcp.pop 128.0
      %v409 = vmul.f32 128.0, %v408
      %v410 = vsub.f32 1.0, %v409
      %v411 = vmul.f32 %v408, %v410
      %v412 = vadd.f32 %v408, %v411
      %vm413 = vweird.f32 %v408
      %v414 = vsel %vm413, %v408, %v412
      %v415 = vmul.f32 %v407, %v414
      %v416 = vsub.f32 %v403, %v415
      %v417 = vmul.f32 %v416, %v416
      %418 = vadd.xlane.f32.xlu0 %v417
      %v419 = vpop.xlane.xlu0 %418
      %v420 = vmul.f32 %v419, 0.007874016
      %v422 = vperm.slane %v404, 0
      %v424 = vmul.f32 %v422, %v416
      %v425 = vrsqrt.pop %v420
      %v426 = vmul.f32 %v425, %v420
      %v427 = vmul.f32 %v426, %v425
      %v428 = vmul.f32 0.5, %v427
      %v429 = vsub.f32 1.5, %v428
      %v430 = vmul.f32 %v425, %v429
      %v431 = vmul.f32 %v420, %v430
      %vm432 = vcmp.eq.f32.partialorder %v420, inf
      %v433 = vsel %vm432, %v420, %v431
      %vm434 = vcmp.eq.f32.partialorder %v420, 0.0
      %v435 = vand.u32 %v420, 2147483648
      %v436 = vsel %vm434, %v435, %v433
      %v437 = vadd.f32 %v436, 1e-06
      %v438 = vrcp.pop %v437
      %v439 = vmul.f32 %v437, %v438
      %v440 = vsub.f32 1.0, %v439
      %v441 = vmul.f32 %v438, %v440
      %v442 = vadd.f32 %v438, %v441
      %vm443 = vweird.f32 %v437
      %vm444 = vweird.f32 %v438
      %vm445 = vmor %vm443, %vm444
      %v446 = vsel %vm445, %v438, %v442
      %v447 = vand.u32 2147483647, %v437
      %vm448 = vcmp.eq.f32.partialorder %v447, 8.507059e+37
      %v449 = vand.u32 %v437, 2147483648
      %v450 = vor.u32 1.1754944e-38, %v449
      %v451 = vsel %vm448, %v450, %v446
      %v452 = vmul.f32 %v424, %v451
      %v454 = vperm.slane %v405, 0
      %v456 = vadd.f32 %v452, %v454
      %v457 = vpack.c.bf16 %v456, %v456
      %v458 = vld [vmem:[%s5] sm:$0xf]
      %v459 = vld [vmem:[%s5 + $0x4] sm:$0xf]
      %v460 = vld [vmem:[%s5 + $0x8] sm:$0xf]
      %v461 = vld [vmem:[%s5 + $0xc] sm:$0xf]
      %v462 = vld [vmem:[%s5 + $0x10] sm:$0xf]
      %v463 = vld [vmem:[%s5 + $0x14] sm:$0xf]
      %v464 = vld [vmem:[%s5 + $0x18] sm:$0xf]
      %v465 = vld [vmem:[%s5 + $0x1c] sm:$0xf]
      %v466 = vld [vmem:[%s5 + $0x20] sm:$0xf]
      %v467 = vld [vmem:[%s5 + $0x24] sm:$0xf]
      %v468 = vld [vmem:[%s5 + $0x28] sm:$0xf]
      %v469 = vld [vmem:[%s5 + $0x2c] sm:$0xf]
      %v470 = vld [vmem:[%s5 + $0x30] sm:$0xf]
      %v471 = vld [vmem:[%s5 + $0x34] sm:$0xf]
      %v472 = vld [vmem:[%s5 + $0x38] sm:$0xf]
      %v473 = vld [vmem:[%s5 + $0x3c] sm:$0xf]
      %v474 = vld [vmem:[%s6] sm:$0x1]
      %v476 = vperm.slane %v474, 0
      %v494 = vunpack.c.l.b16 %v458
      %v495 = vunpack.c.l.b16 %v459
      %v496 = vunpack.c.l.b16 %v460
      %v497 = vunpack.c.l.b16 %v461
      %v498 = vunpack.c.l.b16 %v462
      %v499 = vunpack.c.l.b16 %v463
      %v500 = vunpack.c.l.b16 %v464
      %v501 = vunpack.c.l.b16 %v465
      %v502 = vunpack.c.l.b16 %v466
      %v503 = vunpack.c.l.b16 %v467
      %v504 = vunpack.c.l.b16 %v468
      %v505 = vunpack.c.l.b16 %v469
      %v506 = vunpack.c.l.b16 %v470
      %v507 = vunpack.c.l.b16 %v471
      %v508 = vunpack.c.l.b16 %v472
      %v509 = vunpack.c.l.b16 %v473
      %v510 = vpack.c.b16 %v495, %v494
      %v511 = vpack.c.b16 %v497, %v496
      %v512 = vpack.c.b16 %v499, %v498
      %v513 = vpack.c.b16 %v501, %v500
      %v514 = vpack.c.b16 %v503, %v502
      %v515 = vpack.c.b16 %v505, %v504
      %v516 = vpack.c.b16 %v507, %v506
      %v517 = vpack.c.b16 %v509, %v508
      %526 = vmatpush.bf16.msra.mxu0 %v517
      %527 = vmatpush.bf16.msra.mxu0 %v516
      %528 = vmatpush.bf16.msra.mxu0 %v515
      %529 = vmatpush.bf16.msra.mxu0 %v514
      %530 = vmatpush.bf16.msra.mxu0 %v513
      %531 = vmatpush.bf16.msra.mxu0 %v512
      %532 = vmatpush.bf16.msra.mxu0 %v511
      %533 = vmatpush.bf16.msra.mxu0 %v510
      %534 = vmatmul.bf16.gmra.mxu0 %v457
      %v535 = vpop.f32.mrf.mxu0
      %v536 = vadd.f32 %v476, %v535
      %v537 = vpop.f32.mrf.mxu0
      %538 = vdwg.mxu0
      %539 = vxpose.xlu0.b32.start [1/16] %v536, 128
      %540 = vxpose.xlu0.b32.cont [2/16] 0.0, 128
      %541 = vxpose.xlu0.b32.cont [3/16] 0.0, 128
      %542 = vxpose.xlu0.b32.cont [4/16] 0.0, 128
      %543 = vxpose.xlu0.b32.cont [5/16] 0.0, 128
      %544 = vxpose.xlu0.b32.cont [6/16] 0.0, 128
      %545 = vxpose.xlu0.b32.cont [7/16] 0.0, 128
      %546 = vxpose.xlu0.b32.cont [8/16] 0.0, 128
      %547 = vxpose.xlu0.b32.cont [9/16] 0.0, 128
      %548 = vxpose.xlu0.b32.cont [10/16] 0.0, 128
      %549 = vxpose.xlu0.b32.cont [11/16] 0.0, 128
      %550 = vxpose.xlu0.b32.cont [12/16] 0.0, 128
      %551 = vxpose.xlu0.b32.cont [13/16] 0.0, 128
      %552 = vxpose.xlu0.b32.cont [14/16] 0.0, 128
      %553 = vxpose.xlu0.b32.cont [15/16] 0.0, 128
      %554 = vxpose.xlu0.b32.end [16/16] 0.0, 128
      %v555 = vpop.trf.xlu0
      %v556 = vpop.trf.xlu0
      %v557 = vpop.trf.xlu0
      %v558 = vpop.trf.xlu0
      %v559 = vpop.trf.xlu0
      %v560 = vpop.trf.xlu0
      %v561 = vpop.trf.xlu0
      %v562 = vpop.trf.xlu0
      %v563 = vpop.trf.xlu0
      %v564 = vpop.trf.xlu0
      %v565 = vpop.trf.xlu0
      %v566 = vpop.trf.xlu0
      %v567 = vpop.trf.xlu0
      %v568 = vpop.trf.xlu0
      %v569 = vpop.trf.xlu0
      %v570 = vpop.trf.xlu0
      %v571 = vpack.c.bf16 %v555, %v555
      %v572 = vpack.c.bf16 %v556, %v556
      %v573 = vpack.c.bf16 %v557, %v557
      %v574 = vpack.c.bf16 %v558, %v558
      %v575 = vpack.c.bf16 %v559, %v559
      %v576 = vpack.c.bf16 %v560, %v560
      %v577 = vpack.c.bf16 %v561, %v561
      %v578 = vpack.c.bf16 %v562, %v562
      %v579 = vpack.c.bf16 %v563, %v563
      %v580 = vpack.c.bf16 %v564, %v564
      %v581 = vpack.c.bf16 %v565, %v565
      %v582 = vpack.c.bf16 %v566, %v566
      %v583 = vpack.c.bf16 %v567, %v567
      %v584 = vpack.c.bf16 %v568, %v568
      %v585 = vpack.c.bf16 %v569, %v569
      %v586 = vpack.c.bf16 %v570, %v570
      %v587 = vlaneseq
      %v588 = vshrl.u32 %v587, 7
      %s589 = smul.u32 %s27, 8
      %v590 = vstv %s589
      %v591 = vadd.s32 %v588, %v590
      %v592 = vlaneseq
      %v593 = vand.u32 %v592, 127
      %vm594 = vcmp.le.s32.totalorder %v593, %v591
      %v595 = vld [vmem:[%s3] sm:$0xf]
      %v596 = vld [vmem:[%s3 + $0x4] sm:$0xf]
      %v597 = vld [vmem:[%s3 + $0x8] sm:$0xf]
      %v598 = vld [vmem:[%s3 + $0xc] sm:$0xf]
      %v599 = vld [vmem:[%s3 + $0x10] sm:$0xf]
      %v600 = vld [vmem:[%s3 + $0x14] sm:$0xf]
      %v601 = vld [vmem:[%s3 + $0x18] sm:$0xf]
      %v602 = vld [vmem:[%s3 + $0x1c] sm:$0xf]
      %v603 = vld [vmem:[%s3 + $0x20] sm:$0xf]
      %v604 = vld [vmem:[%s3 + $0x24] sm:$0xf]
      %v605 = vld [vmem:[%s3 + $0x28] sm:$0xf]
      %v606 = vld [vmem:[%s3 + $0x2c] sm:$0xf]
      %v607 = vld [vmem:[%s3 + $0x30] sm:$0xf]
      %v608 = vld [vmem:[%s3 + $0x34] sm:$0xf]
      %v609 = vld [vmem:[%s3 + $0x38] sm:$0xf]
      %v610 = vld [vmem:[%s3 + $0x3c] sm:$0xf]
      %v611 = vld [vmem:[%s4] sm:$0x1]
      %v613 = vperm.slane %v611, 0
      %v631 = vunpack.c.l.b16 %v595
      %v632 = vunpack.c.l.b16 %v596
      %v633 = vunpack.c.l.b16 %v597
      %v634 = vunpack.c.l.b16 %v598
      %v635 = vunpack.c.l.b16 %v599
      %v636 = vunpack.c.l.b16 %v600
      %v637 = vunpack.c.l.b16 %v601
      %v638 = vunpack.c.l.b16 %v602
      %v639 = vunpack.c.l.b16 %v603
      %v640 = vunpack.c.l.b16 %v604
      %v641 = vunpack.c.l.b16 %v605
      %v642 = vunpack.c.l.b16 %v606
      %v643 = vunpack.c.l.b16 %v607
      %v644 = vunpack.c.l.b16 %v608
      %v645 = vunpack.c.l.b16 %v609
      %v646 = vunpack.c.l.b16 %v610
      %v647 = vpack.c.b16 %v632, %v631
      %v648 = vpack.c.b16 %v634, %v633
      %v649 = vpack.c.b16 %v636, %v635
      %v650 = vpack.c.b16 %v638, %v637
      %v651 = vpack.c.b16 %v640, %v639
      %v652 = vpack.c.b16 %v642, %v641
      %v653 = vpack.c.b16 %v644, %v643
      %v654 = vpack.c.b16 %v646, %v645
      %663 = vmatpush.bf16.msra.mxu0 %v654
      %664 = vmatpush.bf16.msra.mxu0 %v653
      %665 = vmatpush.bf16.msra.mxu0 %v652
      %666 = vmatpush.bf16.msra.mxu0 %v651
      %667 = vmatpush.bf16.msra.mxu0 %v650
      %668 = vmatpush.bf16.msra.mxu0 %v649
      %669 = vmatpush.bf16.msra.mxu0 %v648
      %670 = vmatpush.bf16.msra.mxu0 %v647
      %671 = vmatmul.bf16.gmra.mxu0 %v457
      %v672 = vpop.f32.mrf.mxu0
      %v673 = vadd.f32 %v613, %v672
      %v674 = vpop.f32.mrf.mxu0
      %675 = vdwg.mxu0
      %v676 = vmul.f32 %v673, 0.17677669
      %v677 = vld [vmem:[%s7] sm:$0xf]
      %v678 = vld [vmem:[%s7 + $0x4] sm:$0xf]
      %v679 = vld [vmem:[%s7 + $0x8] sm:$0xf]
      %v680 = vld [vmem:[%s7 + $0xc] sm:$0xf]
      %v681 = vld [vmem:[%s7 + $0x10] sm:$0xf]
      %v682 = vld [vmem:[%s7 + $0x14] sm:$0xf]
      %v683 = vld [vmem:[%s7 + $0x18] sm:$0xf]
      %v684 = vld [vmem:[%s7 + $0x1c] sm:$0xf]
      %v685 = vld [vmem:[%s7 + $0x20] sm:$0xf]
      %v686 = vld [vmem:[%s7 + $0x24] sm:$0xf]
      %v687 = vld [vmem:[%s7 + $0x28] sm:$0xf]
      %v688 = vld [vmem:[%s7 + $0x2c] sm:$0xf]
      %v689 = vld [vmem:[%s7 + $0x30] sm:$0xf]
      %v690 = vld [vmem:[%s7 + $0x34] sm:$0xf]
      %v691 = vld [vmem:[%s7 + $0x38] sm:$0xf]
      %v692 = vld [vmem:[%s7 + $0x3c] sm:$0xf]
      %v693 = vld [vmem:[%s8] sm:$0x1]
      %v695 = vperm.slane %v693, 0
      %v713 = vunpack.c.l.b16 %v677
      %v714 = vunpack.c.l.b16 %v678
      %v715 = vunpack.c.l.b16 %v679
      %v716 = vunpack.c.l.b16 %v680
      %v717 = vunpack.c.l.b16 %v681
      %v718 = vunpack.c.l.b16 %v682
      %v719 = vunpack.c.l.b16 %v683
      %v720 = vunpack.c.l.b16 %v684
      %v721 = vunpack.c.l.b16 %v685
      %v722 = vunpack.c.l.b16 %v686
      %v723 = vunpack.c.l.b16 %v687
      %v724 = vunpack.c.l.b16 %v688
      %v725 = vunpack.c.l.b16 %v689
      %v726 = vunpack.c.l.b16 %v690
      %v727 = vunpack.c.l.b16 %v691
      %v728 = vunpack.c.l.b16 %v692
      %v729 = vpack.c.b16 %v714, %v713
      %v730 = vpack.c.b16 %v716, %v715
      %v731 = vpack.c.b16 %v718, %v717
      %v732 = vpack.c.b16 %v720, %v719
      %v733 = vpack.c.b16 %v722, %v721
      %v734 = vpack.c.b16 %v724, %v723
      %v735 = vpack.c.b16 %v726, %v725
      %v736 = vpack.c.b16 %v728, %v727
      %745 = vmatpush.bf16.msra.mxu0 %v736
      %746 = vmatpush.bf16.msra.mxu0 %v735
      %747 = vmatpush.bf16.msra.mxu0 %v734
      %748 = vmatpush.bf16.msra.mxu0 %v733
      %749 = vmatpush.bf16.msra.mxu0 %v732
      %750 = vmatpush.bf16.msra.mxu0 %v731
      %751 = vmatpush.bf16.msra.mxu0 %v730
      %752 = vmatpush.bf16.msra.mxu0 %v729
      %753 = vmatmul.bf16.gmra.mxu0 %v457
      %v754 = vpop.f32.mrf.mxu0
      %v755 = vadd.f32 %v695, %v754
      %v756 = vpop.f32.mrf.mxu0
      %757 = vdwg.mxu0
      %v758 = vpack.c.bf16 %v676, %v676
      %v763 = vunpack.c.l.b16 %v571
      %v764 = vunpack.c.l.b16 %v572
      %v765 = vunpack.c.l.b16 %v573
      %v766 = vunpack.c.l.b16 %v574
      %v767 = vpack.c.b16 %v764, %v763
      %v768 = vpack.c.b16 %v766, %v765
      %vm771 = vcmask 261120
      %v773 = vsel %vm771, %v758, 0
      %775 = vmatpush.bf16.msra.mxu0 0
      %776 = vmatpush.bf16.msra.mxu0 0
      %777 = vmatpush.bf16.msra.mxu0 0
      %778 = vmatpush.bf16.msra.mxu0 0
      %779 = vmatpush.bf16.msra.mxu0 0
      %780 = vmatpush.bf16.msra.mxu0 0
      %781 = vmatpush.bf16.msra.mxu0 %v768
      %782 = vmatpush.bf16.msra.mxu0 %v767
      %783 = vmatmul.bf16.gmra.mxu0 %v773
      %v784 = vpop.f32.mrf.mxu0
      %v785 = vadd.f32 0.0, %v784
      %v786 = vpop.f32.mrf.mxu0
      %787 = vdwg.mxu0
      %v788 = vsel %vm594, %v785, -1e+09
      %vm789 = vcmask 64512
      %v790 = vsel %vm789, %v788, -inf
      %791 = vmax.xlane.f32.xlu0 %v790
      %v792 = vpop.xlane.xlu0 %791
      %v793 = vsub.f32 %v788, %v792
      %v794 = vmul.f32 %v793, 1.442695
      %v795 = vpow.pop %v794
      %v796 = vsel %vm789, %v795, 0.0
      %797 = vadd.xlane.f32.xlu0 %v796
      %v798 = vpop.xlane.xlu0 %797
      %v799 = vrcp.pop %v798
      %v800 = vmul.f32 %v795, %v799
      %v801 = vpack.c.bf16 %v800, %v800
      %v802 = vpack.c.bf16 %v755, %v755
      %v804 = vsel %vm789, %v801, 0
      %vm806 = vcmask 1043456
      %v808 = vsel %vm806, %v802, 0
      %810 = vmatpush.bf16.msra.mxu0 0
      %811 = vmatpush.bf16.msra.mxu0 0
      %812 = vmatpush.bf16.msra.mxu0 0
      %813 = vmatpush.bf16.msra.mxu0 0
      %814 = vmatpush.bf16.msra.mxu0 0
      %815 = vmatpush.bf16.msra.mxu0 0
      %816 = vmatpush.bf16.msra.mxu0 0
      %817 = vmatpush.bf16.msra.mxu0 %v808
      %818 = vmatmul.bf16.gmra.mxu0 %v804
      %v819 = vpop.f32.mrf.mxu0
      %v820 = vadd.f32 0.0, %v819
      %v821 = vpop.f32.mrf.mxu0
      %822 = vdwg.mxu0
      %v823 = vpack.c.bf16 %v820, %v820
      %vm824 = vcmask 257024
      %825 = vst.msk [vmem:[#allocation2] sm:$0xf] %vm824, %v823
      %s826 = scalar_lea.vmem %s3, 64
      %v827 = vld [vmem:[%s826] sm:$0xf]
      %v828 = vld [vmem:[%s826 + $0x4] sm:$0xf]
      %v829 = vld [vmem:[%s826 + $0x8] sm:$0xf]
      %v830 = vld [vmem:[%s826 + $0xc] sm:$0xf]
      %v831 = vld [vmem:[%s826 + $0x10] sm:$0xf]
      %v832 = vld [vmem:[%s826 + $0x14] sm:$0xf]
      %v833 = vld [vmem:[%s826 + $0x18] sm:$0xf]
      %v834 = vld [vmem:[%s826 + $0x1c] sm:$0xf]
      %v835 = vld [vmem:[%s826 + $0x20] sm:$0xf]
      %v836 = vld [vmem:[%s826 + $0x24] sm:$0xf]
      %v837 = vld [vmem:[%s826 + $0x28] sm:$0xf]
      %v838 = vld [vmem:[%s826 + $0x2c] sm:$0xf]
      %v839 = vld [vmem:[%s826 + $0x30] sm:$0xf]
      %v840 = vld [vmem:[%s826 + $0x34] sm:$0xf]
      %v841 = vld [vmem:[%s826 + $0x38] sm:$0xf]
      %v842 = vld [vmem:[%s826 + $0x3c] sm:$0xf]
      %s843 = scalar_lea.vmem %s4, 1
      %v844 = vld [vmem:[%s843] sm:$0x1]
      %v846 = vperm.slane %v844, 0
      %v864 = vunpack.c.l.b16 %v827
      %v865 = vunpack.c.l.b16 %v828
      %v866 = vunpack.c.l.b16 %v829
      %v867 = vunpack.c.l.b16 %v830
      %v868 = vunpack.c.l.b16 %v831
      %v869 = vunpack.c.l.b16 %v832
      %v870 = vunpack.c.l.b16 %v833
      %v871 = vunpack.c.l.b16 %v834
      %v872 = vunpack.c.l.b16 %v835
      %v873 = vunpack.c.l.b16 %v836
      %v874 = vunpack.c.l.b16 %v837
      %v875 = vunpack.c.l.b16 %v838
      %v876 = vunpack.c.l.b16 %v839
      %v877 = vunpack.c.l.b16 %v840
      %v878 = vunpack.c.l.b16 %v841
      %v879 = vunpack.c.l.b16 %v842
      %v880 = vpack.c.b16 %v865, %v864
      %v881 = vpack.c.b16 %v867, %v866
      %v882 = vpack.c.b16 %v869, %v868
      %v883 = vpack.c.b16 %v871, %v870
      %v884 = vpack.c.b16 %v873, %v872
      %v885 = vpack.c.b16 %v875, %v874
      %v886 = vpack.c.b16 %v877, %v876
      %v887 = vpack.c.b16 %v879, %v878
      %896 = vmatpush.bf16.msra.mxu0 %v887
      %897 = vmatpush.bf16.msra.mxu0 %v886
      %898 = vmatpush.bf16.msra.mxu0 %v885
      %899 = vmatpush.bf16.msra.mxu0 %v884
      %900 = vmatpush.bf16.msra.mxu0 %v883
      %901 = vmatpush.bf16.msra.mxu0 %v882
      %902 = vmatpush.bf16.msra.mxu0 %v881
      %903 = vmatpush.bf16.msra.mxu0 %v880
      %904 = vmatmul.bf16.gmra.mxu0 %v457
      %v905 = vpop.f32.mrf.mxu0
      %v906 = vadd.f32 %v846, %v905
      %v907 = vpop.f32.mrf.mxu0
      %908 = vdwg.mxu0
      %v909 = vmul.f32 %v906, 0.17677669
      %s910 = scalar_lea.vmem %s7, 64
      %v911 = vld [vmem:[%s910] sm:$0xf]
      %v912 = vld [vmem:[%s910 + $0x4] sm:$0xf]
      %v913 = vld [vmem:[%s910 + $0x8] sm:$0xf]
      %v914 = vld [vmem:[%s910 + $0xc] sm:$0xf]
      %v915 = vld [vmem:[%s910 + $0x10] sm:$0xf]
      %v916 = vld [vmem:[%s910 + $0x14] sm:$0xf]
      %v917 = vld [vmem:[%s910 + $0x18] sm:$0xf]
      %v918 = vld [vmem:[%s910 + $0x1c] sm:$0xf]
      %v919 = vld [vmem:[%s910 + $0x20] sm:$0xf]
      %v920 = vld [vmem:[%s910 + $0x24] sm:$0xf]
      %v921 = vld [vmem:[%s910 + $0x28] sm:$0xf]
      %v922 = vld [vmem:[%s910 + $0x2c] sm:$0xf]
      %v923 = vld [vmem:[%s910 + $0x30] sm:$0xf]
      %v924 = vld [vmem:[%s910 + $0x34] sm:$0xf]
      %v925 = vld [vmem:[%s910 + $0x38] sm:$0xf]
      %v926 = vld [vmem:[%s910 + $0x3c] sm:$0xf]
      %s927 = scalar_lea.vmem %s8, 1
      %v928 = vld [vmem:[%s927] sm:$0x1]
      %v930 = vperm.slane %v928, 0
      %v948 = vunpack.c.l.b16 %v911
      %v949 = vunpack.c.l.b16 %v912
      %v950 = vunpack.c.l.b16 %v913
      %v951 = vunpack.c.l.b16 %v914
      %v952 = vunpack.c.l.b16 %v915
      %v953 = vunpack.c.l.b16 %v916
      %v954 = vunpack.c.l.b16 %v917
      %v955 = vunpack.c.l.b16 %v918
      %v956 = vunpack.c.l.b16 %v919
      %v957 = vunpack.c.l.b16 %v920
      %v958 = vunpack.c.l.b16 %v921
      %v959 = vunpack.c.l.b16 %v922
      %v960 = vunpack.c.l.b16 %v923
      %v961 = vunpack.c.l.b16 %v924
      %v962 = vunpack.c.l.b16 %v925
      %v963 = vunpack.c.l.b16 %v926
      %v964 = vpack.c.b16 %v949, %v948
      %v965 = vpack.c.b16 %v951, %v950
      %v966 = vpack.c.b16 %v953, %v952
      %v967 = vpack.c.b16 %v955, %v954
      %v968 = vpack.c.b16 %v957, %v956
      %v969 = vpack.c.b16 %v959, %v958
      %v970 = vpack.c.b16 %v961, %v960
      %v971 = vpack.c.b16 %v963, %v962
      %980 = vmatpush.bf16.msra.mxu0 %v971
      %981 = vmatpush.bf16.msra.mxu0 %v970
      %982 = vmatpush.bf16.msra.mxu0 %v969
      %983 = vmatpush.bf16.msra.mxu0 %v968
      %984 = vmatpush.bf16.msra.mxu0 %v967
      %985 = vmatpush.bf16.msra.mxu0 %v966
      %986 = vmatpush.bf16.msra.mxu0 %v965
      %987 = vmatpush.bf16.msra.mxu0 %v964
      %988 = vmatmul.bf16.gmra.mxu0 %v457
      %v989 = vpop.f32.mrf.mxu0
      %v990 = vadd.f32 %v930, %v989
      %v991 = vpop.f32.mrf.mxu0
      %992 = vdwg.mxu0
      %v993 = vpack.c.bf16 %v909, %v909
      %v998 = vunpack.c.l.b16 %v575
      %v999 = vunpack.c.l.b16 %v576
      %v1000 = vunpack.c.l.b16 %v577
      %v1001 = vunpack.c.l.b16 %v578
      %v1002 = vpack.c.b16 %v999, %v998
      %v1003 = vpack.c.b16 %v1001, %v1000
      %v1007 = vsel %vm771, %v993, 0
      %1009 = vmatpush.bf16.msra.mxu0 0
      %1010 = vmatpush.bf16.msra.mxu0 0
      %1011 = vmatpush.bf16.msra.mxu0 0
      %1012 = vmatpush.bf16.msra.mxu0 0
      %1013 = vmatpush.bf16.msra.mxu0 0
      %1014 = vmatpush.bf16.msra.mxu0 0
      %1015 = vmatpush.bf16.msra.mxu0 %v1003
      %1016 = vmatpush.bf16.msra.mxu0 %v1002
      %1017 = vmatmul.bf16.gmra.mxu0 %v1007
      %v1018 = vpop.f32.mrf.mxu0
      %v1019 = vadd.f32 0.0, %v1018
      %v1020 = vpop.f32.mrf.mxu0
      %1021 = vdwg.mxu0
      %v1022 = vsel %vm594, %v1019, -1e+09
      %v1023 = vsel %vm789, %v1022, -inf
      %1024 = vmax.xlane.f32.xlu0 %v1023
      %v1025 = vpop.xlane.xlu0 %1024
      %v1026 = vsub.f32 %v1022, %v1025
      %v1027 = vmul.f32 %v1026, 1.442695
      %v1028 = vpow.pop %v1027
      %v1029 = vsel %vm789, %v1028, 0.0
      %1030 = vadd.xlane.f32.xlu0 %v1029
      %v1031 = vpop.xlane.xlu0 %1030
      %v1032 = vrcp.pop %v1031
      %v1033 = vmul.f32 %v1028, %v1032
      %v1034 = vpack.c.bf16 %v1033, %v1033
      %v1035 = vpack.c.bf16 %v990, %v990
      %v1037 = vsel %vm789, %v1034, 0
      %v1040 = vsel %vm806, %v1035, 0
      %1042 = vmatpush.bf16.msra.mxu0 0
      %1043 = vmatpush.bf16.msra.mxu0 0
      %1044 = vmatpush.bf16.msra.mxu0 0
      %1045 = vmatpush.bf16.msra.mxu0 0
      %1046 = vmatpush.bf16.msra.mxu0 0
      %1047 = vmatpush.bf16.msra.mxu0 0
      %1048 = vmatpush.bf16.msra.mxu0 0
      %1049 = vmatpush.bf16.msra.mxu0 %v1040
      %1050 = vmatmul.bf16.gmra.mxu0 %v1037
      %v1051 = vpop.f32.mrf.mxu0
      %v1052 = vadd.f32 0.0, %v1051
      %v1053 = vpop.f32.mrf.mxu0
      %1054 = vdwg.mxu0
      %v1055 = vpack.c.bf16 %v1052, %v1052
      %1057 = vrot.lane.b32.xlu0 %v1055, 32
      %v1058 = vpop.permute.xlu0 %1057
      %vm1060 = vcmask 519424
      %1061 = vst.msk [vmem:[#allocation2] sm:$0xf] %vm1060, %v1058
      %s1062 = scalar_lea.vmem %s3, 128
      %v1063 = vld [vmem:[%s1062] sm:$0xf]
      %v1064 = vld [vmem:[%s1062 + $0x4] sm:$0xf]
      %v1065 = vld [vmem:[%s1062 + $0x8] sm:$0xf]
      %v1066 = vld [vmem:[%s1062 + $0xc] sm:$0xf]
      %v1067 = vld [vmem:[%s1062 + $0x10] sm:$0xf]
      %v1068 = vld [vmem:[%s1062 + $0x14] sm:$0xf]
      %v1069 = vld [vmem:[%s1062 + $0x18] sm:$0xf]
      %v1070 = vld [vmem:[%s1062 + $0x1c] sm:$0xf]
      %v1071 = vld [vmem:[%s1062 + $0x20] sm:$0xf]
      %v1072 = vld [vmem:[%s1062 + $0x24] sm:$0xf]
      %v1073 = vld [vmem:[%s1062 + $0x28] sm:$0xf]
      %v1074 = vld [vmem:[%s1062 + $0x2c] sm:$0xf]
      %v1075 = vld [vmem:[%s1062 + $0x30] sm:$0xf]
      %v1076 = vld [vmem:[%s1062 + $0x34] sm:$0xf]
      %v1077 = vld [vmem:[%s1062 + $0x38] sm:$0xf]
      %v1078 = vld [vmem:[%s1062 + $0x3c] sm:$0xf]
      %s1079 = scalar_lea.vmem %s4, 2
      %v1080 = vld [vmem:[%s1079] sm:$0x1]
      %v1082 = vperm.slane %v1080, 0
      %v1100 = vunpack.c.l.b16 %v1063
      %v1101 = vunpack.c.l.b16 %v1064
      %v1102 = vunpack.c.l.b16 %v1065
      %v1103 = vunpack.c.l.b16 %v1066
      %v1104 = vunpack.c.l.b16 %v1067
      %v1105 = vunpack.c.l.b16 %v1068
      %v1106 = vunpack.c.l.b16 %v1069
      %v1107 = vunpack.c.l.b16 %v1070
      %v1108 = vunpack.c.l.b16 %v1071
      %v1109 = vunpack.c.l.b16 %v1072
      %v1110 = vunpack.c.l.b16 %v1073
      %v1111 = vunpack.c.l.b16 %v1074
      %v1112 = vunpack.c.l.b16 %v1075
      %v1113 = vunpack.c.l.b16 %v1076
      %v1114 = vunpack.c.l.b16 %v1077
      %v1115 = vunpack.c.l.b16 %v1078
      %v1116 = vpack.c.b16 %v1101, %v1100
      %v1117 = vpack.c.b16 %v1103, %v1102
      %v1118 = vpack.c.b16 %v1105, %v1104
      %v1119 = vpack.c.b16 %v1107, %v1106
      %v1120 = vpack.c.b16 %v1109, %v1108
      %v1121 = vpack.c.b16 %v1111, %v1110
      %v1122 = vpack.c.b16 %v1113, %v1112
      %v1123 = vpack.c.b16 %v1115, %v1114
      %1132 = vmatpush.bf16.msra.mxu0 %v1123
      %1133 = vmatpush.bf16.msra.mxu0 %v1122
      %1134 = vmatpush.bf16.msra.mxu0 %v1121
      %1135 = vmatpush.bf16.msra.mxu0 %v1120
      %1136 = vmatpush.bf16.msra.mxu0 %v1119
      %1137 = vmatpush.bf16.msra.mxu0 %v1118
      %1138 = vmatpush.bf16.msra.mxu0 %v1117
      %1139 = vmatpush.bf16.msra.mxu0 %v1116
      %1140 = vmatmul.bf16.gmra.mxu0 %v457
      %v1141 = vpop.f32.mrf.mxu0
      %v1142 = vadd.f32 %v1082, %v1141
      %v1143 = vpop.f32.mrf.mxu0
      %1144 = vdwg.mxu0
      %v1145 = vmul.f32 %v1142, 0.17677669
      %s1146 = scalar_lea.vmem %s7, 128
      %v1147 = vld [vmem:[%s1146] sm:$0xf]
      %v1148 = vld [vmem:[%s1146 + $0x4] sm:$0xf]
      %v1149 = vld [vmem:[%s1146 + $0x8] sm:$0xf]
      %v1150 = vld [vmem:[%s1146 + $0xc] sm:$0xf]
      %v1151 = vld [vmem:[%s1146 + $0x10] sm:$0xf]
      %v1152 = vld [vmem:[%s1146 + $0x14] sm:$0xf]
      %v1153 = vld [vmem:[%s1146 + $0x18] sm:$0xf]
      %v1154 = vld [vmem:[%s1146 + $0x1c] sm:$0xf]
      %v1155 = vld [vmem:[%s1146 + $0x20] sm:$0xf]
      %v1156 = vld [vmem:[%s1146 + $0x24] sm:$0xf]
      %v1157 = vld [vmem:[%s1146 + $0x28] sm:$0xf]
      %v1158 = vld [vmem:[%s1146 + $0x2c] sm:$0xf]
      %v1159 = vld [vmem:[%s1146 + $0x30] sm:$0xf]
      %v1160 = vld [vmem:[%s1146 + $0x34] sm:$0xf]
      %v1161 = vld [vmem:[%s1146 + $0x38] sm:$0xf]
      %v1162 = vld [vmem:[%s1146 + $0x3c] sm:$0xf]
      %s1163 = scalar_lea.vmem %s8, 2
      %v1164 = vld [vmem:[%s1163] sm:$0x1]
      %v1166 = vperm.slane %v1164, 0
      %v1184 = vunpack.c.l.b16 %v1147
      %v1185 = vunpack.c.l.b16 %v1148
      %v1186 = vunpack.c.l.b16 %v1149
      %v1187 = vunpack.c.l.b16 %v1150
      %v1188 = vunpack.c.l.b16 %v1151
      %v1189 = vunpack.c.l.b16 %v1152
      %v1190 = vunpack.c.l.b16 %v1153
      %v1191 = vunpack.c.l.b16 %v1154
      %v1192 = vunpack.c.l.b16 %v1155
      %v1193 = vunpack.c.l.b16 %v1156
      %v1194 = vunpack.c.l.b16 %v1157
      %v1195 = vunpack.c.l.b16 %v1158
      %v1196 = vunpack.c.l.b16 %v1159
      %v1197 = vunpack.c.l.b16 %v1160
      %v1198 = vunpack.c.l.b16 %v1161
      %v1199 = vunpack.c.l.b16 %v1162
      %v1200 = vpack.c.b16 %v1185, %v1184
      %v1201 = vpack.c.b16 %v1187, %v1186
      %v1202 = vpack.c.b16 %v1189, %v1188
      %v1203 = vpack.c.b16 %v1191, %v1190
      %v1204 = vpack.c.b16 %v1193, %v1192
      %v1205 = vpack.c.b16 %v1195, %v1194
      %v1206 = vpack.c.b16 %v1197, %v1196
      %v1207 = vpack.c.b16 %v1199, %v1198
      %1216 = vmatpush.bf16.msra.mxu0 %v1207
      %1217 = vmatpush.bf16.msra.mxu0 %v1206
      %1218 = vmatpush.bf16.msra.mxu0 %v1205
      %1219 = vmatpush.bf16.msra.mxu0 %v1204
      %1220 = vmatpush.bf16.msra.mxu0 %v1203
      %1221 = vmatpush.bf16.msra.mxu0 %v1202
      %1222 = vmatpush.bf16.msra.mxu0 %v1201
      %1223 = vmatpush.bf16.msra.mxu0 %v1200
      %1224 = vmatmul.bf16.gmra.mxu0 %v457
      %v1225 = vpop.f32.mrf.mxu0
      %v1226 = vadd.f32 %v1166, %v1225
      %v1227 = vpop.f32.mrf.mxu0
      %1228 = vdwg.mxu0
      %v1229 = vpack.c.bf16 %v1145, %v1145
      %v1234 = vunpack.c.l.b16 %v579
      %v1235 = vunpack.c.l.b16 %v580
      %v1236 = vunpack.c.l.b16 %v581
      %v1237 = vunpack.c.l.b16 %v582
      %v1238 = vpack.c.b16 %v1235, %v1234
      %v1239 = vpack.c.b16 %v1237, %v1236
      %v1243 = vsel %vm771, %v1229, 0
      %1245 = vmatpush.bf16.msra.mxu0 0
      %1246 = vmatpush.bf16.msra.mxu0 0
      %1247 = vmatpush.bf16.msra.mxu0 0
      %1248 = vmatpush.bf16.msra.mxu0 0
      %1249 = vmatpush.bf16.msra.mxu0 0
      %1250 = vmatpush.bf16.msra.mxu0 0
      %1251 = vmatpush.bf16.msra.mxu0 %v1239
      %1252 = vmatpush.bf16.msra.mxu0 %v1238
      %1253 = vmatmul.bf16.gmra.mxu0 %v1243
      %v1254 = vpop.f32.mrf.mxu0
      %v1255 = vadd.f32 0.0, %v1254
      %v1256 = vpop.f32.mrf.mxu0
      %1257 = vdwg.mxu0
      %v1258 = vsel %vm594, %v1255, -1e+09
      %v1259 = vsel %vm789, %v1258, -inf
      %1260 = vmax.xlane.f32.xlu0 %v1259
      %v1261 = vpop.xlane.xlu0 %1260
      %v1262 = vsub.f32 %v1258, %v1261
      %v1263 = vmul.f32 %v1262, 1.442695
      %v1264 = vpow.pop %v1263
      %v1265 = vsel %vm789, %v1264, 0.0
      %1266 = vadd.xlane.f32.xlu0 %v1265
      %v1267 = vpop.xlane.xlu0 %1266
      %v1268 = vrcp.pop %v1267
      %v1269 = vmul.f32 %v1264, %v1268
      %v1270 = vpack.c.bf16 %v1269, %v1269
      %v1271 = vpack.c.bf16 %v1226, %v1226
      %v1273 = vsel %vm789, %v1270, 0
      %v1276 = vsel %vm806, %v1271, 0
      %1278 = vmatpush.bf16.msra.mxu0 0
      %1279 = vmatpush.bf16.msra.mxu0 0
      %1280 = vmatpush.bf16.msra.mxu0 0
      %1281 = vmatpush.bf16.msra.mxu0 0
      %1282 = vmatpush.bf16.msra.mxu0 0
      %1283 = vmatpush.bf16.msra.mxu0 0
      %1284 = vmatpush.bf16.msra.mxu0 0
      %1285 = vmatpush.bf16.msra.mxu0 %v1276
      %1286 = vmatmul.bf16.gmra.mxu0 %v1273
      %v1287 = vpop.f32.mrf.mxu0
      %v1288 = vadd.f32 0.0, %v1287
      %v1289 = vpop.f32.mrf.mxu0
      %1290 = vdwg.mxu0
      %v1291 = vpack.c.bf16 %v1288, %v1288
      %1293 = vrot.lane.b32.xlu0 %v1291, 64
      %v1294 = vpop.permute.xlu0 %1293
      %vm1296 = vcmask 781824
      %1297 = vst.msk [vmem:[#allocation2] sm:$0xf] %vm1296, %v1294
      %s1298 = scalar_lea.vmem %s3, 192
      %v1299 = vld [vmem:[%s1298] sm:$0xf]
      %v1300 = vld [vmem:[%s1298 + $0x4] sm:$0xf]
      %v1301 = vld [vmem:[%s1298 + $0x8] sm:$0xf]
      %v1302 = vld [vmem:[%s1298 + $0xc] sm:$0xf]
      %v1303 = vld [vmem:[%s1298 + $0x10] sm:$0xf]
      %v1304 = vld [vmem:[%s1298 + $0x14] sm:$0xf]
      %v1305 = vld [vmem:[%s1298 + $0x18] sm:$0xf]
      %v1306 = vld [vmem:[%s1298 + $0x1c] sm:$0xf]
      %v1307 = vld [vmem:[%s1298 + $0x20] sm:$0xf]
      %v1308 = vld [vmem:[%s1298 + $0x24] sm:$0xf]
      %v1309 = vld [vmem:[%s1298 + $0x28] sm:$0xf]
      %v1310 = vld [vmem:[%s1298 + $0x2c] sm:$0xf]
      %v1311 = vld [vmem:[%s1298 + $0x30] sm:$0xf]
      %v1312 = vld [vmem:[%s1298 + $0x34] sm:$0xf]
      %v1313 = vld [vmem:[%s1298 + $0x38] sm:$0xf]
      %v1314 = vld [vmem:[%s1298 + $0x3c] sm:$0xf]
      %s1315 = scalar_lea.vmem %s4, 3
      %v1316 = vld [vmem:[%s1315] sm:$0x1]
      %v1318 = vperm.slane %v1316, 0
      %v1336 = vunpack.c.l.b16 %v1299
      %v1337 = vunpack.c.l.b16 %v1300
      %v1338 = vunpack.c.l.b16 %v1301
      %v1339 = vunpack.c.l.b16 %v1302
      %v1340 = vunpack.c.l.b16 %v1303
      %v1341 = vunpack.c.l.b16 %v1304
      %v1342 = vunpack.c.l.b16 %v1305
      %v1343 = vunpack.c.l.b16 %v1306
      %v1344 = vunpack.c.l.b16 %v1307
      %v1345 = vunpack.c.l.b16 %v1308
      %v1346 = vunpack.c.l.b16 %v1309
      %v1347 = vunpack.c.l.b16 %v1310
      %v1348 = vunpack.c.l.b16 %v1311
      %v1349 = vunpack.c.l.b16 %v1312
      %v1350 = vunpack.c.l.b16 %v1313
      %v1351 = vunpack.c.l.b16 %v1314
      %v1352 = vpack.c.b16 %v1337, %v1336
      %v1353 = vpack.c.b16 %v1339, %v1338
      %v1354 = vpack.c.b16 %v1341, %v1340
      %v1355 = vpack.c.b16 %v1343, %v1342
      %v1356 = vpack.c.b16 %v1345, %v1344
      %v1357 = vpack.c.b16 %v1347, %v1346
      %v1358 = vpack.c.b16 %v1349, %v1348
      %v1359 = vpack.c.b16 %v1351, %v1350
      %1368 = vmatpush.bf16.msra.mxu0 %v1359
      %1369 = vmatpush.bf16.msra.mxu0 %v1358
      %1370 = vmatpush.bf16.msra.mxu0 %v1357
      %1371 = vmatpush.bf16.msra.mxu0 %v1356
      %1372 = vmatpush.bf16.msra.mxu0 %v1355
      %1373 = vmatpush.bf16.msra.mxu0 %v1354
      %1374 = vmatpush.bf16.msra.mxu0 %v1353
      %1375 = vmatpush.bf16.msra.mxu0 %v1352
      %1376 = vmatmul.bf16.gmra.mxu0 %v457
      %v1377 = vpop.f32.mrf.mxu0
      %v1378 = vadd.f32 %v1318, %v1377
      %v1379 = vpop.f32.mrf.mxu0
      %1380 = vdwg.mxu0
      %v1381 = vmul.f32 %v1378, 0.17677669
      %s1382 = scalar_lea.vmem %s7, 192
      %v1383 = vld [vmem:[%s1382] sm:$0xf]
      %v1384 = vld [vmem:[%s1382 + $0x4] sm:$0xf]
      %v1385 = vld [vmem:[%s1382 + $0x8] sm:$0xf]
      %v1386 = vld [vmem:[%s1382 + $0xc] sm:$0xf]
      %v1387 = vld [vmem:[%s1382 + $0x10] sm:$0xf]
      %v1388 = vld [vmem:[%s1382 + $0x14] sm:$0xf]
      %v1389 = vld [vmem:[%s1382 + $0x18] sm:$0xf]
      %v1390 = vld [vmem:[%s1382 + $0x1c] sm:$0xf]
      %v1391 = vld [vmem:[%s1382 + $0x20] sm:$0xf]
      %v1392 = vld [vmem:[%s1382 + $0x24] sm:$0xf]
      %v1393 = vld [vmem:[%s1382 + $0x28] sm:$0xf]
      %v1394 = vld [vmem:[%s1382 + $0x2c] sm:$0xf]
      %v1395 = vld [vmem:[%s1382 + $0x30] sm:$0xf]
      %v1396 = vld [vmem:[%s1382 + $0x34] sm:$0xf]
      %v1397 = vld [vmem:[%s1382 + $0x38] sm:$0xf]
      %v1398 = vld [vmem:[%s1382 + $0x3c] sm:$0xf]
      %s1399 = scalar_lea.vmem %s8, 3
      %v1400 = vld [vmem:[%s1399] sm:$0x1]
      %v1402 = vperm.slane %v1400, 0
      %v1420 = vunpack.c.l.b16 %v1383
      %v1421 = vunpack.c.l.b16 %v1384
      %v1422 = vunpack.c.l.b16 %v1385
      %v1423 = vunpack.c.l.b16 %v1386
      %v1424 = vunpack.c.l.b16 %v1387
      %v1425 = vunpack.c.l.b16 %v1388
      %v1426 = vunpack.c.l.b16 %v1389
      %v1427 = vunpack.c.l.b16 %v1390
      %v1428 = vunpack.c.l.b16 %v1391
      %v1429 = vunpack.c.l.b16 %v1392
      %v1430 = vunpack.c.l.b16 %v1393
      %v1431 = vunpack.c.l.b16 %v1394
      %v1432 = vunpack.c.l.b16 %v1395
      %v1433 = vunpack.c.l.b16 %v1396
      %v1434 = vunpack.c.l.b16 %v1397
      %v1435 = vunpack.c.l.b16 %v1398
      %v1436 = vpack.c.b16 %v1421, %v1420
      %v1437 = vpack.c.b16 %v1423, %v1422
      %v1438 = vpack.c.b16 %v1425, %v1424
      %v1439 = vpack.c.b16 %v1427, %v1426
      %v1440 = vpack.c.b16 %v1429, %v1428
      %v1441 = vpack.c.b16 %v1431, %v1430
      %v1442 = vpack.c.b16 %v1433, %v1432
      %v1443 = vpack.c.b16 %v1435, %v1434
      %1452 = vmatpush.bf16.msra.mxu0 %v1443
      %1453 = vmatpush.bf16.msra.mxu0 %v1442
      %1454 = vmatpush.bf16.msra.mxu0 %v1441
      %1455 = vmatpush.bf16.msra.mxu0 %v1440
      %1456 = vmatpush.bf16.msra.mxu0 %v1439
      %1457 = vmatpush.bf16.msra.mxu0 %v1438
      %1458 = vmatpush.bf16.msra.mxu0 %v1437
      %1459 = vmatpush.bf16.msra.mxu0 %v1436
      %1460 = vmatmul.bf16.gmra.mxu0 %v457
      %v1461 = vpop.f32.mrf.mxu0
      %v1462 = vadd.f32 %v1402, %v1461
      %v1463 = vpop.f32.mrf.mxu0
      %1464 = vdwg.mxu0
      %v1465 = vpack.c.bf16 %v1381, %v1381
      %v1470 = vunpack.c.l.b16 %v583
      %v1471 = vunpack.c.l.b16 %v584
      %v1472 = vunpack.c.l.b16 %v585
      %v1473 = vunpack.c.l.b16 %v586
      %v1474 = vpack.c.b16 %v1471, %v1470
      %v1475 = vpack.c.b16 %v1473, %v1472
      %v1479 = vsel %vm771, %v1465, 0
      %1481 = vmatpush.bf16.msra.mxu0 0
      %1482 = vmatpush.bf16.msra.mxu0 0
      %1483 = vmatpush.bf16.msra.mxu0 0
      %1484 = vmatpush.bf16.msra.mxu0 0
      %1485 = vmatpush.bf16.msra.mxu0 0
      %1486 = vmatpush.bf16.msra.mxu0 0
      %1487 = vmatpush.bf16.msra.mxu0 %v1475
      %1488 = vmatpush.bf16.msra.mxu0 %v1474
      %1489 = vmatmul.bf16.gmra.mxu0 %v1479
      %v1490 = vpop.f32.mrf.mxu0
      %v1491 = vadd.f32 0.0, %v1490
      %v1492 = vpop.f32.mrf.mxu0
      %1493 = vdwg.mxu0
      %v1494 = vsel %vm594, %v1491, -1e+09
      %v1495 = vsel %vm789, %v1494, -inf
      %1496 = vmax.xlane.f32.xlu0 %v1495
      %v1497 = vpop.xlane.xlu0 %1496
      %v1498 = vsub.f32 %v1494, %v1497
      %v1499 = vmul.f32 %v1498, 1.442695
      %v1500 = vpow.pop %v1499
      %v1501 = vsel %vm789, %v1500, 0.0
      %1502 = vadd.xlane.f32.xlu0 %v1501
      %v1503 = vpop.xlane.xlu0 %1502
      %v1504 = vrcp.pop %v1503
      %v1505 = vmul.f32 %v1500, %v1504
      %v1506 = vpack.c.bf16 %v1505, %v1505
      %v1507 = vpack.c.bf16 %v1462, %v1462
      %v1509 = vsel %vm789, %v1506, 0
      %v1512 = vsel %vm806, %v1507, 0
      %1514 = vmatpush.bf16.msra.mxu0 0
      %1515 = vmatpush.bf16.msra.mxu0 0
      %1516 = vmatpush.bf16.msra.mxu0 0
      %1517 = vmatpush.bf16.msra.mxu0 0
      %1518 = vmatpush.bf16.msra.mxu0 0
      %1519 = vmatpush.bf16.msra.mxu0 0
      %1520 = vmatpush.bf16.msra.mxu0 0
      %1521 = vmatpush.bf16.msra.mxu0 %v1512
      %1522 = vmatmul.bf16.gmra.mxu0 %v1509
      %v1523 = vpop.f32.mrf.mxu0
      %v1524 = vadd.f32 0.0, %v1523
      %v1525 = vpop.f32.mrf.mxu0
      %1526 = vdwg.mxu0
      %v1527 = vpack.c.bf16 %v1524, %v1524
      %1529 = vrot.lane.b32.xlu0 %v1527, 96
      %v1530 = vpop.permute.xlu0 %1529
      %vm1532 = vcmask 1044224
      %1533 = vst.msk [vmem:[#allocation2] sm:$0xf] %vm1532, %v1530
      %v1534 = vld [vmem:[#allocation2] sm:$0xf]
      %v1535 = vld [vmem:[%s9] sm:$0xf]
      %v1536 = vld [vmem:[%s9 + $0x4] sm:$0xf]
      %v1537 = vld [vmem:[%s9 + $0x8] sm:$0xf]
      %v1538 = vld [vmem:[%s9 + $0xc] sm:$0xf]
      %v1539 = vld [vmem:[%s9 + $0x10] sm:$0xf]
      %v1540 = vld [vmem:[%s9 + $0x14] sm:$0xf]
      %v1541 = vld [vmem:[%s9 + $0x18] sm:$0xf]
      %v1542 = vld [vmem:[%s9 + $0x1c] sm:$0xf]
      %v1543 = vld [vmem:[%s9 + $0x20] sm:$0xf]
      %v1544 = vld [vmem:[%s9 + $0x24] sm:$0xf]
      %v1545 = vld [vmem:[%s9 + $0x28] sm:$0xf]
      %v1546 = vld [vmem:[%s9 + $0x2c] sm:$0xf]
      %v1547 = vld [vmem:[%s9 + $0x30] sm:$0xf]
      %v1548 = vld [vmem:[%s9 + $0x34] sm:$0xf]
      %v1549 = vld [vmem:[%s9 + $0x38] sm:$0xf]
      %v1550 = vld [vmem:[%s9 + $0x3c] sm:$0xf]
      %v1551 = vld [vmem:[%s10] sm:$0x1]
      %v1553 = vperm.slane %v1551, 0
      %v1571 = vunpack.c.l.b16 %v1535
      %v1572 = vunpack.c.l.b16 %v1536
      %v1573 = vunpack.c.l.b16 %v1537
      %v1574 = vunpack.c.l.b16 %v1538
      %v1575 = vunpack.c.l.b16 %v1539
      %v1576 = vunpack.c.l.b16 %v1540
      %v1577 = vunpack.c.l.b16 %v1541
      %v1578 = vunpack.c.l.b16 %v1542
      %v1579 = vunpack.c.l.b16 %v1543
      %v1580 = vunpack.c.l.b16 %v1544
      %v1581 = vunpack.c.l.b16 %v1545
      %v1582 = vunpack.c.l.b16 %v1546
      %v1583 = vunpack.c.l.b16 %v1547
      %v1584 = vunpack.c.l.b16 %v1548
      %v1585 = vunpack.c.l.b16 %v1549
      %v1586 = vunpack.c.l.b16 %v1550
      %v1587 = vpack.c.b16 %v1572, %v1571
      %v1588 = vpack.c.b16 %v1574, %v1573
      %v1589 = vpack.c.b16 %v1576, %v1575
      %v1590 = vpack.c.b16 %v1578, %v1577
      %v1591 = vpack.c.b16 %v1580, %v1579
      %v1592 = vpack.c.b16 %v1582, %v1581
      %v1593 = vpack.c.b16 %v1584, %v1583
      %v1594 = vpack.c.b16 %v1586, %v1585
      %1603 = vmatpush.bf16.msra.mxu0 %v1594
      %1604 = vmatpush.bf16.msra.mxu0 %v1593
      %1605 = vmatpush.bf16.msra.mxu0 %v1592
      %1606 = vmatpush.bf16.msra.mxu0 %v1591
      %1607 = vmatpush.bf16.msra.mxu0 %v1590
      %1608 = vmatpush.bf16.msra.mxu0 %v1589
      %1609 = vmatpush.bf16.msra.mxu0 %v1588
      %1610 = vmatpush.bf16.msra.mxu0 %v1587
      %1611 = vmatmul.bf16.gmra.mxu0 %v1534
      %v1612 = vpop.f32.mrf.mxu0
      %v1613 = vadd.f32 %v1553, %v1612
      %v1614 = vpop.f32.mrf.mxu0
      %1615 = vdwg.mxu0
      %v1616 = vadd.f32 %v403, %v1613
      %1617 = vst [vmem:[%s401] sm:$0xff] %v1616
      %p1618 = scmp.lt.s32.totalorder %s26, 1
      %s1619 = scalar_select %p1618, %s26, 1
      %p1620 = scmp.lt.s32.totalorder %s27, 0
      %s1621 = scalar_select %p1620, %s27, 0
      %s1622 = sadd.s32 %s1621, %s1619
      %s1623 = smul.addr %s1622, 8
      %s1624 = scalar_lea.vmem %s11, %s1623
      // Predicated region
      $region65: #{decoder_forward.7} parent=63 // pred_check
        %p1625 = pneg %p290
      $region66: #{decoder_forward.7} parent=63 // pred_check_branch
        %1627 = sbr.rel (%p1625) target = $region68
      $region67: #{decoder_forward.7} parent=63 // pred_region
        _
      $region68: #{decoder_forward.7} parent=63 // pred_fallthru
        _
    $region64: #{decoder_forward.7} parent=5 // pred_fallthru
      _
    %p1628 = scmp.le.s32.totalorder 2, %s17
    // Predicated region
    $region69: #{decoder_forward.7} parent=5 // pred_check
      %p1629 = pneg %p1628
    $region70: #{decoder_forward.7} parent=5 // pred_check_branch
      %1631 = sbr.rel (%p1629) target = $region72
    $region71: #{decoder_forward.7} parent=5 // pred_region
      %s1632 = ssub.s32 %s17, 2
      // Predicated region
      $region73: #{decoder_forward.7} parent=71 // pred_check
        %p1633 = pneg %p296
      $region74: #{decoder_forward.7} parent=71 // pred_check_branch
        %1635 = sbr.rel (%p1633) target = $region76
      $region75: #{decoder_forward.7} parent=71 // pred_region
        %p1636 = scmp.lt.s32.totalorder %s28, 1
        %s1637 = scalar_select %p1636, %s28, 1
        %p1638 = scmp.lt.s32.totalorder %s29, 0
        %s1639 = scalar_select %p1638, %s29, 0
        %s1640 = sadd.s32 %s1639, %s1637
        %s1641 = smul.addr %s1640, 8
        %s1642 = scalar_lea.vmem %s11, %s1641
      $region76: #{decoder_forward.7} parent=71 // pred_fallthru
        _
    $region72: #{decoder_forward.7} parent=5 // pred_fallthru
      _
  $region6: #{decoder_forward.7} parent=0 // loop_footer
    %s21 = sadd.s32 1, %s17
  $region7: #{decoder_forward.7} parent=0 // loop_footer_branch
    %16 = sbr.rel target = $region3
  $region8: #{decoder_forward.7} parent=0 // loop_exit
    _

</llo_original>
